<compile_context>
chip_gen: v7x
topology: tpu7x:2x2x1
jax: 0.10.0
libtpu: 0.0.40
codegen_flags: <defaults>
</compile_context>

<pallas_src>
import functools

import jax
import jax.numpy as jnp
from jax.experimental import pallas as pl
from jax.experimental.pallas import tpu as pltpu

# ----- small synthetic DINOv2 config (real dinov2-large: 1024 hidden / 24 layers / 224 img) -----
IMG = 16          # image side
PATCH = 8         # patch side  -> 2x2 = 4 patches per image
CIN = 3           # RGB
HIDDEN = 32       # hidden_size
HEADS = 4
HEAD_DIM = HIDDEN // HEADS
MLP = 4 * HIDDEN
LAYERS = 2
EPS = 1e-6        # DINOv2 layer_norm_eps

NUM_PATCHES = (IMG // PATCH) ** 2       # 4
T_TOKENS = NUM_PATCHES + 1              # 5  (CLS + patches)
T_PAD = ((T_TOKENS + 7) // 8) * 8       # 8  (sublane-aligned token count)
K_PATCH = CIN * PATCH * PATCH           # 192 (flattened patch length)


# ----------------------------- in-kernel helpers -----------------------------

def _layernorm(v, g, b):
    mu = jnp.mean(v, axis=-1, keepdims=True)
    var = jnp.mean((v - mu) ** 2, axis=-1, keepdims=True)
    return (v - mu) * jax.lax.rsqrt(var + EPS) * g + b


def _gelu_tanh(x):
    # TODO(synk): HF DINOv2 uses exact (erf) GELU; tanh approximation used since erf
    # lowering on Mosaic is not guaranteed.
    c = 0.7978845608028654  # sqrt(2/pi)
    return 0.5 * x * (1.0 + jnp.tanh(c * (x + 0.044715 * x * x * x)))


# ----------------------------- Pallas kernels -----------------------------

def _patch_embed_kernel(x_ref, w_ref, b_ref, o_ref):
    # x: (tile_n, K) flattened patches f32; w: (K, D) bf16; b: (1, D) f32
    x = x_ref[...].astype(jnp.bfloat16)
    o_ref[...] = (
        jnp.dot(x, w_ref[...], preferred_element_type=jnp.float32) + b_ref[...]
    ).astype(o_ref.dtype)


def _encoder_tower_kernel(x_ref, pos_ref,
                          ln1_g_ref, ln1_b_ref,
                          wq_ref, bq_ref, wk_ref, bk_ref, wv_ref, bv_ref,
                          wo_ref, bo_ref, ls1_ref,
                          ln2_g_ref, ln2_b_ref,
                          w1_ref, b1_ref, w2_ref, b2_ref, ls2_ref,
                          lnf_g_ref, lnf_b_ref,
                          o_ref, acc_ref):
    """Grid = (B, LAYERS). One batch element per 'b' step, residual stream lives in VMEM
    scratch across the (arbitrary) layer axis; per-layer weights streamed via BlockSpecs."""
    layer = pl.program_id(1)

    # layer-0 prologue: load the embedded tokens and add position embeddings (fused).
    @pl.when(layer == 0)
    def _():
        acc_ref[...] = x_ref[...] + pos_ref[...]

    x = acc_ref[0]                                              # (T_PAD, D) f32

    # --- multi-head self-attention block (pre-LN) ---
    h = _layernorm(x, ln1_g_ref[0], ln1_b_ref[0])
    hb = h.astype(jnp.bfloat16)
    q = jnp.dot(hb, wq_ref[0], preferred_element_type=jnp.float32) + bq_ref[0]
    k = jnp.dot(hb, wk_ref[0], preferred_element_type=jnp.float32) + bk_ref[0]
    v = jnp.dot(hb, wv_ref[0], preferred_element_type=jnp.float32) + bv_ref[0]

    # batched-head attention: (H, T, hd) with a single einsum pair (no per-head loop/concat)
    qh = jnp.swapaxes(q.reshape(T_PAD, HEADS, HEAD_DIM), 0, 1).astype(jnp.bfloat16)
    kh = jnp.swapaxes(k.reshape(T_PAD, HEADS, HEAD_DIM), 0, 1).astype(jnp.bfloat16)
    vh = jnp.swapaxes(v.reshape(T_PAD, HEADS, HEAD_DIM), 0, 1).astype(jnp.bfloat16)

    scale = 1.0 / (HEAD_DIM ** 0.5)
    s = jnp.einsum('hqd,hkd->hqk', qh, kh,
                   preferred_element_type=jnp.float32) * scale   # (H, T_PAD, T_PAD)
    key_idx = jax.lax.broadcasted_iota(jnp.int32, (1, 1, T_PAD), 2)
    s = jnp.where(key_idx < T_TOKENS, s, -1e30)                  # mask padded key tokens
    s = s - jnp.max(s, axis=-1, keepdims=True)
    p = jnp.exp(s)
    p = p * pl.reciprocal(jnp.sum(p, axis=-1, keepdims=True), approx=True)

    ctx = jnp.einsum('hqk,hkd->hqd', p.astype(jnp.bfloat16), vh,
                     preferred_element_type=jnp.float32)         # (H, T_PAD, hd)
    attn = jnp.swapaxes(ctx, 0, 1).reshape(T_PAD, HIDDEN)
    attn = (jnp.dot(attn.astype(jnp.bfloat16), wo_ref[0],
                    preferred_element_type=jnp.float32) + bo_ref[0])
    x = x + ls1_ref[0] * attn                                    # LayerScale + residual

    # --- MLP block (pre-LN) ---
    h2 = _layernorm(x, ln2_g_ref[0], ln2_b_ref[0]).astype(jnp.bfloat16)
    h2 = jnp.dot(h2, w1_ref[0], preferred_element_type=jnp.float32) + b1_ref[0]
    h2 = _gelu_tanh(h2)
    h2 = jnp.dot(h2.astype(jnp.bfloat16), w2_ref[0],
                 preferred_element_type=jnp.float32) + b2_ref[0]
    x = x + ls2_ref[0] * h2                                      # LayerScale + residual

    acc_ref[0] = x

    # last-layer epilogue: final LayerNorm fused in, single HBM writeback of the activation.
    @pl.when(layer == pl.num_programs(1) - 1)
    def _():
        o_ref[0] = _layernorm(x, lnf_g_ref[...], lnf_b_ref[...]).astype(o_ref.dtype)


# ----------------------------- wrappers -----------------------------

def patch_embed(x_flat, w, b):
    N, K = x_flat.shape
    D = w.shape[1]
    tile_n = N if N < 256 else 256
    assert N % tile_n == 0 and tile_n % 8 == 0
    return pl.pallas_call(
        _patch_embed_kernel,
        out_shape=jax.ShapeDtypeStruct((N, D), jnp.float32),
        grid=(N // tile_n,),
        in_specs=[pl.BlockSpec((tile_n, K), lambda i: (i, 0)),
                  pl.BlockSpec((K, D), lambda i: (0, 0)),
                  pl.BlockSpec((1, D), lambda i: (0, 0))],
        out_specs=pl.BlockSpec((tile_n, D), lambda i: (i, 0)),
        compiler_params=pltpu.CompilerParams(dimension_semantics=("parallel",)),
    )(x_flat, w, b)


_LAYER_PARAMS = ("ln1_g", "ln1_b", "wq", "bq", "wk", "bk", "wv", "bv",
                 "wo", "bo", "ls1", "ln2_g", "ln2_b", "w1", "b1", "w2", "b2", "ls2")


def _layer_spec(arr):
    # stacked-per-layer param: block is one layer's slab, indexed by the layer grid axis.
    nd = arr.ndim
    return pl.BlockSpec((1,) + arr.shape[1:],
                        lambda b, l, _nd=nd: (l,) + (0,) * (_nd - 1))


def encoder_tower(x, pos, params):
    B, Tp, D = x.shape
    layer_args = [params[name] for name in _LAYER_PARAMS]
    in_specs = [pl.BlockSpec((1, Tp, D), lambda b, l: (b, 0, 0)),   # x: constant over l
                pl.BlockSpec((1, Tp, D), lambda b, l: (0, 0, 0))]   # pos
    in_specs += [_layer_spec(a) for a in layer_args]
    in_specs += [pl.BlockSpec((1, D), lambda b, l: (0, 0)),         # final LN gamma
                 pl.BlockSpec((1, D), lambda b, l: (0, 0))]         # final LN beta
    return pl.pallas_call(
        _encoder_tower_kernel,
        out_shape=jax.ShapeDtypeStruct((B, Tp, D), jnp.float32),
        grid=(B, LAYERS),
        in_specs=in_specs,
        out_specs=pl.BlockSpec((1, Tp, D), lambda b, l: (b, 0, 0)),
        scratch_shapes=[pltpu.VMEM((1, Tp, D), jnp.float32)],
        compiler_params=pltpu.CompilerParams(
            dimension_semantics=("parallel", "arbitrary")),
    )(x, pos, *layer_args, params["lnf_g"], params["lnf_b"])


@functools.partial(jax.jit, static_argnames=("select_feature",))
def dinov2_vision_tower_forward(images, params, select_feature="patch"):
    """Equivalent of DinoV2VisionTower.forward for a batched 4-D NCHW tensor."""
    B, C, H, W = images.shape
    Hp, Wp = H // PATCH, W // PATCH
    Np = Hp * Wp

    # im2col for the non-overlapping patch-embedding conv (stride == kernel == PATCH).
    patches = images.reshape(B, C, Hp, PATCH, Wp, PATCH)
    patches = patches.transpose(0, 2, 4, 1, 3, 5).reshape(B * Np, C * PATCH * PATCH)

    emb = patch_embed(patches, params["patch_w"], params["patch_b"]).reshape(B, Np, HIDDEN)

    # CLS concat + pad token dim to a sublane multiple (padded keys are masked in-kernel).
    cls = jnp.broadcast_to(params["cls"], (B, 1, HIDDEN)).astype(jnp.float32)
    pad = jnp.zeros((B, T_PAD - T_TOKENS, HIDDEN), jnp.float32)
    x = jnp.concatenate([cls, emb, pad], axis=1)                 # (B, T_PAD, D)
    pos = jnp.pad(params["pos"], ((0, 0), (0, T_PAD - T_TOKENS), (0, 0)))

    # fused: pos-add + all encoder layers + final LayerNorm, activations VMEM-resident.
    x = encoder_tower(x, pos, params)
    x = x[:, :T_TOKENS]                                          # last_hidden_state

    # feature_select
    if select_feature == "patch":
        return x[:, 1:]
    elif select_feature == "cls_patch":
        return x
    elif select_feature == "cls_only":
        return x[:, :1]
    raise ValueError(f"Unexpected select feature: {select_feature}")


# ----------------------------- deterministic parameter init -----------------------------

def init_params(key):
    def nrm(k, shape, scale=0.02, dtype=jnp.float32):
        return (scale * jax.random.normal(k, shape, dtype=jnp.float32)).astype(dtype)

    keys = iter(jax.random.split(key, 4 + 12 * LAYERS))

    params = {
        # PyTorch conv weight is (D, C, P, P); flatten to (D, K) and transpose -> (K, D), bf16.
        "patch_w": nrm(next(keys), (HIDDEN, CIN, PATCH, PATCH))
                   .reshape(HIDDEN, K_PATCH).T.astype(jnp.bfloat16),
        "patch_b": nrm(next(keys), (1, HIDDEN)),
        "cls": nrm(next(keys), (1, 1, HIDDEN)),
        "pos": nrm(next(keys), (1, T_TOKENS, HIDDEN)),
        "lnf_g": jnp.ones((1, HIDDEN), jnp.float32),
        "lnf_b": jnp.zeros((1, HIDDEN), jnp.float32),
    }

    layers = []
    for _ in range(LAYERS):
        layers.append({
            "ln1_g": jnp.ones((1, HIDDEN), jnp.float32),
            "ln1_b": jnp.zeros((1, HIDDEN), jnp.float32),
            "wq": nrm(next(keys), (HIDDEN, HIDDEN), dtype=jnp.bfloat16),
            "bq": nrm(next(keys), (1, HIDDEN)),
            "wk": nrm(next(keys), (HIDDEN, HIDDEN), dtype=jnp.bfloat16),
            "bk": nrm(next(keys), (1, HIDDEN)),
            "wv": nrm(next(keys), (HIDDEN, HIDDEN), dtype=jnp.bfloat16),
            "bv": nrm(next(keys), (1, HIDDEN)),
            "wo": nrm(next(keys), (HIDDEN, HIDDEN), dtype=jnp.bfloat16),
            "bo": nrm(next(keys), (1, HIDDEN)),
            "ls1": jnp.ones((1, HIDDEN), jnp.float32),    # LayerScale lambda1
            "ln2_g": jnp.ones((1, HIDDEN), jnp.float32),
            "ln2_b": jnp.zeros((1, HIDDEN), jnp.float32),
            "w1": nrm(next(keys), (HIDDEN, MLP), dtype=jnp.bfloat16),
            "b1": nrm(next(keys), (1, MLP)),
            "w2": nrm(next(keys), (MLP, HIDDEN), dtype=jnp.bfloat16),
            "b2": nrm(next(keys), (1, HIDDEN)),
            "ls2": jnp.ones((1, HIDDEN), jnp.float32),    # LayerScale lambda2
        })
    # stack per-layer params with a leading LAYERS axis so one pallas_call streams them.
    for name in _LAYER_PARAMS:
        params[name] = jnp.stack([lp[name] for lp in layers], axis=0)
    return params


# ----------------------------- main -----------------------------

if __name__ == "__main__":
    key = jax.random.PRNGKey(0)
    k_param, k_img = jax.random.split(key)

    params = init_params(k_param)
    images = jax.random.normal(k_img, (2, CIN, IMG, IMG), dtype=jnp.float32)  # NCHW

    feats = dinov2_vision_tower_forward(images, params, select_feature="patch")
    feats = jax.block_until_ready(feats)

    assert feats.shape == (2, NUM_PATCHES, HIDDEN), feats.shape
    assert feats.dtype == jnp.float32
    assert bool(jnp.all(jnp.isfinite(feats)))
    print("KERNEL_OK")
</pallas_src>

<mosaic_0001>
module attributes {stable_mosaic.version = 11 : i64} {
  func.func @_patch_embed_kernel(%arg0: i32, %arg1: memref<8x192xf32, #tpu.memory_space<vmem>>, %arg2: memref<192x32xbf16, #tpu.memory_space<vmem>>, %arg3: memref<1x32xf32, #tpu.memory_space<vmem>>, %arg4: memref<8x32xf32, #tpu.memory_space<vmem>>) attributes {dimension_semantics = [#tpu.dimension_semantics<parallel>], iteration_bounds = array<i64: 1>, scalar_prefetch = 0 : i64, scratch_operands = 0 : i64, tpu.core_type = #tpu.core_type<tc>, window_params = [{transform_indices = @transform_0, window_bounds = array<i64: 8, 192>}, {pipeline_mode = #tpu.pipeline_mode<synchronous>, transform_indices = @transform_1, window_bounds = array<i64: 192, 32>}, {pipeline_mode = #tpu.pipeline_mode<synchronous>, transform_indices = @transform_2, window_bounds = array<i64: 1, 32>}, {transform_indices = @transform_3, window_bounds = array<i64: 8, 32>}]} {
    %c0 = arith.constant 0 : index
    %c0_0 = arith.constant 0 : index
    %0 = vector.load %arg1[%c0, %c0_0] : memref<8x192xf32, #tpu.memory_space<vmem>>, vector<8x192xf32>
    %1 = arith.truncf %0 : vector<8x192xf32> to vector<8x192xbf16>
    %c0_1 = arith.constant 0 : index
    %c0_2 = arith.constant 0 : index
    %2 = vector.load %arg2[%c0_1, %c0_2] : memref<192x32xbf16, #tpu.memory_space<vmem>>, vector<192x32xbf16>
    %cst = arith.constant dense<0.000000e+00> : vector<8x32xf32>
    %3 = tpu.matmul %1, %2, %cst {dimension_numbers = #tpu.dot_dimension_numbers<[1], [0], [0], [1], [0, 0, 1, 1], [], []>} : vector<8x192xbf16>, vector<192x32xbf16>, vector<8x32xf32> -> vector<8x32xf32>
    %c0_3 = arith.constant 0 : index
    %c0_4 = arith.constant 0 : index
    %4 = vector.load %arg3[%c0_3, %c0_4] : memref<1x32xf32, #tpu.memory_space<vmem>>, vector<1x32xf32>
    %5 = vector.broadcast %4 : vector<1x32xf32> to vector<8x32xf32>
    %6 = arith.addf %3, %5 : vector<8x32xf32>
    %c0_5 = arith.constant 0 : index
    %c0_6 = arith.constant 0 : index
    %7 = vector.load %arg4[%c0_5, %c0_6] : memref<8x32xf32, #tpu.memory_space<vmem>>, vector<8x32xf32>
    tpu.vector_store %arg4[%c0_5, %c0_6], %6 {strides = array<i32>} : memref<8x32xf32, #tpu.memory_space<vmem>>, vector<8x32xf32>,
    return
  }
  func.func @transform_0(%arg0: i32) -> (i32, i32) {
    %c0_i32 = arith.constant 0 : i32
    %c0_i32_0 = arith.constant 0 : i32
    return %arg0, %c0_i32 : i32, i32
  }
  func.func @transform_1(%arg0: i32) -> (i32, i32) {
    %c0_i32 = arith.constant 0 : i32
    %c0_i32_0 = arith.constant 0 : i32
    %c0_i32_1 = arith.constant 0 : i32
    return %c0_i32, %c0_i32_0 : i32, i32
  }
  func.func @transform_2(%arg0: i32) -> (i32, i32) {
    %c0_i32 = arith.constant 0 : i32
    %c0_i32_0 = arith.constant 0 : i32
    %c0_i32_1 = arith.constant 0 : i32
    return %c0_i32, %c0_i32_0 : i32, i32
  }
  func.func @transform_3(%arg0: i32) -> (i32, i32) {
    %c0_i32 = arith.constant 0 : i32
    %c0_i32_0 = arith.constant 0 : i32
    return %arg0, %c0_i32 : i32, i32
  }
}

module attributes {stable_mosaic.version = 11 : i64} {
  func.func @_encoder_tower_kernel(%arg0: i32, %arg1: i32, %arg2: memref<1x8x32xf32, #tpu.memory_space<vmem>>, %arg3: memref<1x8x32xf32, #tpu.memory_space<vmem>>, %arg4: memref<1x1x32xf32, #tpu.memory_space<vmem>>, %arg5: memref<1x1x32xf32, #tpu.memory_space<vmem>>, %arg6: memref<1x32x32xbf16, #tpu.memory_space<vmem>>, %arg7: memref<1x1x32xf32, #tpu.memory_space<vmem>>, %arg8: memref<1x32x32xbf16, #tpu.memory_space<vmem>>, %arg9: memref<1x1x32xf32, #tpu.memory_space<vmem>>, %arg10: memref<1x32x32xbf16, #tpu.memory_space<vmem>>, %arg11: memref<1x1x32xf32, #tpu.memory_space<vmem>>, %arg12: memref<1x32x32xbf16, #tpu.memory_space<vmem>>, %arg13: memref<1x1x32xf32, #tpu.memory_space<vmem>>, %arg14: memref<1x1x32xf32, #tpu.memory_space<vmem>>, %arg15: memref<1x1x32xf32, #tpu.memory_space<vmem>>, %arg16: memref<1x1x32xf32, #tpu.memory_space<vmem>>, %arg17: memref<1x32x128xbf16, #tpu.memory_space<vmem>>, %arg18: memref<1x1x128xf32, #tpu.memory_space<vmem>>, %arg19: memref<1x128x32xbf16, #tpu.memory_space<vmem>>, %arg20: memref<1x1x32xf32, #tpu.memory_space<vmem>>, %arg21: memref<1x1x32xf32, #tpu.memory_space<vmem>>, %arg22: memref<1x32xf32, #tpu.memory_space<vmem>>, %arg23: memref<1x32xf32, #tpu.memory_space<vmem>>, %arg24: memref<1x8x32xf32, #tpu.memory_space<vmem>>, %arg25: memref<1x8x32xf32, #tpu.memory_space<vmem>>) attributes {dimension_semantics = [#tpu.dimension_semantics<parallel>, #tpu.dimension_semantics<arbitrary>], iteration_bounds = array<i64: 2, 2>, scalar_prefetch = 0 : i64, scratch_operands = 1 : i64, tpu.core_type = #tpu.core_type<tc>, window_params = [{transform_indices = @transform_0, window_bounds = array<i64: 1, 8, 32>}, {pipeline_mode = #tpu.pipeline_mode<synchronous>, transform_indices = @transform_1, window_bounds = array<i64: 1, 8, 32>}, {transform_indices = @transform_2, window_bounds = array<i64: 1, 1, 32>}, {transform_indices = @transform_3, window_bounds = array<i64: 1, 1, 32>}, {transform_indices = @transform_4, window_bounds = array<i64: 1, 32, 32>}, {transform_indices = @transform_5, window_bounds = array<i64: 1, 1, 32>}, {transform_indices = @transform_6, window_bounds = array<i64: 1, 32, 32>}, {transform_indices = @transform_7, window_bounds = array<i64: 1, 1, 32>}, {transform_indices = @transform_8, window_bounds = array<i64: 1, 32, 32>}, {transform_indices = @transform_9, window_bounds = array<i64: 1, 1, 32>}, {transform_indices = @transform_10, window_bounds = array<i64: 1, 32, 32>}, {transform_indices = @transform_11, window_bounds = array<i64: 1, 1, 32>}, {transform_indices = @transform_12, window_bounds = array<i64: 1, 1, 32>}, {transform_indices = @transform_13, window_bounds = array<i64: 1, 1, 32>}, {transform_indices = @transform_14, window_bounds = array<i64: 1, 1, 32>}, {transform_indices = @transform_15, window_bounds = array<i64: 1, 32, 128>}, {transform_indices = @transform_16, window_bounds = array<i64: 1, 1, 128>}, {transform_indices = @transform_17, window_bounds = array<i64: 1, 128, 32>}, {transform_indices = @transform_18, window_bounds = array<i64: 1, 1, 32>}, {transform_indices = @transform_19, window_bounds = array<i64: 1, 1, 32>}, {pipeline_mode = #tpu.pipeline_mode<synchronous>, transform_indices = @transform_20, window_bounds = array<i64: 1, 32>}, {pipeline_mode = #tpu.pipeline_mode<synchronous>, transform_indices = @transform_21, window_bounds = array<i64: 1, 32>}, {transform_indices = @transform_22, window_bounds = array<i64: 1, 8, 32>}]} {
    %c0_i32 = arith.constant 0 : i32
    %0 = arith.cmpi eq, %arg1, %c0_i32 : i32
    %1 = arith.extui %0 : i1 to i32
    %c0_i32_0 = arith.constant 0 : i32
    %2 = arith.cmpi ne, %1, %c0_i32_0 : i32
    scf.if %2 {
      %c0_86 = arith.constant 0 : index
      %c0_87 = arith.constant 0 : index
      %c0_88 = arith.constant 0 : index
      %165 = vector.load %arg2[%c0_86, %c0_87, %c0_88] : memref<1x8x32xf32, #tpu.memory_space<vmem>>, vector<1x8x32xf32>
      %c0_89 = arith.constant 0 : index
      %c0_90 = arith.constant 0 : index
      %c0_91 = arith.constant 0 : index
      %166 = vector.load %arg3[%c0_89, %c0_90, %c0_91] : memref<1x8x32xf32, #tpu.memory_space<vmem>>, vector<1x8x32xf32>
      %167 = arith.addf %165, %166 : vector<1x8x32xf32>
      %c0_92 = arith.constant 0 : index
      %c0_93 = arith.constant 0 : index
      %c0_94 = arith.constant 0 : index
      %168 = vector.load %arg25[%c0_92, %c0_93, %c0_94] : memref<1x8x32xf32, #tpu.memory_space<vmem>>, vector<1x8x32xf32>
      tpu.vector_store %arg25[%c0_92, %c0_93, %c0_94], %167 {strides = array<i32>} : memref<1x8x32xf32, #tpu.memory_space<vmem>>, vector<1x8x32xf32>,
    } else {
    }
    %c0 = arith.constant 0 : index
    %c0_1 = arith.constant 0 : index
    %c0_2 = arith.constant 0 : index
    %3 = vector.load %arg25[%c0, %c0_1, %c0_2] : memref<1x8x32xf32, #tpu.memory_space<vmem>>, vector<1x8x32xf32>
    %4 = vector.shape_cast %3 : vector<1x8x32xf32> to vector<8x32xf32>
    %c0_3 = arith.constant 0 : index
    %c0_4 = arith.constant 0 : index
    %c0_5 = arith.constant 0 : index
    %5 = vector.load %arg4[%c0_3, %c0_4, %c0_5] : memref<1x1x32xf32, #tpu.memory_space<vmem>>, vector<1x1x32xf32>
    %6 = vector.shape_cast %5 : vector<1x1x32xf32> to vector<1x32xf32>
    %c0_6 = arith.constant 0 : index
    %c0_7 = arith.constant 0 : index
    %c0_8 = arith.constant 0 : index
    %7 = vector.load %arg5[%c0_6, %c0_7, %c0_8] : memref<1x1x32xf32, #tpu.memory_space<vmem>>, vector<1x1x32xf32>
    %8 = vector.shape_cast %7 : vector<1x1x32xf32> to vector<1x32xf32>
    %cst = arith.constant dense<0.000000e+00> : vector<8xf32>
    %9 = vector.multi_reduction <add>, %4, %cst [1] : vector<8x32xf32> to vector<8xf32>
    %10 = vector.shape_cast %9 : vector<8xf32> to vector<8x1xf32>
    %cst_9 = arith.constant 3.200000e+01 : f32
    %11 = vector.broadcast %cst_9 : f32 to vector<8x1xf32>
    %12 = arith.divf %10, %11 : vector<8x1xf32>
    %13 = vector.broadcast %12 : vector<8x1xf32> to vector<8x32xf32>
    %14 = arith.subf %4, %13 : vector<8x32xf32>
    %15 = arith.mulf %14, %14 : vector<8x32xf32>
    %cst_10 = arith.constant dense<0.000000e+00> : vector<8xf32>
    %16 = vector.multi_reduction <add>, %15, %cst_10 [1] : vector<8x32xf32> to vector<8xf32>
    %17 = vector.shape_cast %16 : vector<8xf32> to vector<8x1xf32>
    %cst_11 = arith.constant 3.200000e+01 : f32
    %18 = vector.broadcast %cst_11 : f32 to vector<8x1xf32>
    %19 = arith.divf %17, %18 : vector<8x1xf32>
    %20 = vector.broadcast %12 : vector<8x1xf32> to vector<8x32xf32>
    %21 = arith.subf %4, %20 : vector<8x32xf32>
    %cst_12 = arith.constant 9.99999997E-7 : f32
    %22 = vector.broadcast %cst_12 : f32 to vector<8x1xf32>
    %23 = arith.addf %19, %22 : vector<8x1xf32>
    %24 = math.rsqrt %23 : vector<8x1xf32>
    %25 = vector.broadcast %24 : vector<8x1xf32> to vector<8x32xf32>
    %26 = arith.mulf %21, %25 : vector<8x32xf32>
    %27 = vector.broadcast %6 : vector<1x32xf32> to vector<8x32xf32>
    %28 = arith.mulf %26, %27 : vector<8x32xf32>
    %29 = vector.broadcast %8 : vector<1x32xf32> to vector<8x32xf32>
    %30 = arith.addf %28, %29 : vector<8x32xf32>
    %31 = arith.truncf %30 : vector<8x32xf32> to vector<8x32xbf16>
    %c0_13 = arith.constant 0 : index
    %c0_14 = arith.constant 0 : index
    %c0_15 = arith.constant 0 : index
    %32 = vector.load %arg6[%c0_13, %c0_14, %c0_15] : memref<1x32x32xbf16, #tpu.memory_space<vmem>>, vector<1x32x32xbf16>
    %33 = vector.shape_cast %32 : vector<1x32x32xbf16> to vector<32x32xbf16>
    %cst_16 = arith.constant dense<0.000000e+00> : vector<8x32xf32>
    %34 = tpu.matmul %31, %33, %cst_16 {dimension_numbers = #tpu.dot_dimension_numbers<[1], [0], [0], [1], [0, 0, 1, 1], [], []>} : vector<8x32xbf16>, vector<32x32xbf16>, vector<8x32xf32> -> vector<8x32xf32>
    %c0_17 = arith.constant 0 : index
    %c0_18 = arith.constant 0 : index
    %c0_19 = arith.constant 0 : index
    %35 = vector.load %arg7[%c0_17, %c0_18, %c0_19] : memref<1x1x32xf32, #tpu.memory_space<vmem>>, vector<1x1x32xf32>
    %36 = vector.shape_cast %35 : vector<1x1x32xf32> to vector<1x32xf32>
    %37 = vector.broadcast %36 : vector<1x32xf32> to vector<8x32xf32>
    %38 = arith.addf %34, %37 : vector<8x32xf32>
    %c0_20 = arith.constant 0 : index
    %c0_21 = arith.constant 0 : index
    %c0_22 = arith.constant 0 : index
    %39 = vector.load %arg8[%c0_20, %c0_21, %c0_22] : memref<1x32x32xbf16, #tpu.memory_space<vmem>>, vector<1x32x32xbf16>
    %40 = vector.shape_cast %39 : vector<1x32x32xbf16> to vector<32x32xbf16>
    %cst_23 = arith.constant dense<0.000000e+00> : vector<8x32xf32>
    %41 = tpu.matmul %31, %40, %cst_23 {dimension_numbers = #tpu.dot_dimension_numbers<[1], [0], [0], [1], [0, 0, 1, 1], [], []>} : vector<8x32xbf16>, vector<32x32xbf16>, vector<8x32xf32> -> vector<8x32xf32>
    %c0_24 = arith.constant 0 : index
    %c0_25 = arith.constant 0 : index
    %c0_26 = arith.constant 0 : index
    %42 = vector.load %arg9[%c0_24, %c0_25, %c0_26] : memref<1x1x32xf32, #tpu.memory_space<vmem>>, vector<1x1x32xf32>
    %43 = vector.shape_cast %42 : vector<1x1x32xf32> to vector<1x32xf32>
    %44 = vector.broadcast %43 : vector<1x32xf32> to vector<8x32xf32>
    %45 = arith.addf %41, %44 : vector<8x32xf32>
    %c0_27 = arith.constant 0 : index
    %c0_28 = arith.constant 0 : index
    %c0_29 = arith.constant 0 : index
    %46 = vector.load %arg10[%c0_27, %c0_28, %c0_29] : memref<1x32x32xbf16, #tpu.memory_space<vmem>>, vector<1x32x32xbf16>
    %47 = vector.shape_cast %46 : vector<1x32x32xbf16> to vector<32x32xbf16>
    %cst_30 = arith.constant dense<0.000000e+00> : vector<8x32xf32>
    %48 = tpu.matmul %31, %47, %cst_30 {dimension_numbers = #tpu.dot_dimension_numbers<[1], [0], [0], [1], [0, 0, 1, 1], [], []>} : vector<8x32xbf16>, vector<32x32xbf16>, vector<8x32xf32> -> vector<8x32xf32>
    %c0_31 = arith.constant 0 : index
    %c0_32 = arith.constant 0 : index
    %c0_33 = arith.constant 0 : index
    %49 = vector.load %arg11[%c0_31, %c0_32, %c0_33] : memref<1x1x32xf32, #tpu.memory_space<vmem>>, vector<1x1x32xf32>
    %50 = vector.shape_cast %49 : vector<1x1x32xf32> to vector<1x32xf32>
    %51 = vector.broadcast %50 : vector<1x32xf32> to vector<8x32xf32>
    %52 = arith.addf %48, %51 : vector<8x32xf32>
    %53 = vector.shape_cast %38 : vector<8x32xf32> to vector<8x4x8xf32>
    %54 = tpu.transpose %53, [1, 0, 2] : vector<8x4x8xf32> -> vector<4x8x8xf32>
    %55 = arith.truncf %54 : vector<4x8x8xf32> to vector<4x8x8xbf16>
    %56 = vector.shape_cast %45 : vector<8x32xf32> to vector<8x4x8xf32>
    %57 = tpu.transpose %56, [1, 0, 2] : vector<8x4x8xf32> -> vector<4x8x8xf32>
    %58 = arith.truncf %57 : vector<4x8x8xf32> to vector<4x8x8xbf16>
    %59 = vector.shape_cast %52 : vector<8x32xf32> to vector<8x4x8xf32>
    %60 = tpu.transpose %59, [1, 0, 2] : vector<8x4x8xf32> -> vector<4x8x8xf32>
    %61 = arith.truncf %60 : vector<4x8x8xf32> to vector<4x8x8xbf16>
    "tpu.trace_start"() <{level = 10 : i32, message = "hqd,hkd->hqk"}> : () -> ()
    %cst_34 = arith.constant dense<0.000000e+00> : vector<4x8x8xf32>
    %62 = tpu.matmul %55, %58, %cst_34 {dimension_numbers = #tpu.dot_dimension_numbers<[2], [2], [1], [1], [0, 0, 0, 1, 1, 1], [0], [0]>} : vector<4x8x8xbf16>, vector<4x8x8xbf16>, vector<4x8x8xf32> -> vector<4x8x8xf32>
    "tpu.trace_stop"() : () -> ()
    %cst_35 = arith.constant 0.353553385 : f32
    %63 = vector.broadcast %cst_35 : f32 to vector<4x8x8xf32>
    %64 = arith.mulf %62, %63 : vector<4x8x8xf32>
    %65 = tpu.iota {dimensions = array<i32: 2>} : vector<1x1x8xi32>
    %c5_i32 = arith.constant 5 : i32
    %66 = vector.broadcast %c5_i32 : i32 to vector<1x1x8xi32>
    %67 = arith.cmpi slt, %65, %66 : vector<1x1x8xi32>
    %cst_36 = arith.constant -1.000000e+30 : f32
    %68 = vector.shape_cast %67 : vector<1x1x8xi1> to vector<1x1x8xi1>
    %69 = vector.broadcast %68 : vector<1x1x8xi1> to vector<4x8x8xi1>
    %70 = vector.broadcast %cst_36 : f32 to vector<4x8x8xf32>
    %71 = arith.select %69, %64, %70 : vector<4x8x8xi1>, vector<4x8x8xf32>
    %cst_37 = arith.constant dense<0xFF800000> : vector<4x8xf32>
    %72 = vector.multi_reduction <maximumf>, %71, %cst_37 [2] : vector<4x8x8xf32> to vector<4x8xf32>
    %73 = vector.shape_cast %72 : vector<4x8xf32> to vector<4x8x1xf32>
    %74 = vector.broadcast %73 : vector<4x8x1xf32> to vector<4x8x8xf32>
    %75 = arith.subf %71, %74 : vector<4x8x8xf32>
    %76 = math.exp %75 : vector<4x8x8xf32>
    %cst_38 = arith.constant dense<0.000000e+00> : vector<4x8xf32>
    %77 = vector.multi_reduction <add>, %76, %cst_38 [2] : vector<4x8x8xf32> to vector<4x8xf32>
    %78 = vector.shape_cast %77 : vector<4x8xf32> to vector<4x8x1xf32>
    %79 = tpu.reciprocal %78 {approx = true} : vector<4x8x1xf32> -> vector<4x8x1xf32>
    %80 = vector.broadcast %79 : vector<4x8x1xf32> to vector<4x8x8xf32>
    %81 = arith.mulf %76, %80 : vector<4x8x8xf32>
    %82 = arith.truncf %81 : vector<4x8x8xf32> to vector<4x8x8xbf16>
    "tpu.trace_start"() <{level = 10 : i32, message = "hqk,hkd->hqd"}> : () -> ()
    %cst_39 = arith.constant dense<0.000000e+00> : vector<4x8x8xf32>
    %83 = tpu.matmul %82, %61, %cst_39 {dimension_numbers = #tpu.dot_dimension_numbers<[2], [1], [1], [2], [0, 0, 0, 1, 1, 2], [0], [0]>} : vector<4x8x8xbf16>, vector<4x8x8xbf16>, vector<4x8x8xf32> -> vector<4x8x8xf32>
    "tpu.trace_stop"() : () -> ()
    %84 = tpu.transpose %83, [1, 0, 2] : vector<4x8x8xf32> -> vector<8x4x8xf32>
    %85 = vector.shape_cast %84 : vector<8x4x8xf32> to vector<8x32xf32>
    %86 = arith.truncf %85 : vector<8x32xf32> to vector<8x32xbf16>
    %c0_40 = arith.constant 0 : index
    %c0_41 = arith.constant 0 : index
    %c0_42 = arith.constant 0 : index
    %87 = vector.load %arg12[%c0_40, %c0_41, %c0_42] : memref<1x32x32xbf16, #tpu.memory_space<vmem>>, vector<1x32x32xbf16>
    %88 = vector.shape_cast %87 : vector<1x32x32xbf16> to vector<32x32xbf16>
    %cst_43 = arith.constant dense<0.000000e+00> : vector<8x32xf32>
    %89 = tpu.matmul %86, %88, %cst_43 {dimension_numbers = #tpu.dot_dimension_numbers<[1], [0], [0], [1], [0, 0, 1, 1], [], []>} : vector<8x32xbf16>, vector<32x32xbf16>, vector<8x32xf32> -> vector<8x32xf32>
    %c0_44 = arith.constant 0 : index
    %c0_45 = arith.constant 0 : index
    %c0_46 = arith.constant 0 : index
    %90 = vector.load %arg13[%c0_44, %c0_45, %c0_46] : memref<1x1x32xf32, #tpu.memory_space<vmem>>, vector<1x1x32xf32>
    %91 = vector.shape_cast %90 : vector<1x1x32xf32> to vector<1x32xf32>
    %92 = vector.broadcast %91 : vector<1x32xf32> to vector<8x32xf32>
    %93 = arith.addf %89, %92 : vector<8x32xf32>
    %c0_47 = arith.constant 0 : index
    %c0_48 = arith.constant 0 : index
    %c0_49 = arith.constant 0 : index
    %94 = vector.load %arg14[%c0_47, %c0_48, %c0_49] : memref<1x1x32xf32, #tpu.memory_space<vmem>>, vector<1x1x32xf32>
    %95 = vector.shape_cast %94 : vector<1x1x32xf32> to vector<1x32xf32>
    %96 = vector.broadcast %95 : vector<1x32xf32> to vector<8x32xf32>
    %97 = arith.mulf %96, %93 : vector<8x32xf32>
    %98 = arith.addf %4, %97 : vector<8x32xf32>
    %c0_50 = arith.constant 0 : index
    %c0_51 = arith.constant 0 : index
    %c0_52 = arith.constant 0 : index
    %99 = vector.load %arg15[%c0_50, %c0_51, %c0_52] : memref<1x1x32xf32, #tpu.memory_space<vmem>>, vector<1x1x32xf32>
    %100 = vector.shape_cast %99 : vector<1x1x32xf32> to vector<1x32xf32>
    %c0_53 = arith.constant 0 : index
    %c0_54 = arith.constant 0 : index
    %c0_55 = arith.constant 0 : index
    %101 = vector.load %arg16[%c0_53, %c0_54, %c0_55] : memref<1x1x32xf32, #tpu.memory_space<vmem>>, vector<1x1x32xf32>
    %102 = vector.shape_cast %101 : vector<1x1x32xf32> to vector<1x32xf32>
    %cst_56 = arith.constant dense<0.000000e+00> : vector<8xf32>
    %103 = vector.multi_reduction <add>, %98, %cst_56 [1] : vector<8x32xf32> to vector<8xf32>
    %104 = vector.shape_cast %103 : vector<8xf32> to vector<8x1xf32>
    %cst_57 = arith.constant 3.200000e+01 : f32
    %105 = vector.broadcast %cst_57 : f32 to vector<8x1xf32>
    %106 = arith.divf %104, %105 : vector<8x1xf32>
    %107 = vector.broadcast %106 : vector<8x1xf32> to vector<8x32xf32>
    %108 = arith.subf %98, %107 : vector<8x32xf32>
    %109 = arith.mulf %108, %108 : vector<8x32xf32>
    %cst_58 = arith.constant dense<0.000000e+00> : vector<8xf32>
    %110 = vector.multi_reduction <add>, %109, %cst_58 [1] : vector<8x32xf32> to vector<8xf32>
    %111 = vector.shape_cast %110 : vector<8xf32> to vector<8x1xf32>
    %cst_59 = arith.constant 3.200000e+01 : f32
    %112 = vector.broadcast %cst_59 : f32 to vector<8x1xf32>
    %113 = arith.divf %111, %112 : vector<8x1xf32>
    %114 = vector.broadcast %106 : vector<8x1xf32> to vector<8x32xf32>
    %115 = arith.subf %98, %114 : vector<8x32xf32>
    %cst_60 = arith.constant 9.99999997E-7 : f32
    %116 = vector.broadcast %cst_60 : f32 to vector<8x1xf32>
    %117 = arith.addf %113, %116 : vector<8x1xf32>
    %118 = math.rsqrt %117 : vector<8x1xf32>
    %119 = vector.broadcast %118 : vector<8x1xf32> to vector<8x32xf32>
    %120 = arith.mulf %115, %119 : vector<8x32xf32>
    %121 = vector.broadcast %100 : vector<1x32xf32> to vector<8x32xf32>
    %122 = arith.mulf %120, %121 : vector<8x32xf32>
    %123 = vector.broadcast %102 : vector<1x32xf32> to vector<8x32xf32>
    %124 = arith.addf %122, %123 : vector<8x32xf32>
    %125 = arith.truncf %124 : vector<8x32xf32> to vector<8x32xbf16>
    %c0_61 = arith.constant 0 : index
    %c0_62 = arith.constant 0 : index
    %c0_63 = arith.constant 0 : index
    %126 = vector.load %arg17[%c0_61, %c0_62, %c0_63] : memref<1x32x128xbf16, #tpu.memory_space<vmem>>, vector<1x32x128xbf16>
    %127 = vector.shape_cast %126 : vector<1x32x128xbf16> to vector<32x128xbf16>
    %cst_64 = arith.constant dense<0.000000e+00> : vector<8x128xf32>
    %128 = tpu.matmul %125, %127, %cst_64 {dimension_numbers = #tpu.dot_dimension_numbers<[1], [0], [0], [1], [0, 0, 1, 1], [], []>} : vector<8x32xbf16>, vector<32x128xbf16>, vector<8x128xf32> -> vector<8x128xf32>
    %c0_65 = arith.constant 0 : index
    %c0_66 = arith.constant 0 : index
    %c0_67 = arith.constant 0 : index
    %129 = vector.load %arg18[%c0_65, %c0_66, %c0_67] : memref<1x1x128xf32, #tpu.memory_space<vmem>>, vector<1x1x128xf32>
    %130 = vector.shape_cast %129 : vector<1x1x128xf32> to vector<1x128xf32>
    %131 = vector.broadcast %130 : vector<1x128xf32> to vector<8x128xf32>
    %132 = arith.addf %128, %131 : vector<8x128xf32>
    %cst_68 = arith.constant 5.000000e-01 : f32
    %133 = vector.broadcast %cst_68 : f32 to vector<8x128xf32>
    %134 = arith.mulf %133, %132 : vector<8x128xf32>
    %cst_69 = arith.constant 4.471500e-02 : f32
    %135 = vector.broadcast %cst_69 : f32 to vector<8x128xf32>
    %136 = arith.mulf %135, %132 : vector<8x128xf32>
    %137 = arith.mulf %136, %132 : vector<8x128xf32>
    %138 = arith.mulf %137, %132 : vector<8x128xf32>
    %139 = arith.addf %132, %138 : vector<8x128xf32>
    %cst_70 = arith.constant 0.797884583 : f32
    %140 = vector.broadcast %cst_70 : f32 to vector<8x128xf32>
    %141 = arith.mulf %140, %139 : vector<8x128xf32>
    %142 = math.tanh %141 : vector<8x128xf32>
    %cst_71 = arith.constant 1.000000e+00 : f32
    %143 = vector.broadcast %cst_71 : f32 to vector<8x128xf32>
    %144 = arith.addf %143, %142 : vector<8x128xf32>
    %145 = arith.mulf %134, %144 : vector<8x128xf32>
    %146 = arith.truncf %145 : vector<8x128xf32> to vector<8x128xbf16>
    %c0_72 = arith.constant 0 : index
    %c0_73 = arith.constant 0 : index
    %c0_74 = arith.constant 0 : index
    %147 = vector.load %arg19[%c0_72, %c0_73, %c0_74] : memref<1x128x32xbf16, #tpu.memory_space<vmem>>, vector<1x128x32xbf16>
    %148 = vector.shape_cast %147 : vector<1x128x32xbf16> to vector<128x32xbf16>
    %cst_75 = arith.constant dense<0.000000e+00> : vector<8x32xf32>
    %149 = tpu.matmul %146, %148, %cst_75 {dimension_numbers = #tpu.dot_dimension_numbers<[1], [0], [0], [1], [0, 0, 1, 1], [], []>} : vector<8x128xbf16>, vector<128x32xbf16>, vector<8x32xf32> -> vector<8x32xf32>
    %c0_76 = arith.constant 0 : index
    %c0_77 = arith.constant 0 : index
    %c0_78 = arith.constant 0 : index
    %150 = vector.load %arg20[%c0_76, %c0_77, %c0_78] : memref<1x1x32xf32, #tpu.memory_space<vmem>>, vector<1x1x32xf32>
    %151 = vector.shape_cast %150 : vector<1x1x32xf32> to vector<1x32xf32>
    %152 = vector.broadcast %151 : vector<1x32xf32> to vector<8x32xf32>
    %153 = arith.addf %149, %152 : vector<8x32xf32>
    %c0_79 = arith.constant 0 : index
    %c0_80 = arith.constant 0 : index
    %c0_81 = arith.constant 0 : index
    %154 = vector.load %arg21[%c0_79, %c0_80, %c0_81] : memref<1x1x32xf32, #tpu.memory_space<vmem>>, vector<1x1x32xf32>
    %155 = vector.shape_cast %154 : vector<1x1x32xf32> to vector<1x32xf32>
    %156 = vector.broadcast %155 : vector<1x32xf32> to vector<8x32xf32>
    %157 = arith.mulf %156, %153 : vector<8x32xf32>
    %158 = arith.addf %98, %157 : vector<8x32xf32>
    %c0_82 = arith.constant 0 : index
    %c0_83 = arith.constant 0 : index
    %c0_84 = arith.constant 0 : index
    %159 = vector.load %arg25[%c0_82, %c0_83, %c0_84] : memref<1x8x32xf32, #tpu.memory_space<vmem>>, vector<1x8x32xf32>
    %160 = vector.shape_cast %159 : vector<1x8x32xf32> to vector<8x32xf32>
    %161 = vector.shape_cast %158 : vector<8x32xf32> to vector<1x8x32xf32>
    tpu.vector_store %arg25[%c0_82, %c0_83, %c0_84], %161 {strides = array<i32>} : memref<1x8x32xf32, #tpu.memory_space<vmem>>, vector<1x8x32xf32>,
    %c1_i32 = arith.constant 1 : i32
    %162 = arith.cmpi eq, %arg1, %c1_i32 : i32
    %163 = arith.extui %162 : i1 to i32
    %c0_i32_85 = arith.constant 0 : i32
    %164 = arith.cmpi ne, %163, %c0_i32_85 : i32
    scf.if %164 {
      %c0_86 = arith.constant 0 : index
      %c0_87 = arith.constant 0 : index
      %165 = vector.load %arg22[%c0_86, %c0_87] : memref<1x32xf32, #tpu.memory_space<vmem>>, vector<1x32xf32>
      %c0_88 = arith.constant 0 : index
      %c0_89 = arith.constant 0 : index
      %166 = vector.load %arg23[%c0_88, %c0_89] : memref<1x32xf32, #tpu.memory_space<vmem>>, vector<1x32xf32>
      %cst_90 = arith.constant dense<0.000000e+00> : vector<8xf32>
      %167 = vector.multi_reduction <add>, %158, %cst_90 [1] : vector<8x32xf32> to vector<8xf32>
      %168 = vector.shape_cast %167 : vector<8xf32> to vector<8x1xf32>
      %cst_91 = arith.constant 3.200000e+01 : f32
      %169 = vector.broadcast %cst_91 : f32 to vector<8x1xf32>
      %170 = arith.divf %168, %169 : vector<8x1xf32>
      %171 = vector.broadcast %170 : vector<8x1xf32> to vector<8x32xf32>
      %172 = arith.subf %158, %171 : vector<8x32xf32>
      %173 = arith.mulf %172, %172 : vector<8x32xf32>
      %cst_92 = arith.constant dense<0.000000e+00> : vector<8xf32>
      %174 = vector.multi_reduction <add>, %173, %cst_92 [1] : vector<8x32xf32> to vector<8xf32>
      %175 = vector.shape_cast %174 : vector<8xf32> to vector<8x1xf32>
      %cst_93 = arith.constant 3.200000e+01 : f32
      %176 = vector.broadcast %cst_93 : f32 to vector<8x1xf32>
      %177 = arith.divf %175, %176 : vector<8x1xf32>
      %178 = vector.broadcast %170 : vector<8x1xf32> to vector<8x32xf32>
      %179 = arith.subf %158, %178 : vector<8x32xf32>
      %cst_94 = arith.constant 9.99999997E-7 : f32
      %180 = vector.broadcast %cst_94 : f32 to vector<8x1xf32>
      %181 = arith.addf %177, %180 : vector<8x1xf32>
      %182 = math.rsqrt %181 : vector<8x1xf32>
      %183 = vector.broadcast %182 : vector<8x1xf32> to vector<8x32xf32>
      %184 = arith.mulf %179, %183 : vector<8x32xf32>
      %185 = vector.broadcast %165 : vector<1x32xf32> to vector<8x32xf32>
      %186 = arith.mulf %184, %185 : vector<8x32xf32>
      %187 = vector.broadcast %166 : vector<1x32xf32> to vector<8x32xf32>
      %188 = arith.addf %186, %187 : vector<8x32xf32>
      %c0_95 = arith.constant 0 : index
      %c0_96 = arith.constant 0 : index
      %c0_97 = arith.constant 0 : index
      %189 = vector.load %arg24[%c0_95, %c0_96, %c0_97] : memref<1x8x32xf32, #tpu.memory_space<vmem>>, vector<1x8x32xf32>
      %190 = vector.shape_cast %189 : vector<1x8x32xf32> to vector<8x32xf32>
      %191 = vector.shape_cast %188 : vector<8x32xf32> to vector<1x8x32xf32>
      tpu.vector_store %arg24[%c0_95, %c0_96, %c0_97], %191 {strides = array<i32>} : memref<1x8x32xf32, #tpu.memory_space<vmem>>, vector<1x8x32xf32>,
    } else {
    }
    return
  }
  func.func @transform_0(%arg0: i32, %arg1: i32) -> (i32, i32, i32) {
    %c0_i32 = arith.constant 0 : i32
    %c0_i32_0 = arith.constant 0 : i32
    %c0_i32_1 = arith.constant 0 : i32
    return %arg0, %c0_i32, %c0_i32_0 : i32, i32, i32
  }
  func.func @transform_1(%arg0: i32, %arg1: i32) -> (i32, i32, i32) {
    %c0_i32 = arith.constant 0 : i32
    %c0_i32_0 = arith.constant 0 : i32
    %c0_i32_1 = arith.constant 0 : i32
    %c0_i32_2 = arith.constant 0 : i32
    return %c0_i32, %c0_i32_0, %c0_i32_1 : i32, i32, i32
  }
  func.func @transform_2(%arg0: i32, %arg1: i32) -> (i32, i32, i32) {
    %c0_i32 = arith.constant 0 : i32
    %c0_i32_0 = arith.constant 0 : i32
    %c0_i32_1 = arith.constant 0 : i32
    return %arg1, %c0_i32, %c0_i32_0 : i32, i32, i32
  }
  func.func @transform_3(%arg0: i32, %arg1: i32) -> (i32, i32, i32) {
    %c0_i32 = arith.constant 0 : i32
    %c0_i32_0 = arith.constant 0 : i32
    %c0_i32_1 = arith.constant 0 : i32
    return %arg1, %c0_i32, %c0_i32_0 : i32, i32, i32
  }
  func.func @transform_4(%arg0: i32, %arg1: i32) -> (i32, i32, i32) {
    %c0_i32 = arith.constant 0 : i32
    %c0_i32_0 = arith.constant 0 : i32
    %c0_i32_1 = arith.constant 0 : i32
    return %arg1, %c0_i32, %c0_i32_0 : i32, i32, i32
  }
  func.func @transform_5(%arg0: i32, %arg1: i32) -> (i32, i32, i32) {
    %c0_i32 = arith.constant 0 : i32
    %c0_i32_0 = arith.constant 0 : i32
    %c0_i32_1 = arith.constant 0 : i32
    return %arg1, %c0_i32, %c0_i32_0 : i32, i32, i32
  }
  func.func @transform_6(%arg0: i32, %arg1: i32) -> (i32, i32, i32) {
    %c0_i32 = arith.constant 0 : i32
    %c0_i32_0 = arith.constant 0 : i32
    %c0_i32_1 = arith.constant 0 : i32
    return %arg1, %c0_i32, %c0_i32_0 : i32, i32, i32
  }
  func.func @transform_7(%arg0: i32, %arg1: i32) -> (i32, i32, i32) {
    %c0_i32 = arith.constant 0 : i32
    %c0_i32_0 = arith.constant 0 : i32
    %c0_i32_1 = arith.constant 0 : i32
    return %arg1, %c0_i32, %c0_i32_0 : i32, i32, i32
  }
  func.func @transform_8(%arg0: i32, %arg1: i32) -> (i32, i32, i32) {
    %c0_i32 = arith.constant 0 : i32
    %c0_i32_0 = arith.constant 0 : i32
    %c0_i32_1 = arith.constant 0 : i32
    return %arg1, %c0_i32, %c0_i32_0 : i32, i32, i32
  }
  func.func @transform_9(%arg0: i32, %arg1: i32) -> (i32, i32, i32) {
    %c0_i32 = arith.constant 0 : i32
    %c0_i32_0 = arith.constant 0 : i32
    %c0_i32_1 = arith.constant 0 : i32
    return %arg1, %c0_i32, %c0_i32_0 : i32, i32, i32
  }
  func.func @transform_10(%arg0: i32, %arg1: i32) -> (i32, i32, i32) {
    %c0_i32 = arith.constant 0 : i32
    %c0_i32_0 = arith.constant 0 : i32
    %c0_i32_1 = arith.constant 0 : i32
    return %arg1, %c0_i32, %c0_i32_0 : i32, i32, i32
  }
  func.func @transform_11(%arg0: i32, %arg1: i32) -> (i32, i32, i32) {
    %c0_i32 = arith.constant 0 : i32
    %c0_i32_0 = arith.constant 0 : i32
    %c0_i32_1 = arith.constant 0 : i32
    return %arg1, %c0_i32, %c0_i32_0 : i32, i32, i32
  }
  func.func @transform_12(%arg0: i32, %arg1: i32) -> (i32, i32, i32) {
    %c0_i32 = arith.constant 0 : i32
    %c0_i32_0 = arith.constant 0 : i32
    %c0_i32_1 = arith.constant 0 : i32
    return %arg1, %c0_i32, %c0_i32_0 : i32, i32, i32
  }
  func.func @transform_13(%arg0: i32, %arg1: i32) -> (i32, i32, i32) {
    %c0_i32 = arith.constant 0 : i32
    %c0_i32_0 = arith.constant 0 : i32
    %c0_i32_1 = arith.constant 0 : i32
    return %arg1, %c0_i32, %c0_i32_0 : i32, i32, i32
  }
  func.func @transform_14(%arg0: i32, %arg1: i32) -> (i32, i32, i32) {
    %c0_i32 = arith.constant 0 : i32
    %c0_i32_0 = arith.constant 0 : i32
    %c0_i32_1 = arith.constant 0 : i32
    return %arg1, %c0_i32, %c0_i32_0 : i32, i32, i32
  }
  func.func @transform_15(%arg0: i32, %arg1: i32) -> (i32, i32, i32) {
    %c0_i32 = arith.constant 0 : i32
    %c0_i32_0 = arith.constant 0 : i32
    %c0_i32_1 = arith.constant 0 : i32
    return %arg1, %c0_i32, %c0_i32_0 : i32, i32, i32
  }
  func.func @transform_16(%arg0: i32, %arg1: i32) -> (i32, i32, i32) {
    %c0_i32 = arith.constant 0 : i32
    %c0_i32_0 = arith.constant 0 : i32
    %c0_i32_1 = arith.constant 0 : i32
    return %arg1, %c0_i32, %c0_i32_0 : i32, i32, i32
  }
  func.func @transform_17(%arg0: i32, %arg1: i32) -> (i32, i32, i32) {
    %c0_i32 = arith.constant 0 : i32
    %c0_i32_0 = arith.constant 0 : i32
    %c0_i32_1 = arith.constant 0 : i32
    return %arg1, %c0_i32, %c0_i32_0 : i32, i32, i32
  }
  func.func @transform_18(%arg0: i32, %arg1: i32) -> (i32, i32, i32) {
    %c0_i32 = arith.constant 0 : i32
    %c0_i32_0 = arith.constant 0 : i32
    %c0_i32_1 = arith.constant 0 : i32
    return %arg1, %c0_i32, %c0_i32_0 : i32, i32, i32
  }
  func.func @transform_19(%arg0: i32, %arg1: i32) -> (i32, i32, i32) {
    %c0_i32 = arith.constant 0 : i32
    %c0_i32_0 = arith.constant 0 : i32
    %c0_i32_1 = arith.constant 0 : i32
    return %arg1, %c0_i32, %c0_i32_0 : i32, i32, i32
  }
  func.func @transform_20(%arg0: i32, %arg1: i32) -> (i32, i32) {
    %c0_i32 = arith.constant 0 : i32
    %c0_i32_0 = arith.constant 0 : i32
    %c0_i32_1 = arith.constant 0 : i32
    return %c0_i32, %c0_i32_0 : i32, i32
  }
  func.func @transform_21(%arg0: i32, %arg1: i32) -> (i32, i32) {
    %c0_i32 = arith.constant 0 : i32
    %c0_i32_0 = arith.constant 0 : i32
    %c0_i32_1 = arith.constant 0 : i32
    return %c0_i32, %c0_i32_0 : i32, i32
  }
  func.func @transform_22(%arg0: i32, %arg1: i32) -> (i32, i32, i32) {
    %c0_i32 = arith.constant 0 : i32
    %c0_i32_0 = arith.constant 0 : i32
    %c0_i32_1 = arith.constant 0 : i32
    return %arg0, %c0_i32, %c0_i32_0 : i32, i32, i32
  }
}

</mosaic_0001>

<llo_original>
// kernel: dinov2_vision_tower_forward.2
$region0: #{dinov2_vision_tower_forward.2}
  #allocation0 [shape = 'u32[]', space=smem, size = 0x4, offset = 0x4, fixed_abs, tag = 'smem constant byte address 0x4 - core index']
  #allocation1 [shape = 'u32[144,128]{1,0:T(1,128)}', space=vmem, size = 0x12000, scoped, tag = 'internal scratch']
  %s0 = inlined_call_operand.vmem [shape: f32[8,192], index: 0, kind: input, shape index: {}]
  %s1 = inlined_call_operand.vmem [shape: bf16[192,32], index: 1, kind: input, shape index: {}]
  %s2 = inlined_call_operand.vmem [shape: f32[1,32], index: 2, kind: input, shape index: {}]
  %s3 = inlined_call_operand.vmem [shape: f32[8,32], index: 3, kind: output, shape index: {}]
  %s4 = sld [smem:[#allocation0]]
  $region22: #{dinov2_vision_tower_forward.2} parent=0
    _
  %s6 = ssub.s32 1, %s4
  %s7 = scalar_select 0, %s6, %s4
  // Predicated region
  $region2: #{dinov2_vision_tower_forward.2} parent=0 // pred_check
    _
  $region3: #{dinov2_vision_tower_forward.2} parent=0 // pred_check_branch
    %9 = sbr.rel (0) target = $region5
  $region4: #{dinov2_vision_tower_forward.2} parent=0 // pred_region
    _
  $region5: #{dinov2_vision_tower_forward.2} parent=0 // pred_fallthru
    _
  // Predicated region
  $region6: #{dinov2_vision_tower_forward.2} parent=0 // pred_check
    _
  $region7: #{dinov2_vision_tower_forward.2} parent=0 // pred_check_branch
    %11 = sbr.rel (0) target = $region9
  $region8: #{dinov2_vision_tower_forward.2} parent=0 // pred_region
    _
  $region9: #{dinov2_vision_tower_forward.2} parent=0 // pred_fallthru
    _
  // Predicated region
  $region10: #{dinov2_vision_tower_forward.2} parent=0 // pred_check
    _
  $region11: #{dinov2_vision_tower_forward.2} parent=0 // pred_check_branch
    %13 = sbr.rel (0) target = $region13
  $region12: #{dinov2_vision_tower_forward.2} parent=0 // pred_region
    _
  $region13: #{dinov2_vision_tower_forward.2} parent=0 // pred_fallthru
    _
  %v15 = vld [vmem:[%s0] sm:$0xff]
  %v16 = vld [vmem:[%s0 + $0x8] sm:$0xff]
  %v17 = vpack.c.bf16 %v15, %v15
  %v18 = vpack.c.bf16 %v16, %v16
  %v19 = vld [vmem:[%s1] sm:$0xf]
  %v20 = vld [vmem:[%s1 + $0x4] sm:$0xf]
  %v21 = vld [vmem:[%s1 + $0x8] sm:$0xf]
  %v22 = vld [vmem:[%s1 + $0xc] sm:$0xf]
  %v23 = vld [vmem:[%s1 + $0x10] sm:$0xf]
  %v24 = vld [vmem:[%s1 + $0x14] sm:$0xf]
  %v25 = vld [vmem:[%s1 + $0x18] sm:$0xf]
  %v26 = vld [vmem:[%s1 + $0x1c] sm:$0xf]
  %v27 = vld [vmem:[%s1 + $0x20] sm:$0xf]
  %v28 = vld [vmem:[%s1 + $0x24] sm:$0xf]
  %v29 = vld [vmem:[%s1 + $0x28] sm:$0xf]
  %v30 = vld [vmem:[%s1 + $0x2c] sm:$0xf]
  %v31 = vld [vmem:[%s1 + $0x30] sm:$0xf]
  %v32 = vld [vmem:[%s1 + $0x34] sm:$0xf]
  %v33 = vld [vmem:[%s1 + $0x38] sm:$0xf]
  %v34 = vld [vmem:[%s1 + $0x3c] sm:$0xf]
  %v35 = vld [vmem:[%s1 + $0x40] sm:$0xf]
  %v36 = vld [vmem:[%s1 + $0x44] sm:$0xf]
  %v37 = vld [vmem:[%s1 + $0x48] sm:$0xf]
  %v38 = vld [vmem:[%s1 + $0x4c] sm:$0xf]
  %v39 = vld [vmem:[%s1 + $0x50] sm:$0xf]
  %v40 = vld [vmem:[%s1 + $0x54] sm:$0xf]
  %v41 = vld [vmem:[%s1 + $0x58] sm:$0xf]
  %v42 = vld [vmem:[%s1 + $0x5c] sm:$0xf]
  %v43 = vld [vmem:[%s2] sm:$0x1]
  %v45 = vlaneseq
  %v46 = vshrl.u32 %v45, 7
  %v47 = vsub.s32 0, %v46
  %v48 = vrot.slane %v43, %v47
  %v74 = vunpack.c.l.b16 %v19
  %v75 = vunpack.c.l.b16 %v20
  %v76 = vunpack.c.l.b16 %v21
  %v77 = vunpack.c.l.b16 %v22
  %v78 = vunpack.c.l.b16 %v23
  %v79 = vunpack.c.l.b16 %v24
  %v80 = vunpack.c.l.b16 %v25
  %v81 = vunpack.c.l.b16 %v26
  %v82 = vunpack.c.l.b16 %v27
  %v83 = vunpack.c.l.b16 %v28
  %v84 = vunpack.c.l.b16 %v29
  %v85 = vunpack.c.l.b16 %v30
  %v86 = vunpack.c.l.b16 %v31
  %v87 = vunpack.c.l.b16 %v32
  %v88 = vunpack.c.l.b16 %v33
  %v89 = vunpack.c.l.b16 %v34
  %v90 = vunpack.c.l.b16 %v35
  %v91 = vunpack.c.l.b16 %v36
  %v92 = vunpack.c.l.b16 %v37
  %v93 = vunpack.c.l.b16 %v38
  %v94 = vunpack.c.l.b16 %v39
  %v95 = vunpack.c.l.b16 %v40
  %v96 = vunpack.c.l.b16 %v41
  %v97 = vunpack.c.l.b16 %v42
  %v98 = vpack.c.b16 %v75, %v74
  %v99 = vpack.c.b16 %v77, %v76
  %v100 = vpack.c.b16 %v79, %v78
  %v101 = vpack.c.b16 %v81, %v80
  %v102 = vpack.c.b16 %v83, %v82
  %v103 = vpack.c.b16 %v85, %v84
  %v104 = vpack.c.b16 %v87, %v86
  %v105 = vpack.c.b16 %v89, %v88
  %v106 = vpack.c.b16 %v91, %v90
  %v107 = vpack.c.b16 %v93, %v92
  %v108 = vpack.c.b16 %v95, %v94
  %v109 = vpack.c.b16 %v97, %v96
  %vm122 = vcmask 523264
  %v124 = vsel %vm122, %v18, 0
  %126 = vmatprep.subr.bf16.mxu0 0
  %127 = vmatpush1.bf16.msra.mxu0 %v98
  %128 = vmatprep.subr.bf16.mxu0 0
  %129 = vmatpush1.bf16.msra.mxu0 %v99
  %130 = vmatprep.subr.bf16.mxu0 0
  %131 = vmatpush1.bf16.msra.mxu0 %v100
  %132 = vmatprep.subr.bf16.mxu0 0
  %133 = vmatpush1.bf16.msra.mxu0 %v101
  %134 = vmatprep.subr.bf16.mxu0 0
  %135 = vmatpush1.bf16.msra.mxu0 %v102
  %136 = vmatprep.subr.bf16.mxu0 0
  %137 = vmatpush1.bf16.msra.mxu0 %v103
  %138 = vmatprep.subr.bf16.mxu0 0
  %139 = vmatpush1.bf16.msra.mxu0 %v104
  %140 = vmatprep.subr.bf16.mxu0 0
  %141 = vmatpush1.bf16.msra.mxu0 %v105
  %142 = vmatprep.subr.bf16.mxu0 0
  %143 = vmatpush1.bf16.msra.mxu0 %v106
  %144 = vmatprep.subr.bf16.mxu0 0
  %145 = vmatpush1.bf16.msra.mxu0 %v107
  %146 = vmatprep.subr.bf16.mxu0 0
  %147 = vmatpush1.bf16.msra.mxu0 %v108
  %148 = vmatprep.subr.bf16.mxu0 0
  %149 = vmatpush1.bf16.msra.mxu0 %v109
  %150 = vmatprep.subr.bf16.mxu0 0
  %151 = vmatpush1.bf16.msra.mxu0 0
  %152 = vmatprep.subr.bf16.mxu0 0
  %153 = vmatpush1.bf16.msra.mxu0 0
  %154 = vmatprep.subr.bf16.mxu0 0
  %155 = vmatpush1.bf16.msra.mxu0 0
  %156 = vmatprep.subr.bf16.mxu0 0
  %157 = vmatpush1.bf16.msra.mxu0 0
  %158 = vmatprep.mubr.bf16.mxu0 %v124
  %159 = vmatmul.mubr.bf16.gmra.mrb[0].mxu0 %v17
  %v160 = vpop.f32.mrb[0].mxu0
  %v161 = vadd.f32 %v48, %v160
  %v162 = vpop.f32.mrb[0].mxu0
  %v163 = vpop.f32.mrb[0].mxu0
  %v164 = vpop.f32.mrb[0].mxu0
  %165 = vdwg.mxu0
  %vm166 = vcmask 261120
  %167 = vst.msk [vmem:[%s3] sm:$0xff] %vm166, %v161
  // Predicated region
  $region14: #{dinov2_vision_tower_forward.2} parent=0 // pred_check
    _
  $region15: #{dinov2_vision_tower_forward.2} parent=0 // pred_check_branch
    %169 = sbr.rel (0) target = $region17
  $region16: #{dinov2_vision_tower_forward.2} parent=0 // pred_region
    _
  $region17: #{dinov2_vision_tower_forward.2} parent=0 // pred_fallthru
    _
  // Predicated region
  $region18: #{dinov2_vision_tower_forward.2} parent=0 // pred_check
    _
  $region19: #{dinov2_vision_tower_forward.2} parent=0 // pred_check_branch
    %171 = sbr.rel (0) target = $region21
  $region20: #{dinov2_vision_tower_forward.2} parent=0 // pred_region
    _
  $region21: #{dinov2_vision_tower_forward.2} parent=0 // pred_fallthru
    _

// kernel: dinov2_vision_tower_forward.3
$region0: #{dinov2_vision_tower_forward.3}
  #allocation0 [shape = 'u32[]', space=smem, size = 0x4, offset = 0x4, fixed_abs, tag = 'smem constant byte address 0x4 - core index']
  #allocation1 [shape = 'u32[144,128]{1,0:T(1,128)}', space=vmem, size = 0x12000, scoped, tag = 'internal scratch']
  #allocation2 [shape = 'f32[1,8,32]{2,1,0:T(8,128)}', space=vmem, size = 0x1000, scoped, tag = 'scratch operand']
  %s0 = inlined_call_operand.vmem [shape: f32[2,8,32], index: 0, kind: input, shape index: {}]
  %s1 = inlined_call_operand.vmem [shape: f32[1,8,32], index: 1, kind: input, shape index: {}]
  %s2 = inlined_call_operand.vmem [shape: f32[2,1,32], index: 2, kind: input, shape index: {}]
  %s3 = inlined_call_operand.vmem [shape: f32[2,1,32], index: 3, kind: input, shape index: {}]
  %s4 = inlined_call_operand.vmem [shape: bf16[2,32,32], index: 4, kind: input, shape index: {}]
  %s5 = inlined_call_operand.vmem [shape: f32[2,1,32], index: 5, kind: input, shape index: {}]
  %s6 = inlined_call_operand.vmem [shape: bf16[2,32,32], index: 6, kind: input, shape index: {}]
  %s7 = inlined_call_operand.vmem [shape: f32[2,1,32], index: 7, kind: input, shape index: {}]
  %s8 = inlined_call_operand.vmem [shape: bf16[2,32,32], index: 8, kind: input, shape index: {}]
  %s9 = inlined_call_operand.vmem [shape: f32[2,1,32], index: 9, kind: input, shape index: {}]
  %s10 = inlined_call_operand.vmem [shape: bf16[2,32,32], index: 10, kind: input, shape index: {}]
  %s11 = inlined_call_operand.vmem [shape: f32[2,1,32], index: 11, kind: input, shape index: {}]
  %s12 = inlined_call_operand.vmem [shape: f32[2,1,32], index: 12, kind: input, shape index: {}]
  %s13 = inlined_call_operand.vmem [shape: f32[2,1,32], index: 13, kind: input, shape index: {}]
  %s14 = inlined_call_operand.vmem [shape: f32[2,1,32], index: 14, kind: input, shape index: {}]
  %s15 = inlined_call_operand.vmem [shape: bf16[2,32,128], index: 15, kind: input, shape index: {}]
  %s16 = inlined_call_operand.vmem [shape: f32[2,1,128], index: 16, kind: input, shape index: {}]
  %s17 = inlined_call_operand.vmem [shape: bf16[2,128,32], index: 17, kind: input, shape index: {}]
  %s18 = inlined_call_operand.vmem [shape: f32[2,1,32], index: 18, kind: input, shape index: {}]
  %s19 = inlined_call_operand.vmem [shape: f32[2,1,32], index: 19, kind: input, shape index: {}]
  %s20 = inlined_call_operand.vmem [shape: f32[1,32], index: 20, kind: input, shape index: {}]
  %s21 = inlined_call_operand.vmem [shape: f32[1,32], index: 21, kind: input, shape index: {}]
  %s22 = inlined_call_operand.vmem [shape: f32[2,8,32], index: 22, kind: output, shape index: {}]
  %s23 = sld [smem:[#allocation0]]
  $region129: #{dinov2_vision_tower_forward.3} parent=0
    _
  %s25 = ssub.s32 1, %s23
  %s26 = scalar_select 0, %s25, %s23
  loop: start=0, step=1, limit=6
  $region2: #{dinov2_vision_tower_forward.3} parent=0 // loop_pre_header
    _
  $region3: #{dinov2_vision_tower_forward.3} parent=0 // loop_header
    %s28 = sphi 0, %s32
    %p29 = scmp.ge.s32.totalorder %s28, 6
    %s35 = sphi 0, %s47
    %s36 = sphi 0, %s43
    %s37 = sphi 0, %s35
    %s38 = sphi 0, %s36
    %s39 = sphi 0, %s37
    %s40 = sphi 0, %s38
    %s50 = sphi 0, %s52
    %s53 = sphi 0, %s50
    %s54 = sphi 0, %s53
    %s70 = sphi 0, %s54
    %s74 = sphi 0, %s74
    %s76 = sphi 0, %s74
    %s77 = sphi 0, %s76
    %s91 = sphi 0, %s77
    %s97 = sphi 0, %s99
    %s100 = sphi 0, %s97
    %s101 = sphi 0, %s100
    %s117 = sphi 0, %s101
    %s123 = sphi 0, %s125
    %s126 = sphi 0, %s123
    %s127 = sphi 0, %s126
    %s143 = sphi 0, %s127
    %s149 = sphi 0, %s151
    %s152 = sphi 0, %s149
    %s153 = sphi 0, %s152
    %s169 = sphi 0, %s153
    %s175 = sphi 0, %s177
    %s178 = sphi 0, %s175
    %s179 = sphi 0, %s178
    %s195 = sphi 0, %s179
    %s201 = sphi 0, %s203
    %s204 = sphi 0, %s201
    %s205 = sphi 0, %s204
    %s221 = sphi 0, %s205
    %s227 = sphi 0, %s229
    %s230 = sphi 0, %s227
    %s231 = sphi 0, %s230
    %s247 = sphi 0, %s231
    %s253 = sphi 0, %s255
    %s256 = sphi 0, %s253
    %s257 = sphi 0, %s256
    %s273 = sphi 0, %s257
    %s279 = sphi 0, %s281
    %s282 = sphi 0, %s279
    %s283 = sphi 0, %s282
    %s299 = sphi 0, %s283
    %s305 = sphi 0, %s307
    %s308 = sphi 0, %s305
    %s309 = sphi 0, %s308
    %s325 = sphi 0, %s309
    %s331 = sphi 0, %s333
    %s334 = sphi 0, %s331
    %s335 = sphi 0, %s334
    %s351 = sphi 0, %s335
    %s357 = sphi 0, %s359
    %s360 = sphi 0, %s357
    %s361 = sphi 0, %s360
    %s377 = sphi 0, %s361
    %s383 = sphi 0, %s385
    %s386 = sphi 0, %s383
    %s387 = sphi 0, %s386
    %s403 = sphi 0, %s387
    %s409 = sphi 0, %s411
    %s412 = sphi 0, %s409
    %s413 = sphi 0, %s412
    %s429 = sphi 0, %s413
    %s435 = sphi 0, %s437
    %s438 = sphi 0, %s435
    %s439 = sphi 0, %s438
    %s455 = sphi 0, %s439
    %s461 = sphi 0, %s463
    %s464 = sphi 0, %s461
    %s465 = sphi 0, %s464
    %s481 = sphi 0, %s465
    %s487 = sphi 0, %s489
    %s490 = sphi 0, %s487
    %s491 = sphi 0, %s490
    %s507 = sphi 0, %s491
    %s513 = sphi 0, %s515
    %s516 = sphi 0, %s513
    %s517 = sphi 0, %s516
    %s533 = sphi 0, %s517
    %s539 = sphi 0, %s541
    %s542 = sphi 0, %s539
    %s543 = sphi 0, %s542
    %s559 = sphi 0, %s543
    %s563 = sphi 0, %s563
    %s565 = sphi 0, %s563
    %s566 = sphi 0, %s565
    %s580 = sphi 0, %s566
    %s584 = sphi 0, %s584
    %s586 = sphi 0, %s584
    %s587 = sphi 0, %s586
    %s601 = sphi 0, %s587
    %s607 = sphi 0, %s609
    %s610 = sphi 0, %s607
    %s611 = sphi 0, %s610
    %s627 = sphi 0, %s611
  $region4: #{dinov2_vision_tower_forward.3} parent=0 // loop_header_branch
    %31 = sbr.rel (%p29) target = $region8
  $region5: #{dinov2_vision_tower_forward.3} parent=0 // loop_body
    %s33 = ssub.s32 %s28, 1
    %s34 = ssub.s32 %s28, 2
    %s41 = sadd.s32 1, %s36
    %p42 = scmp.ge.s32.totalorder %s41, 2
    %s43 = scalar_select %p42, 0, %s41
    %s44 = sadd.s32 1, %s35
    %s45 = scalar_select %p42, %s44, %s35
    %p46 = scmp.ge.s32.totalorder %s45, 2
    %s47 = scalar_select %p46, 0, %s45
    %s48 = ssub.s32 %s35, %s47
    %p49 = scmp.eq.s32.totalorder %s48, 0
    %s51 = sadd.s32 %s50, 1
    %s52 = scalar_select %p49, %s50, %s51
    %p55 = pneg %p49
    %p56 = scmp.eq.s32.totalorder %s28, 3
    %p57 = por %p55, %p56
    %p58 = scmp.ne.s32.totalorder %s50, %s53
    %p59 = scmp.eq.s32.totalorder %s28, 0
    %p60 = por %p58, %p59
    %p61 = scmp.ne.s32.totalorder %s50, %s53
    %p62 = scmp.eq.s32.totalorder %s33, 3
    %p63 = por %p61, %p62
    %p64 = scmp.ne.s32.totalorder %s53, %s54
    %p65 = scmp.eq.s32.totalorder %s33, 0
    %p66 = por %p64, %p65
    %p67 = scmp.ne.s32.totalorder %s53, %s54
    %p68 = scmp.eq.s32.totalorder %s34, 3
    %p69 = por %p67, %p68
    %p71 = scmp.ne.s32.totalorder %s54, %s70
    %p72 = scmp.eq.s32.totalorder %s34, 0
    %p73 = por %p71, %p72
    %s75 = sadd.s32 %s74, 1
    %p78 = scmp.eq.s32.totalorder %s28, 3
    %p79 = scmp.ne.s32.totalorder %s74, %s76
    %p80 = scmp.eq.s32.totalorder %s28, 0
    %p81 = por %p79, %p80
    %p82 = scmp.ne.s32.totalorder %s74, %s76
    %p83 = scmp.eq.s32.totalorder %s33, 3
    %p84 = por %p82, %p83
    %p85 = scmp.ne.s32.totalorder %s76, %s77
    %p86 = scmp.eq.s32.totalorder %s33, 0
    %p87 = por %p85, %p86
    %p88 = scmp.ne.s32.totalorder %s76, %s77
    %p89 = scmp.eq.s32.totalorder %s34, 3
    %p90 = por %p88, %p89
    %p92 = scmp.ne.s32.totalorder %s77, %s91
    %p93 = scmp.eq.s32.totalorder %s34, 0
    %p94 = por %p92, %p93
    %s95 = ssub.s32 %s36, %s43
    %p96 = scmp.eq.s32.totalorder %s95, 0
    %s98 = sadd.s32 %s97, 1
    %s99 = scalar_select %p96, %s97, %s98
    %p102 = pneg %p96
    %p103 = scmp.eq.s32.totalorder %s28, 3
    %p104 = por %p102, %p103
    %p105 = scmp.ne.s32.totalorder %s97, %s100
    %p106 = scmp.eq.s32.totalorder %s28, 0
    %p107 = por %p105, %p106
    %p108 = scmp.ne.s32.totalorder %s97, %s100
    %p109 = scmp.eq.s32.totalorder %s33, 3
    %p110 = por %p108, %p109
    %p111 = scmp.ne.s32.totalorder %s100, %s101
    %p112 = scmp.eq.s32.totalorder %s33, 0
    %p113 = por %p111, %p112
    %p114 = scmp.ne.s32.totalorder %s100, %s101
    %p115 = scmp.eq.s32.totalorder %s34, 3
    %p116 = por %p114, %p115
    %p118 = scmp.ne.s32.totalorder %s101, %s117
    %p119 = scmp.eq.s32.totalorder %s34, 0
    %p120 = por %p118, %p119
    %s121 = ssub.s32 %s36, %s43
    %p122 = scmp.eq.s32.totalorder %s121, 0
    %s124 = sadd.s32 %s123, 1
    %s125 = scalar_select %p122, %s123, %s124
    %p128 = pneg %p122
    %p129 = scmp.eq.s32.totalorder %s28, 3
    %p130 = por %p128, %p129
    %p131 = scmp.ne.s32.totalorder %s123, %s126
    %p132 = scmp.eq.s32.totalorder %s28, 0
    %p133 = por %p131, %p132
    %p134 = scmp.ne.s32.totalorder %s123, %s126
    %p135 = scmp.eq.s32.totalorder %s33, 3
    %p136 = por %p134, %p135
    %p137 = scmp.ne.s32.totalorder %s126, %s127
    %p138 = scmp.eq.s32.totalorder %s33, 0
    %p139 = por %p137, %p138
    %p140 = scmp.ne.s32.totalorder %s126, %s127
    %p141 = scmp.eq.s32.totalorder %s34, 3
    %p142 = por %p140, %p141
    %p144 = scmp.ne.s32.totalorder %s127, %s143
    %p145 = scmp.eq.s32.totalorder %s34, 0
    %p146 = por %p144, %p145
    %s147 = ssub.s32 %s36, %s43
    %p148 = scmp.eq.s32.totalorder %s147, 0
    %s150 = sadd.s32 %s149, 1
    %s151 = scalar_select %p148, %s149, %s150
    %p154 = pneg %p148
    %p155 = scmp.eq.s32.totalorder %s28, 3
    %p156 = por %p154, %p155
    %p157 = scmp.ne.s32.totalorder %s149, %s152
    %p158 = scmp.eq.s32.totalorder %s28, 0
    %p159 = por %p157, %p158
    %p160 = scmp.ne.s32.totalorder %s149, %s152
    %p161 = scmp.eq.s32.totalorder %s33, 3
    %p162 = por %p160, %p161
    %p163 = scmp.ne.s32.totalorder %s152, %s153
    %p164 = scmp.eq.s32.totalorder %s33, 0
    %p165 = por %p163, %p164
    %p166 = scmp.ne.s32.totalorder %s152, %s153
    %p167 = scmp.eq.s32.totalorder %s34, 3
    %p168 = por %p166, %p167
    %p170 = scmp.ne.s32.totalorder %s153, %s169
    %p171 = scmp.eq.s32.totalorder %s34, 0
    %p172 = por %p170, %p171
    %s173 = ssub.s32 %s36, %s43
    %p174 = scmp.eq.s32.totalorder %s173, 0
    %s176 = sadd.s32 %s175, 1
    %s177 = scalar_select %p174, %s175, %s176
    %p180 = pneg %p174
    %p181 = scmp.eq.s32.totalorder %s28, 3
    %p182 = por %p180, %p181
    %p183 = scmp.ne.s32.totalorder %s175, %s178
    %p184 = scmp.eq.s32.totalorder %s28, 0
    %p185 = por %p183, %p184
    %p186 = scmp.ne.s32.totalorder %s175, %s178
    %p187 = scmp.eq.s32.totalorder %s33, 3
    %p188 = por %p186, %p187
    %p189 = scmp.ne.s32.totalorder %s178, %s179
    %p190 = scmp.eq.s32.totalorder %s33, 0
    %p191 = por %p189, %p190
    %p192 = scmp.ne.s32.totalorder %s178, %s179
    %p193 = scmp.eq.s32.totalorder %s34, 3
    %p194 = por %p192, %p193
    %p196 = scmp.ne.s32.totalorder %s179, %s195
    %p197 = scmp.eq.s32.totalorder %s34, 0
    %p198 = por %p196, %p197
    %s199 = ssub.s32 %s36, %s43
    %p200 = scmp.eq.s32.totalorder %s199, 0
    %s202 = sadd.s32 %s201, 1
    %s203 = scalar_select %p200, %s201, %s202
    %p206 = pneg %p200
    %p207 = scmp.eq.s32.totalorder %s28, 3
    %p208 = por %p206, %p207
    %p209 = scmp.ne.s32.totalorder %s201, %s204
    %p210 = scmp.eq.s32.totalorder %s28, 0
    %p211 = por %p209, %p210
    %p212 = scmp.ne.s32.totalorder %s201, %s204
    %p213 = scmp.eq.s32.totalorder %s33, 3
    %p214 = por %p212, %p213
    %p215 = scmp.ne.s32.totalorder %s204, %s205
    %p216 = scmp.eq.s32.totalorder %s33, 0
    %p217 = por %p215, %p216
    %p218 = scmp.ne.s32.totalorder %s204, %s205
    %p219 = scmp.eq.s32.totalorder %s34, 3
    %p220 = por %p218, %p219
    %p222 = scmp.ne.s32.totalorder %s205, %s221
    %p223 = scmp.eq.s32.totalorder %s34, 0
    %p224 = por %p222, %p223
    %s225 = ssub.s32 %s36, %s43
    %p226 = scmp.eq.s32.totalorder %s225, 0
    %s228 = sadd.s32 %s227, 1
    %s229 = scalar_select %p226, %s227, %s228
    %p232 = pneg %p226
    %p233 = scmp.eq.s32.totalorder %s28, 3
    %p234 = por %p232, %p233
    %p235 = scmp.ne.s32.totalorder %s227, %s230
    %p236 = scmp.eq.s32.totalorder %s28, 0
    %p237 = por %p235, %p236
    %p238 = scmp.ne.s32.totalorder %s227, %s230
    %p239 = scmp.eq.s32.totalorder %s33, 3
    %p240 = por %p238, %p239
    %p241 = scmp.ne.s32.totalorder %s230, %s231
    %p242 = scmp.eq.s32.totalorder %s33, 0
    %p243 = por %p241, %p242
    %p244 = scmp.ne.s32.totalorder %s230, %s231
    %p245 = scmp.eq.s32.totalorder %s34, 3
    %p246 = por %p244, %p245
    %p248 = scmp.ne.s32.totalorder %s231, %s247
    %p249 = scmp.eq.s32.totalorder %s34, 0
    %p250 = por %p248, %p249
    %s251 = ssub.s32 %s36, %s43
    %p252 = scmp.eq.s32.totalorder %s251, 0
    %s254 = sadd.s32 %s253, 1
    %s255 = scalar_select %p252, %s253, %s254
    %p258 = pneg %p252
    %p259 = scmp.eq.s32.totalorder %s28, 3
    %p260 = por %p258, %p259
    %p261 = scmp.ne.s32.totalorder %s253, %s256
    %p262 = scmp.eq.s32.totalorder %s28, 0
    %p263 = por %p261, %p262
    %p264 = scmp.ne.s32.totalorder %s253, %s256
    %p265 = scmp.eq.s32.totalorder %s33, 3
    %p266 = por %p264, %p265
    %p267 = scmp.ne.s32.totalorder %s256, %s257
    %p268 = scmp.eq.s32.totalorder %s33, 0
    %p269 = por %p267, %p268
    %p270 = scmp.ne.s32.totalorder %s256, %s257
    %p271 = scmp.eq.s32.totalorder %s34, 3
    %p272 = por %p270, %p271
    %p274 = scmp.ne.s32.totalorder %s257, %s273
    %p275 = scmp.eq.s32.totalorder %s34, 0
    %p276 = por %p274, %p275
    %s277 = ssub.s32 %s36, %s43
    %p278 = scmp.eq.s32.totalorder %s277, 0
    %s280 = sadd.s32 %s279, 1
    %s281 = scalar_select %p278, %s279, %s280
    %p284 = pneg %p278
    %p285 = scmp.eq.s32.totalorder %s28, 3
    %p286 = por %p284, %p285
    %p287 = scmp.ne.s32.totalorder %s279, %s282
    %p288 = scmp.eq.s32.totalorder %s28, 0
    %p289 = por %p287, %p288
    %p290 = scmp.ne.s32.totalorder %s279, %s282
    %p291 = scmp.eq.s32.totalorder %s33, 3
    %p292 = por %p290, %p291
    %p293 = scmp.ne.s32.totalorder %s282, %s283
    %p294 = scmp.eq.s32.totalorder %s33, 0
    %p295 = por %p293, %p294
    %p296 = scmp.ne.s32.totalorder %s282, %s283
    %p297 = scmp.eq.s32.totalorder %s34, 3
    %p298 = por %p296, %p297
    %p300 = scmp.ne.s32.totalorder %s283, %s299
    %p301 = scmp.eq.s32.totalorder %s34, 0
    %p302 = por %p300, %p301
    %s303 = ssub.s32 %s36, %s43
    %p304 = scmp.eq.s32.totalorder %s303, 0
    %s306 = sadd.s32 %s305, 1
    %s307 = scalar_select %p304, %s305, %s306
    %p310 = pneg %p304
    %p311 = scmp.eq.s32.totalorder %s28, 3
    %p312 = por %p310, %p311
    %p313 = scmp.ne.s32.totalorder %s305, %s308
    %p314 = scmp.eq.s32.totalorder %s28, 0
    %p315 = por %p313, %p314
    %p316 = scmp.ne.s32.totalorder %s305, %s308
    %p317 = scmp.eq.s32.totalorder %s33, 3
    %p318 = por %p316, %p317
    %p319 = scmp.ne.s32.totalorder %s308, %s309
    %p320 = scmp.eq.s32.totalorder %s33, 0
    %p321 = por %p319, %p320
    %p322 = scmp.ne.s32.totalorder %s308, %s309
    %p323 = scmp.eq.s32.totalorder %s34, 3
    %p324 = por %p322, %p323
    %p326 = scmp.ne.s32.totalorder %s309, %s325
    %p327 = scmp.eq.s32.totalorder %s34, 0
    %p328 = por %p326, %p327
    %s329 = ssub.s32 %s36, %s43
    %p330 = scmp.eq.s32.totalorder %s329, 0
    %s332 = sadd.s32 %s331, 1
    %s333 = scalar_select %p330, %s331, %s332
    %p336 = pneg %p330
    %p337 = scmp.eq.s32.totalorder %s28, 3
    %p338 = por %p336, %p337
    %p339 = scmp.ne.s32.totalorder %s331, %s334
    %p340 = scmp.eq.s32.totalorder %s28, 0
    %p341 = por %p339, %p340
    %p342 = scmp.ne.s32.totalorder %s331, %s334
    %p343 = scmp.eq.s32.totalorder %s33, 3
    %p344 = por %p342, %p343
    %p345 = scmp.ne.s32.totalorder %s334, %s335
    %p346 = scmp.eq.s32.totalorder %s33, 0
    %p347 = por %p345, %p346
    %p348 = scmp.ne.s32.totalorder %s334, %s335
    %p349 = scmp.eq.s32.totalorder %s34, 3
    %p350 = por %p348, %p349
    %p352 = scmp.ne.s32.totalorder %s335, %s351
    %p353 = scmp.eq.s32.totalorder %s34, 0
    %p354 = por %p352, %p353
    %s355 = ssub.s32 %s36, %s43
    %p356 = scmp.eq.s32.totalorder %s355, 0
    %s358 = sadd.s32 %s357, 1
    %s359 = scalar_select %p356, %s357, %s358
    %p362 = pneg %p356
    %p363 = scmp.eq.s32.totalorder %s28, 3
    %p364 = por %p362, %p363
    %p365 = scmp.ne.s32.totalorder %s357, %s360
    %p366 = scmp.eq.s32.totalorder %s28, 0
    %p367 = por %p365, %p366
    %p368 = scmp.ne.s32.totalorder %s357, %s360
    %p369 = scmp.eq.s32.totalorder %s33, 3
    %p370 = por %p368, %p369
    %p371 = scmp.ne.s32.totalorder %s360, %s361
    %p372 = scmp.eq.s32.totalorder %s33, 0
    %p373 = por %p371, %p372
    %p374 = scmp.ne.s32.totalorder %s360, %s361
    %p375 = scmp.eq.s32.totalorder %s34, 3
    %p376 = por %p374, %p375
    %p378 = scmp.ne.s32.totalorder %s361, %s377
    %p379 = scmp.eq.s32.totalorder %s34, 0
    %p380 = por %p378, %p379
    %s381 = ssub.s32 %s36, %s43
    %p382 = scmp.eq.s32.totalorder %s381, 0
    %s384 = sadd.s32 %s383, 1
    %s385 = scalar_select %p382, %s383, %s384
    %p388 = pneg %p382
    %p389 = scmp.eq.s32.totalorder %s28, 3
    %p390 = por %p388, %p389
    %p391 = scmp.ne.s32.totalorder %s383, %s386
    %p392 = scmp.eq.s32.totalorder %s28, 0
    %p393 = por %p391, %p392
    %p394 = scmp.ne.s32.totalorder %s383, %s386
    %p395 = scmp.eq.s32.totalorder %s33, 3
    %p396 = por %p394, %p395
    %p397 = scmp.ne.s32.totalorder %s386, %s387
    %p398 = scmp.eq.s32.totalorder %s33, 0
    %p399 = por %p397, %p398
    %p400 = scmp.ne.s32.totalorder %s386, %s387
    %p401 = scmp.eq.s32.totalorder %s34, 3
    %p402 = por %p400, %p401
    %p404 = scmp.ne.s32.totalorder %s387, %s403
    %p405 = scmp.eq.s32.totalorder %s34, 0
    %p406 = por %p404, %p405
    %s407 = ssub.s32 %s36, %s43
    %p408 = scmp.eq.s32.totalorder %s407, 0
    %s410 = sadd.s32 %s409, 1
    %s411 = scalar_select %p408, %s409, %s410
    %p414 = pneg %p408
    %p415 = scmp.eq.s32.totalorder %s28, 3
    %p416 = por %p414, %p415
    %p417 = scmp.ne.s32.totalorder %s409, %s412
    %p418 = scmp.eq.s32.totalorder %s28, 0
    %p419 = por %p417, %p418
    %p420 = scmp.ne.s32.totalorder %s409, %s412
    %p421 = scmp.eq.s32.totalorder %s33, 3
    %p422 = por %p420, %p421
    %p423 = scmp.ne.s32.totalorder %s412, %s413
    %p424 = scmp.eq.s32.totalorder %s33, 0
    %p425 = por %p423, %p424
    %p426 = scmp.ne.s32.totalorder %s412, %s413
    %p427 = scmp.eq.s32.totalorder %s34, 3
    %p428 = por %p426, %p427
    %p430 = scmp.ne.s32.totalorder %s413, %s429
    %p431 = scmp.eq.s32.totalorder %s34, 0
    %p432 = por %p430, %p431
    %s433 = ssub.s32 %s36, %s43
    %p434 = scmp.eq.s32.totalorder %s433, 0
    %s436 = sadd.s32 %s435, 1
    %s437 = scalar_select %p434, %s435, %s436
    %p440 = pneg %p434
    %p441 = scmp.eq.s32.totalorder %s28, 3
    %p442 = por %p440, %p441
    %p443 = scmp.ne.s32.totalorder %s435, %s438
    %p444 = scmp.eq.s32.totalorder %s28, 0
    %p445 = por %p443, %p444
    %p446 = scmp.ne.s32.totalorder %s435, %s438
    %p447 = scmp.eq.s32.totalorder %s33, 3
    %p448 = por %p446, %p447
    %p449 = scmp.ne.s32.totalorder %s438, %s439
    %p450 = scmp.eq.s32.totalorder %s33, 0
    %p451 = por %p449, %p450
    %p452 = scmp.ne.s32.totalorder %s438, %s439
    %p453 = scmp.eq.s32.totalorder %s34, 3
    %p454 = por %p452, %p453
    %p456 = scmp.ne.s32.totalorder %s439, %s455
    %p457 = scmp.eq.s32.totalorder %s34, 0
    %p458 = por %p456, %p457
    %s459 = ssub.s32 %s36, %s43
    %p460 = scmp.eq.s32.totalorder %s459, 0
    %s462 = sadd.s32 %s461, 1
    %s463 = scalar_select %p460, %s461, %s462
    %p466 = pneg %p460
    %p467 = scmp.eq.s32.totalorder %s28, 3
    %p468 = por %p466, %p467
    %p469 = scmp.ne.s32.totalorder %s461, %s464
    %p470 = scmp.eq.s32.totalorder %s28, 0
    %p471 = por %p469, %p470
    %p472 = scmp.ne.s32.totalorder %s461, %s464
    %p473 = scmp.eq.s32.totalorder %s33, 3
    %p474 = por %p472, %p473
    %p475 = scmp.ne.s32.totalorder %s464, %s465
    %p476 = scmp.eq.s32.totalorder %s33, 0
    %p477 = por %p475, %p476
    %p478 = scmp.ne.s32.totalorder %s464, %s465
    %p479 = scmp.eq.s32.totalorder %s34, 3
    %p480 = por %p478, %p479
    %p482 = scmp.ne.s32.totalorder %s465, %s481
    %p483 = scmp.eq.s32.totalorder %s34, 0
    %p484 = por %p482, %p483
    %s485 = ssub.s32 %s36, %s43
    %p486 = scmp.eq.s32.totalorder %s485, 0
    %s488 = sadd.s32 %s487, 1
    %s489 = scalar_select %p486, %s487, %s488
    %p492 = pneg %p486
    %p493 = scmp.eq.s32.totalorder %s28, 3
    %p494 = por %p492, %p493
    %p495 = scmp.ne.s32.totalorder %s487, %s490
    %p496 = scmp.eq.s32.totalorder %s28, 0
    %p497 = por %p495, %p496
    %p498 = scmp.ne.s32.totalorder %s487, %s490
    %p499 = scmp.eq.s32.totalorder %s33, 3
    %p500 = por %p498, %p499
    %p501 = scmp.ne.s32.totalorder %s490, %s491
    %p502 = scmp.eq.s32.totalorder %s33, 0
    %p503 = por %p501, %p502
    %p504 = scmp.ne.s32.totalorder %s490, %s491
    %p505 = scmp.eq.s32.totalorder %s34, 3
    %p506 = por %p504, %p505
    %p508 = scmp.ne.s32.totalorder %s491, %s507
    %p509 = scmp.eq.s32.totalorder %s34, 0
    %p510 = por %p508, %p509
    %s511 = ssub.s32 %s36, %s43
    %p512 = scmp.eq.s32.totalorder %s511, 0
    %s514 = sadd.s32 %s513, 1
    %s515 = scalar_select %p512, %s513, %s514
    %p518 = pneg %p512
    %p519 = scmp.eq.s32.totalorder %s28, 3
    %p520 = por %p518, %p519
    %p521 = scmp.ne.s32.totalorder %s513, %s516
    %p522 = scmp.eq.s32.totalorder %s28, 0
    %p523 = por %p521, %p522
    %p524 = scmp.ne.s32.totalorder %s513, %s516
    %p525 = scmp.eq.s32.totalorder %s33, 3
    %p526 = por %p524, %p525
    %p527 = scmp.ne.s32.totalorder %s516, %s517
    %p528 = scmp.eq.s32.totalorder %s33, 0
    %p529 = por %p527, %p528
    %p530 = scmp.ne.s32.totalorder %s516, %s517
    %p531 = scmp.eq.s32.totalorder %s34, 3
    %p532 = por %p530, %p531
    %p534 = scmp.ne.s32.totalorder %s517, %s533
    %p535 = scmp.eq.s32.totalorder %s34, 0
    %p536 = por %p534, %p535
    %s537 = ssub.s32 %s36, %s43
    %p538 = scmp.eq.s32.totalorder %s537, 0
    %s540 = sadd.s32 %s539, 1
    %s541 = scalar_select %p538, %s539, %s540
    %p544 = pneg %p538
    %p545 = scmp.eq.s32.totalorder %s28, 3
    %p546 = por %p544, %p545
    %p547 = scmp.ne.s32.totalorder %s539, %s542
    %p548 = scmp.eq.s32.totalorder %s28, 0
    %p549 = por %p547, %p548
    %p550 = scmp.ne.s32.totalorder %s539, %s542
    %p551 = scmp.eq.s32.totalorder %s33, 3
    %p552 = por %p550, %p551
    %p553 = scmp.ne.s32.totalorder %s542, %s543
    %p554 = scmp.eq.s32.totalorder %s33, 0
    %p555 = por %p553, %p554
    %p556 = scmp.ne.s32.totalorder %s542, %s543
    %p557 = scmp.eq.s32.totalorder %s34, 3
    %p558 = por %p556, %p557
    %p560 = scmp.ne.s32.totalorder %s543, %s559
    %p561 = scmp.eq.s32.totalorder %s34, 0
    %p562 = por %p560, %p561
    %s564 = sadd.s32 %s563, 1
    %p567 = scmp.eq.s32.totalorder %s28, 3
    %p568 = scmp.ne.s32.totalorder %s563, %s565
    %p569 = scmp.eq.s32.totalorder %s28, 0
    %p570 = por %p568, %p569
    %p571 = scmp.ne.s32.totalorder %s563, %s565
    %p572 = scmp.eq.s32.totalorder %s33, 3
    %p573 = por %p571, %p572
    %p574 = scmp.ne.s32.totalorder %s565, %s566
    %p575 = scmp.eq.s32.totalorder %s33, 0
    %p576 = por %p574, %p575
    %p577 = scmp.ne.s32.totalorder %s565, %s566
    %p578 = scmp.eq.s32.totalorder %s34, 3
    %p579 = por %p577, %p578
    %p581 = scmp.ne.s32.totalorder %s566, %s580
    %p582 = scmp.eq.s32.totalorder %s34, 0
    %p583 = por %p581, %p582
    %s585 = sadd.s32 %s584, 1
    %p588 = scmp.eq.s32.totalorder %s28, 3
    %p589 = scmp.ne.s32.totalorder %s584, %s586
    %p590 = scmp.eq.s32.totalorder %s28, 0
    %p591 = por %p589, %p590
    %p592 = scmp.ne.s32.totalorder %s584, %s586
    %p593 = scmp.eq.s32.totalorder %s33, 3
    %p594 = por %p592, %p593
    %p595 = scmp.ne.s32.totalorder %s586, %s587
    %p596 = scmp.eq.s32.totalorder %s33, 0
    %p597 = por %p595, %p596
    %p598 = scmp.ne.s32.totalorder %s586, %s587
    %p599 = scmp.eq.s32.totalorder %s34, 3
    %p600 = por %p598, %p599
    %p602 = scmp.ne.s32.totalorder %s587, %s601
    %p603 = scmp.eq.s32.totalorder %s34, 0
    %p604 = por %p602, %p603
    %s605 = ssub.s32 %s35, %s47
    %p606 = scmp.eq.s32.totalorder %s605, 0
    %s608 = sadd.s32 %s607, 1
    %s609 = scalar_select %p606, %s607, %s608
    %p612 = pneg %p606
    %p613 = scmp.eq.s32.totalorder %s28, 3
    %p614 = por %p612, %p613
    %p615 = scmp.ne.s32.totalorder %s607, %s610
    %p616 = scmp.eq.s32.totalorder %s28, 0
    %p617 = por %p615, %p616
    %p618 = scmp.ne.s32.totalorder %s607, %s610
    %p619 = scmp.eq.s32.totalorder %s33, 3
    %p620 = por %p618, %p619
    %p621 = scmp.ne.s32.totalorder %s610, %s611
    %p622 = scmp.eq.s32.totalorder %s33, 0
    %p623 = por %p621, %p622
    %p624 = scmp.ne.s32.totalorder %s610, %s611
    %p625 = scmp.eq.s32.totalorder %s34, 3
    %p626 = por %p624, %p625
    %p628 = scmp.ne.s32.totalorder %s611, %s627
    %p629 = scmp.eq.s32.totalorder %s34, 0
    %p630 = por %p628, %p629
    %p631 = scmp.le.s32.totalorder 1, %s28
    %p632 = scmp.lt.s32.totalorder %s28, 5
    %p633 = pnand %p631, %p632
    %p634 = pneg %p633
    // Predicated region
    $region9: #{dinov2_vision_tower_forward.3} parent=5 // pred_check
      _
    $region10: #{dinov2_vision_tower_forward.3} parent=5 // pred_check_branch
      %636 = sbr.rel (%p633) target = $region12
    $region11: #{dinov2_vision_tower_forward.3} parent=5 // pred_region
      %s637 = ssub.s32 %s28, 1
      // Predicated region
      $region13: #{dinov2_vision_tower_forward.3} parent=11 // pred_check
        %p638 = pneg %p87
      $region14: #{dinov2_vision_tower_forward.3} parent=11 // pred_check_branch
        %640 = sbr.rel (%p638) target = $region16
      $region15: #{dinov2_vision_tower_forward.3} parent=11 // pred_region
        _
      $region16: #{dinov2_vision_tower_forward.3} parent=11 // pred_fallthru
        _
      // Predicated region
      $region17: #{dinov2_vision_tower_forward.3} parent=11 // pred_check
        %p641 = pneg %p576
      $region18: #{dinov2_vision_tower_forward.3} parent=11 // pred_check_branch
        %643 = sbr.rel (%p641) target = $region20
      $region19: #{dinov2_vision_tower_forward.3} parent=11 // pred_region
        _
      $region20: #{dinov2_vision_tower_forward.3} parent=11 // pred_fallthru
        _
      // Predicated region
      $region21: #{dinov2_vision_tower_forward.3} parent=11 // pred_check
        %p644 = pneg %p597
      $region22: #{dinov2_vision_tower_forward.3} parent=11 // pred_check_branch
        %646 = sbr.rel (%p644) target = $region24
      $region23: #{dinov2_vision_tower_forward.3} parent=11 // pred_region
        _
      $region24: #{dinov2_vision_tower_forward.3} parent=11 // pred_fallthru
        _
    $region12: #{dinov2_vision_tower_forward.3} parent=5 // pred_fallthru
      _
    %p647 = scmp.lt.s32.totalorder %s28, 4
    // Predicated region
    $region25: #{dinov2_vision_tower_forward.3} parent=5 // pred_check
      %p648 = pneg %p647
    $region26: #{dinov2_vision_tower_forward.3} parent=5 // pred_check_branch
      %650 = sbr.rel (%p648) target = $region28
    $region27: #{dinov2_vision_tower_forward.3} parent=5 // pred_region
      // Predicated region
      $region29: #{dinov2_vision_tower_forward.3} parent=27 // pred_check
        %p651 = pneg %p60
      $region30: #{dinov2_vision_tower_forward.3} parent=27 // pred_check_branch
        %653 = sbr.rel (%p651) target = $region32
      $region31: #{dinov2_vision_tower_forward.3} parent=27 // pred_region
        %p654 = scmp.lt.s32.totalorder %s35, 1
        %s655 = scalar_select %p654, %s35, 1
        %s656 = smul.addr %s655, 8
        %s657 = scalar_lea.vmem %s0, %s656
      $region32: #{dinov2_vision_tower_forward.3} parent=27 // pred_fallthru
        _
      // Predicated region
      $region33: #{dinov2_vision_tower_forward.3} parent=27 // pred_check
        %p658 = pneg %p107
      $region34: #{dinov2_vision_tower_forward.3} parent=27 // pred_check_branch
        %660 = sbr.rel (%p658) target = $region36
      $region35: #{dinov2_vision_tower_forward.3} parent=27 // pred_region
        %p661 = scmp.lt.s32.totalorder %s36, 1
        %s662 = scalar_select %p661, %s36, 1
        %s663 = scalar_lea.vmem %s2, %s662
      $region36: #{dinov2_vision_tower_forward.3} parent=27 // pred_fallthru
        _
      // Predicated region
      $region37: #{dinov2_vision_tower_forward.3} parent=27 // pred_check
        %p664 = pneg %p133
      $region38: #{dinov2_vision_tower_forward.3} parent=27 // pred_check_branch
        %666 = sbr.rel (%p664) target = $region40
      $region39: #{dinov2_vision_tower_forward.3} parent=27 // pred_region
        %p667 = scmp.lt.s32.totalorder %s36, 1
        %s668 = scalar_select %p667, %s36, 1
        %s669 = scalar_lea.vmem %s3, %s668
      $region40: #{dinov2_vision_tower_forward.3} parent=27 // pred_fallthru
        _
      // Predicated region
      $region41: #{dinov2_vision_tower_forward.3} parent=27 // pred_check
        %p670 = pneg %p159
      $region42: #{dinov2_vision_tower_forward.3} parent=27 // pred_check_branch
        %672 = sbr.rel (%p670) target = $region44
      $region43: #{dinov2_vision_tower_forward.3} parent=27 // pred_region
        %p673 = scmp.lt.s32.totalorder %s36, 1
        %s674 = scalar_select %p673, %s36, 1
        %s675 = smul.addr %s674, 4
        %s676 = smul.addr %s675, 4
        %s677 = scalar_lea.vmem %s4, %s676
      $region44: #{dinov2_vision_tower_forward.3} parent=27 // pred_fallthru
        _
      // Predicated region
      $region45: #{dinov2_vision_tower_forward.3} parent=27 // pred_check
        %p678 = pneg %p185
      $region46: #{dinov2_vision_tower_forward.3} parent=27 // pred_check_branch
        %680 = sbr.rel (%p678) target = $region48
      $region47: #{dinov2_vision_tower_forward.3} parent=27 // pred_region
        %p681 = scmp.lt.s32.totalorder %s36, 1
        %s682 = scalar_select %p681, %s36, 1
        %s683 = scalar_lea.vmem %s5, %s682
      $region48: #{dinov2_vision_tower_forward.3} parent=27 // pred_fallthru
        _
      // Predicated region
      $region49: #{dinov2_vision_tower_forward.3} parent=27 // pred_check
        %p684 = pneg %p211
      $region50: #{dinov2_vision_tower_forward.3} parent=27 // pred_check_branch
        %686 = sbr.rel (%p684) target = $region52
      $region51: #{dinov2_vision_tower_forward.3} parent=27 // pred_region
        %p687 = scmp.lt.s32.totalorder %s36, 1
        %s688 = scalar_select %p687, %s36, 1
        %s689 = smul.addr %s688, 4
        %s690 = smul.addr %s689, 4
        %s691 = scalar_lea.vmem %s6, %s690
      $region52: #{dinov2_vision_tower_forward.3} parent=27 // pred_fallthru
        _
      // Predicated region
      $region53: #{dinov2_vision_tower_forward.3} parent=27 // pred_check
        %p692 = pneg %p237
      $region54: #{dinov2_vision_tower_forward.3} parent=27 // pred_check_branch
        %694 = sbr.rel (%p692) target = $region56
      $region55: #{dinov2_vision_tower_forward.3} parent=27 // pred_region
        %p695 = scmp.lt.s32.totalorder %s36, 1
        %s696 = scalar_select %p695, %s36, 1
        %s697 = scalar_lea.vmem %s7, %s696
      $region56: #{dinov2_vision_tower_forward.3} parent=27 // pred_fallthru
        _
      // Predicated region
      $region57: #{dinov2_vision_tower_forward.3} parent=27 // pred_check
        %p698 = pneg %p263
      $region58: #{dinov2_vision_tower_forward.3} parent=27 // pred_check_branch
        %700 = sbr.rel (%p698) target = $region60
      $region59: #{dinov2_vision_tower_forward.3} parent=27 // pred_region
        %p701 = scmp.lt.s32.totalorder %s36, 1
        %s702 = scalar_select %p701, %s36, 1
        %s703 = smul.addr %s702, 4
        %s704 = smul.addr %s703, 4
        %s705 = scalar_lea.vmem %s8, %s704
      $region60: #{dinov2_vision_tower_forward.3} parent=27 // pred_fallthru
        _
      // Predicated region
      $region61: #{dinov2_vision_tower_forward.3} parent=27 // pred_check
        %p706 = pneg %p289
      $region62: #{dinov2_vision_tower_forward.3} parent=27 // pred_check_branch
        %708 = sbr.rel (%p706) target = $region64
      $region63: #{dinov2_vision_tower_forward.3} parent=27 // pred_region
        %p709 = scmp.lt.s32.totalorder %s36, 1
        %s710 = scalar_select %p709, %s36, 1
        %s711 = scalar_lea.vmem %s9, %s710
      $region64: #{dinov2_vision_tower_forward.3} parent=27 // pred_fallthru
        _
      // Predicated region
      $region65: #{dinov2_vision_tower_forward.3} parent=27 // pred_check
        %p712 = pneg %p315
      $region66: #{dinov2_vision_tower_forward.3} parent=27 // pred_check_branch
        %714 = sbr.rel (%p712) target = $region68
      $region67: #{dinov2_vision_tower_forward.3} parent=27 // pred_region
        %p715 = scmp.lt.s32.totalorder %s36, 1
        %s716 = scalar_select %p715, %s36, 1
        %s717 = smul.addr %s716, 4
        %s718 = smul.addr %s717, 4
        %s719 = scalar_lea.vmem %s10, %s718
      $region68: #{dinov2_vision_tower_forward.3} parent=27 // pred_fallthru
        _
      // Predicated region
      $region69: #{dinov2_vision_tower_forward.3} parent=27 // pred_check
        %p720 = pneg %p341
      $region70: #{dinov2_vision_tower_forward.3} parent=27 // pred_check_branch
        %722 = sbr.rel (%p720) target = $region72
      $region71: #{dinov2_vision_tower_forward.3} parent=27 // pred_region
        %p723 = scmp.lt.s32.totalorder %s36, 1
        %s724 = scalar_select %p723, %s36, 1
        %s725 = scalar_lea.vmem %s11, %s724
      $region72: #{dinov2_vision_tower_forward.3} parent=27 // pred_fallthru
        _
      // Predicated region
      $region73: #{dinov2_vision_tower_forward.3} parent=27 // pred_check
        %p726 = pneg %p367
      $region74: #{dinov2_vision_tower_forward.3} parent=27 // pred_check_branch
        %728 = sbr.rel (%p726) target = $region76
      $region75: #{dinov2_vision_tower_forward.3} parent=27 // pred_region
        %p729 = scmp.lt.s32.totalorder %s36, 1
        %s730 = scalar_select %p729, %s36, 1
        %s731 = scalar_lea.vmem %s12, %s730
      $region76: #{dinov2_vision_tower_forward.3} parent=27 // pred_fallthru
        _
      // Predicated region
      $region77: #{dinov2_vision_tower_forward.3} parent=27 // pred_check
        %p732 = pneg %p393
      $region78: #{dinov2_vision_tower_forward.3} parent=27 // pred_check_branch
        %734 = sbr.rel (%p732) target = $region80
      $region79: #{dinov2_vision_tower_forward.3} parent=27 // pred_region
        %p735 = scmp.lt.s32.totalorder %s36, 1
        %s736 = scalar_select %p735, %s36, 1
        %s737 = scalar_lea.vmem %s13, %s736
      $region80: #{dinov2_vision_tower_forward.3} parent=27 // pred_fallthru
        _
      // Predicated region
      $region81: #{dinov2_vision_tower_forward.3} parent=27 // pred_check
        %p738 = pneg %p419
      $region82: #{dinov2_vision_tower_forward.3} parent=27 // pred_check_branch
        %740 = sbr.rel (%p738) target = $region84
      $region83: #{dinov2_vision_tower_forward.3} parent=27 // pred_region
        %p741 = scmp.lt.s32.totalorder %s36, 1
        %s742 = scalar_select %p741, %s36, 1
        %s743 = scalar_lea.vmem %s14, %s742
      $region84: #{dinov2_vision_tower_forward.3} parent=27 // pred_fallthru
        _
      // Predicated region
      $region85: #{dinov2_vision_tower_forward.3} parent=27 // pred_check
        %p744 = pneg %p445
      $region86: #{dinov2_vision_tower_forward.3} parent=27 // pred_check_branch
        %746 = sbr.rel (%p744) target = $region88
      $region87: #{dinov2_vision_tower_forward.3} parent=27 // pred_region
        %p747 = scmp.lt.s32.totalorder %s36, 1
        %s748 = scalar_select %p747, %s36, 1
        %s749 = smul.addr %s748, 4
        %s750 = smul.addr %s749, 4
        %s751 = scalar_lea.vmem %s15, %s750
      $region88: #{dinov2_vision_tower_forward.3} parent=27 // pred_fallthru
        _
      // Predicated region
      $region89: #{dinov2_vision_tower_forward.3} parent=27 // pred_check
        %p752 = pneg %p471
      $region90: #{dinov2_vision_tower_forward.3} parent=27 // pred_check_branch
        %754 = sbr.rel (%p752) target = $region92
      $region91: #{dinov2_vision_tower_forward.3} parent=27 // pred_region
        %p755 = scmp.lt.s32.totalorder %s36, 1
        %s756 = scalar_select %p755, %s36, 1
        %s757 = scalar_lea.vmem %s16, %s756
      $region92: #{dinov2_vision_tower_forward.3} parent=27 // pred_fallthru
        _
      // Predicated region
      $region93: #{dinov2_vision_tower_forward.3} parent=27 // pred_check
        %p758 = pneg %p497
      $region94: #{dinov2_vision_tower_forward.3} parent=27 // pred_check_branch
        %760 = sbr.rel (%p758) target = $region96
      $region95: #{dinov2_vision_tower_forward.3} parent=27 // pred_region
        %p761 = scmp.lt.s32.totalorder %s36, 1
        %s762 = scalar_select %p761, %s36, 1
        %s763 = smul.addr %s762, 16
        %s764 = smul.addr %s763, 4
        %s765 = scalar_lea.vmem %s17, %s764
      $region96: #{dinov2_vision_tower_forward.3} parent=27 // pred_fallthru
        _
      // Predicated region
      $region97: #{dinov2_vision_tower_forward.3} parent=27 // pred_check
        %p766 = pneg %p523
      $region98: #{dinov2_vision_tower_forward.3} parent=27 // pred_check_branch
        %768 = sbr.rel (%p766) target = $region100
      $region99: #{dinov2_vision_tower_forward.3} parent=27 // pred_region
        %p769 = scmp.lt.s32.totalorder %s36, 1
        %s770 = scalar_select %p769, %s36, 1
        %s771 = scalar_lea.vmem %s18, %s770
      $region100: #{dinov2_vision_tower_forward.3} parent=27 // pred_fallthru
        _
      // Predicated region
      $region101: #{dinov2_vision_tower_forward.3} parent=27 // pred_check
        %p772 = pneg %p549
      $region102: #{dinov2_vision_tower_forward.3} parent=27 // pred_check_branch
        %774 = sbr.rel (%p772) target = $region104
      $region103: #{dinov2_vision_tower_forward.3} parent=27 // pred_region
        %p775 = scmp.lt.s32.totalorder %s36, 1
        %s776 = scalar_select %p775, %s36, 1
        %s777 = scalar_lea.vmem %s19, %s776
      $region104: #{dinov2_vision_tower_forward.3} parent=27 // pred_fallthru
        _
    $region28: #{dinov2_vision_tower_forward.3} parent=5 // pred_fallthru
      _
    %p778 = scmp.le.s32.totalorder 1, %s28
    %p779 = scmp.lt.s32.totalorder %s28, 5
    %p780 = pnand %p778, %p779
    %p781 = pneg %p780
    // Predicated region
    $region105: #{dinov2_vision_tower_forward.3} parent=5 // pred_check
      _
    $region106: #{dinov2_vision_tower_forward.3} parent=5 // pred_check_branch
      %783 = sbr.rel (%p780) target = $region108
    $region107: #{dinov2_vision_tower_forward.3} parent=5 // pred_region
      %s784 = ssub.s32 %s28, 1
      %p785 = scmp.lt.s32.totalorder %s37, 1
      %s786 = scalar_select %p785, %s37, 1
      %s787 = smul.addr %s786, 8
      %s788 = scalar_lea.vmem %s0, %s787
      %p789 = pneg %p66
      %p790 = pneg %p63
      %p791 = pneg %p87
      %p792 = pneg %p84
      %p793 = scmp.lt.s32.totalorder %s38, 1
      %s794 = scalar_select %p793, %s38, 1
      %s795 = scalar_lea.vmem %s2, %s794
      %p796 = pneg %p113
      %p797 = pneg %p110
      %p798 = scmp.lt.s32.totalorder %s38, 1
      %s799 = scalar_select %p798, %s38, 1
      %s800 = scalar_lea.vmem %s3, %s799
      %p801 = pneg %p139
      %p802 = pneg %p136
      %p803 = scmp.lt.s32.totalorder %s38, 1
      %s804 = scalar_select %p803, %s38, 1
      %s805 = smul.addr %s804, 4
      %s806 = smul.addr %s805, 4
      %s807 = scalar_lea.vmem %s4, %s806
      %p808 = pneg %p165
      %p809 = pneg %p162
      %p810 = scmp.lt.s32.totalorder %s38, 1
      %s811 = scalar_select %p810, %s38, 1
      %s812 = scalar_lea.vmem %s5, %s811
      %p813 = pneg %p191
      %p814 = pneg %p188
      %p815 = scmp.lt.s32.totalorder %s38, 1
      %s816 = scalar_select %p815, %s38, 1
      %s817 = smul.addr %s816, 4
      %s818 = smul.addr %s817, 4
      %s819 = scalar_lea.vmem %s6, %s818
      %p820 = pneg %p217
      %p821 = pneg %p214
      %p822 = scmp.lt.s32.totalorder %s38, 1
      %s823 = scalar_select %p822, %s38, 1
      %s824 = scalar_lea.vmem %s7, %s823
      %p825 = pneg %p243
      %p826 = pneg %p240
      %p827 = scmp.lt.s32.totalorder %s38, 1
      %s828 = scalar_select %p827, %s38, 1
      %s829 = smul.addr %s828, 4
      %s830 = smul.addr %s829, 4
      %s831 = scalar_lea.vmem %s8, %s830
      %p832 = pneg %p269
      %p833 = pneg %p266
      %p834 = scmp.lt.s32.totalorder %s38, 1
      %s835 = scalar_select %p834, %s38, 1
      %s836 = scalar_lea.vmem %s9, %s835
      %p837 = pneg %p295
      %p838 = pneg %p292
      %p839 = scmp.lt.s32.totalorder %s38, 1
      %s840 = scalar_select %p839, %s38, 1
      %s841 = smul.addr %s840, 4
      %s842 = smul.addr %s841, 4
      %s843 = scalar_lea.vmem %s10, %s842
      %p844 = pneg %p321
      %p845 = pneg %p318
      %p846 = scmp.lt.s32.totalorder %s38, 1
      %s847 = scalar_select %p846, %s38, 1
      %s848 = scalar_lea.vmem %s11, %s847
      %p849 = pneg %p347
      %p850 = pneg %p344
      %p851 = scmp.lt.s32.totalorder %s38, 1
      %s852 = scalar_select %p851, %s38, 1
      %s853 = scalar_lea.vmem %s12, %s852
      %p854 = pneg %p373
      %p855 = pneg %p370
      %p856 = scmp.lt.s32.totalorder %s38, 1
      %s857 = scalar_select %p856, %s38, 1
      %s858 = scalar_lea.vmem %s13, %s857
      %p859 = pneg %p399
      %p860 = pneg %p396
      %p861 = scmp.lt.s32.totalorder %s38, 1
      %s862 = scalar_select %p861, %s38, 1
      %s863 = scalar_lea.vmem %s14, %s862
      %p864 = pneg %p425
      %p865 = pneg %p422
      %p866 = scmp.lt.s32.totalorder %s38, 1
      %s867 = scalar_select %p866, %s38, 1
      %s868 = smul.addr %s867, 4
      %s869 = smul.addr %s868, 4
      %s870 = scalar_lea.vmem %s15, %s869
      %p871 = pneg %p451
      %p872 = pneg %p448
      %p873 = scmp.lt.s32.totalorder %s38, 1
      %s874 = scalar_select %p873, %s38, 1
      %s875 = scalar_lea.vmem %s16, %s874
      %p876 = pneg %p477
      %p877 = pneg %p474
      %p878 = scmp.lt.s32.totalorder %s38, 1
      %s879 = scalar_select %p878, %s38, 1
      %s880 = smul.addr %s879, 16
      %s881 = smul.addr %s880, 4
      %s882 = scalar_lea.vmem %s17, %s881
      %p883 = pneg %p503
      %p884 = pneg %p500
      %p885 = scmp.lt.s32.totalorder %s38, 1
      %s886 = scalar_select %p885, %s38, 1
      %s887 = scalar_lea.vmem %s18, %s886
      %p888 = pneg %p529
      %p889 = pneg %p526
      %p890 = scmp.lt.s32.totalorder %s38, 1
      %s891 = scalar_select %p890, %s38, 1
      %s892 = scalar_lea.vmem %s19, %s891
      %p893 = pneg %p555
      %p894 = pneg %p552
      %p895 = pneg %p576
      %p896 = pneg %p573
      %p897 = pneg %p597
      %p898 = pneg %p594
      %p899 = pneg %p623
      %p900 = pneg %p620
      %p901 = scmp.lt.s32.totalorder %s37, 1
      %s902 = scalar_select %p901, %s37, 1
      %s903 = smul.addr %s902, 8
      %s904 = scalar_lea.vmem %s22, %s903
      %p905 = scmp.lt.s32.totalorder %s37, 1
      %s906 = scalar_select %p905, %s37, 1
      %s907 = smul.addr %s906, 8
      %s908 = scalar_lea.vmem %s0, %s907
      %p909 = scmp.lt.s32.totalorder %s38, 1
      %s910 = scalar_select %p909, %s38, 1
      %s911 = scalar_lea.vmem %s2, %s910
      %p912 = scmp.lt.s32.totalorder %s38, 1
      %s913 = scalar_select %p912, %s38, 1
      %s914 = scalar_lea.vmem %s3, %s913
      %p915 = scmp.lt.s32.totalorder %s38, 1
      %s916 = scalar_select %p915, %s38, 1
      %s917 = smul.addr %s916, 4
      %s918 = smul.addr %s917, 4
      %s919 = scalar_lea.vmem %s4, %s918
      %p920 = scmp.lt.s32.totalorder %s38, 1
      %s921 = scalar_select %p920, %s38, 1
      %s922 = scalar_lea.vmem %s5, %s921
      %p923 = scmp.lt.s32.totalorder %s38, 1
      %s924 = scalar_select %p923, %s38, 1
      %s925 = smul.addr %s924, 4
      %s926 = smul.addr %s925, 4
      %s927 = scalar_lea.vmem %s6, %s926
      %p928 = scmp.lt.s32.totalorder %s38, 1
      %s929 = scalar_select %p928, %s38, 1
      %s930 = scalar_lea.vmem %s7, %s929
      %p931 = scmp.lt.s32.totalorder %s38, 1
      %s932 = scalar_select %p931, %s38, 1
      %s933 = smul.addr %s932, 4
      %s934 = smul.addr %s933, 4
      %s935 = scalar_lea.vmem %s8, %s934
      %p936 = scmp.lt.s32.totalorder %s38, 1
      %s937 = scalar_select %p936, %s38, 1
      %s938 = scalar_lea.vmem %s9, %s937
      %p939 = scmp.lt.s32.totalorder %s38, 1
      %s940 = scalar_select %p939, %s38, 1
      %s941 = smul.addr %s940, 4
      %s942 = smul.addr %s941, 4
      %s943 = scalar_lea.vmem %s10, %s942
      %p944 = scmp.lt.s32.totalorder %s38, 1
      %s945 = scalar_select %p944, %s38, 1
      %s946 = scalar_lea.vmem %s11, %s945
      %p947 = scmp.lt.s32.totalorder %s38, 1
      %s948 = scalar_select %p947, %s38, 1
      %s949 = scalar_lea.vmem %s12, %s948
      %p950 = scmp.lt.s32.totalorder %s38, 1
      %s951 = scalar_select %p950, %s38, 1
      %s952 = scalar_lea.vmem %s13, %s951
      %p953 = scmp.lt.s32.totalorder %s38, 1
      %s954 = scalar_select %p953, %s38, 1
      %s955 = scalar_lea.vmem %s14, %s954
      %p956 = scmp.lt.s32.totalorder %s38, 1
      %s957 = scalar_select %p956, %s38, 1
      %s958 = smul.addr %s957, 4
      %s959 = smul.addr %s958, 4
      %s960 = scalar_lea.vmem %s15, %s959
      %p961 = scmp.lt.s32.totalorder %s38, 1
      %s962 = scalar_select %p961, %s38, 1
      %s963 = scalar_lea.vmem %s16, %s962
      %p964 = scmp.lt.s32.totalorder %s38, 1
      %s965 = scalar_select %p964, %s38, 1
      %s966 = smul.addr %s965, 16
      %s967 = smul.addr %s966, 4
      %s968 = scalar_lea.vmem %s17, %s967
      %p969 = scmp.lt.s32.totalorder %s38, 1
      %s970 = scalar_select %p969, %s38, 1
      %s971 = scalar_lea.vmem %s18, %s970
      %p972 = scmp.lt.s32.totalorder %s38, 1
      %s973 = scalar_select %p972, %s38, 1
      %s974 = scalar_lea.vmem %s19, %s973
      %p975 = scmp.lt.s32.totalorder %s37, 1
      %s976 = scalar_select %p975, %s37, 1
      %s977 = smul.addr %s976, 8
      %s978 = scalar_lea.vmem %s22, %s977
      %p980 = scmp.eq.s32.totalorder %s38, 0
      // Predicated region
      $region109: #{dinov2_vision_tower_forward.3} parent=107 // pred_check
        %p981 = pneg %p980
      $region110: #{dinov2_vision_tower_forward.3} parent=107 // pred_check_branch
        %983 = sbr.rel (%p981) target = $region112
      $region111: #{dinov2_vision_tower_forward.3} parent=107 // pred_region
        %v984 = vld [vmem:[%s908] sm:$0xff]
        %v985 = vld [vmem:[%s1] sm:$0xff]
        %v986 = vadd.f32 %v984, %v985
        %vm987 = vcmask 261120
        %988 = vst.msk [vmem:[#allocation2] sm:$0xff] %vm987, %v986
      $region112: #{dinov2_vision_tower_forward.3} parent=107 // pred_fallthru
        _
      %v989 = vld [vmem:[#allocation2] sm:$0xff]
      %v990 = vld [vmem:[%s911] sm:$0x1]
      %v991 = vld [vmem:[%s914] sm:$0x1]
      %vm992 = vcmask 261120
      %v993 = vsel %vm992, %v989, 0.0
      %994 = vadd.xlane.f32.xlu0 %v993
      %v995 = vpop.xlane.xlu0 %994
      %v996 = vrcp.pop 32.0
      %v997 = vmul.f32 %v995, %v996
      %v998 = vsub.f32 %v989, %v997
      %v999 = vmul.f32 %v998, %v998
      %v1000 = vsel %vm992, %v999, 0.0
      %1001 = vadd.xlane.f32.xlu0 %v1000
      %v1002 = vpop.xlane.xlu0 %1001
      %v1003 = vmul.f32 %v1002, %v996
      %v1004 = vadd.f32 %v1003, 1e-06
      %v1005 = vrsqrt.pop %v1004
      %v1006 = vmul.f32 %v998, %v1005
      %v1008 = vlaneseq
      %v1009 = vshrl.u32 %v1008, 7
      %v1010 = vsub.s32 0, %v1009
      %v1011 = vrot.slane %v990, %v1010
      %v1013 = vmul.f32 %v1006, %v1011
      %v1015 = vlaneseq
      %v1016 = vshrl.u32 %v1015, 7
      %v1017 = vsub.s32 0, %v1016
      %v1018 = vrot.slane %v991, %v1017
      %v1020 = vadd.f32 %v1013, %v1018
      %v1021 = vpack.c.bf16 %v1020, %v1020
      %v1022 = vld [vmem:[%s919] sm:$0xf]
      %v1023 = vld [vmem:[%s919 + $0x4] sm:$0xf]
      %v1024 = vld [vmem:[%s919 + $0x8] sm:$0xf]
      %v1025 = vld [vmem:[%s919 + $0xc] sm:$0xf]
      %v1026 = vld [vmem:[%s922] sm:$0x1]
      %v1028 = vlaneseq
      %v1029 = vshrl.u32 %v1028, 7
      %v1030 = vsub.s32 0, %v1029
      %v1031 = vrot.slane %v1026, %v1030
      %v1037 = vunpack.c.l.b16 %v1022
      %v1038 = vunpack.c.l.b16 %v1023
      %v1039 = vunpack.c.l.b16 %v1024
      %v1040 = vunpack.c.l.b16 %v1025
      %v1041 = vpack.c.b16 %v1038, %v1037
      %v1042 = vpack.c.b16 %v1040, %v1039
      %v1046 = vsel %vm992, %v1021, 0
      %1048 = vmatprep.subr.bf16.mxu0 0
      %1049 = vmatpush1.bf16.msra.mxu0 %v1041
      %1050 = vmatprep.subr.bf16.mxu0 0
      %1051 = vmatpush1.bf16.msra.mxu0 %v1042
      %1052 = vmatprep.subr.bf16.mxu0 0
      %1053 = vmatpush1.bf16.msra.mxu0 0
      %1054 = vmatprep.subr.bf16.mxu0 0
      %1055 = vmatpush1.bf16.msra.mxu0 0
      %1056 = vmatprep.subr.bf16.mxu0 0
      %1057 = vmatpush1.bf16.msra.mxu0 0
      %1058 = vmatprep.subr.bf16.mxu0 0
      %1059 = vmatpush1.bf16.msra.mxu0 0
      %1060 = vmatprep.subr.bf16.mxu0 0
      %1061 = vmatpush1.bf16.msra.mxu0 0
      %1062 = vmatprep.subr.bf16.mxu0 0
      %1063 = vmatpush1.bf16.msra.mxu0 0
      %1064 = vmatprep.subr.bf16.mxu0 0
      %1065 = vmatpush1.bf16.msra.mxu0 0
      %1066 = vmatprep.subr.bf16.mxu0 0
      %1067 = vmatpush1.bf16.msra.mxu0 0
      %1068 = vmatprep.subr.bf16.mxu0 0
      %1069 = vmatpush1.bf16.msra.mxu0 0
      %1070 = vmatprep.subr.bf16.mxu0 0
      %1071 = vmatpush1.bf16.msra.mxu0 0
      %1072 = vmatprep.subr.bf16.mxu0 0
      %1073 = vmatpush1.bf16.msra.mxu0 0
      %1074 = vmatprep.subr.bf16.mxu0 0
      %1075 = vmatpush1.bf16.msra.mxu0 0
      %1076 = vmatprep.subr.bf16.mxu0 0
      %1077 = vmatpush1.bf16.msra.mxu0 0
      %1078 = vmatprep.subr.bf16.mxu0 0
      %1079 = vmatpush1.bf16.msra.mxu0 0
      %1080 = vmatprep.mubr.bf16.mxu0 0
      %1081 = vmatmul.mubr.bf16.gmra.mrb[0].mxu0 %v1046
      %v1082 = vpop.f32.mrb[0].mxu0
      %v1083 = vadd.f32 %v1031, %v1082
      %v1084 = vpop.f32.mrb[0].mxu0
      %v1085 = vpop.f32.mrb[0].mxu0
      %v1086 = vpop.f32.mrb[0].mxu0
      %1087 = vdwg.mxu0
      %v1088 = vld [vmem:[%s927] sm:$0xf]
      %v1089 = vld [vmem:[%s927 + $0x4] sm:$0xf]
      %v1090 = vld [vmem:[%s927 + $0x8] sm:$0xf]
      %v1091 = vld [vmem:[%s927 + $0xc] sm:$0xf]
      %v1092 = vld [vmem:[%s930] sm:$0x1]
      %v1094 = vlaneseq
      %v1095 = vshrl.u32 %v1094, 7
      %v1096 = vsub.s32 0, %v1095
      %v1097 = vrot.slane %v1092, %v1096
      %v1103 = vunpack.c.l.b16 %v1088
      %v1104 = vunpack.c.l.b16 %v1089
      %v1105 = vunpack.c.l.b16 %v1090
      %v1106 = vunpack.c.l.b16 %v1091
      %v1107 = vpack.c.b16 %v1104, %v1103
      %v1108 = vpack.c.b16 %v1106, %v1105
      %1111 = vmatprep.subr.bf16.mxu0 0
      %1112 = vmatpush1.bf16.msra.mxu0 %v1107
      %1113 = vmatprep.subr.bf16.mxu0 0
      %1114 = vmatpush1.bf16.msra.mxu0 %v1108
      %1115 = vmatprep.subr.bf16.mxu0 0
      %1116 = vmatpush1.bf16.msra.mxu0 0
      %1117 = vmatprep.subr.bf16.mxu0 0
      %1118 = vmatpush1.bf16.msra.mxu0 0
      %1119 = vmatprep.subr.bf16.mxu0 0
      %1120 = vmatpush1.bf16.msra.mxu0 0
      %1121 = vmatprep.subr.bf16.mxu0 0
      %1122 = vmatpush1.bf16.msra.mxu0 0
      %1123 = vmatprep.subr.bf16.mxu0 0
      %1124 = vmatpush1.bf16.msra.mxu0 0
      %1125 = vmatprep.subr.bf16.mxu0 0
      %1126 = vmatpush1.bf16.msra.mxu0 0
      %1127 = vmatprep.subr.bf16.mxu0 0
      %1128 = vmatpush1.bf16.msra.mxu0 0
      %1129 = vmatprep.subr.bf16.mxu0 0
      %1130 = vmatpush1.bf16.msra.mxu0 0
      %1131 = vmatprep.subr.bf16.mxu0 0
      %1132 = vmatpush1.bf16.msra.mxu0 0
      %1133 = vmatprep.subr.bf16.mxu0 0
      %1134 = vmatpush1.bf16.msra.mxu0 0
      %1135 = vmatprep.subr.bf16.mxu0 0
      %1136 = vmatpush1.bf16.msra.mxu0 0
      %1137 = vmatprep.subr.bf16.mxu0 0
      %1138 = vmatpush1.bf16.msra.mxu0 0
      %1139 = vmatprep.subr.bf16.mxu0 0
      %1140 = vmatpush1.bf16.msra.mxu0 0
      %1141 = vmatprep.subr.bf16.mxu0 0
      %1142 = vmatpush1.bf16.msra.mxu0 0
      %1143 = vmatprep.mubr.bf16.mxu0 0
      %1144 = vmatmul.mubr.bf16.gmra.mrb[0].mxu0 %v1046
      %v1145 = vpop.f32.mrb[0].mxu0
      %v1146 = vadd.f32 %v1097, %v1145
      %v1147 = vpop.f32.mrb[0].mxu0
      %v1148 = vpop.f32.mrb[0].mxu0
      %v1149 = vpop.f32.mrb[0].mxu0
      %1150 = vdwg.mxu0
      %v1151 = vld [vmem:[%s935] sm:$0xf]
      %v1152 = vld [vmem:[%s935 + $0x4] sm:$0xf]
      %v1153 = vld [vmem:[%s935 + $0x8] sm:$0xf]
      %v1154 = vld [vmem:[%s935 + $0xc] sm:$0xf]
      %v1155 = vld [vmem:[%s938] sm:$0x1]
      %v1157 = vlaneseq
      %v1158 = vshrl.u32 %v1157, 7
      %v1159 = vsub.s32 0, %v1158
      %v1160 = vrot.slane %v1155, %v1159
      %v1166 = vunpack.c.l.b16 %v1151
      %v1167 = vunpack.c.l.b16 %v1152
      %v1168 = vunpack.c.l.b16 %v1153
      %v1169 = vunpack.c.l.b16 %v1154
      %v1170 = vpack.c.b16 %v1167, %v1166
      %v1171 = vpack.c.b16 %v1169, %v1168
      %1174 = vmatprep.subr.bf16.mxu0 0
      %1175 = vmatpush1.bf16.msra.mxu0 %v1170
      %1176 = vmatprep.subr.bf16.mxu0 0
      %1177 = vmatpush1.bf16.msra.mxu0 %v1171
      %1178 = vmatprep.subr.bf16.mxu0 0
      %1179 = vmatpush1.bf16.msra.mxu0 0
      %1180 = vmatprep.subr.bf16.mxu0 0
      %1181 = vmatpush1.bf16.msra.mxu0 0
      %1182 = vmatprep.subr.bf16.mxu0 0
      %1183 = vmatpush1.bf16.msra.mxu0 0
      %1184 = vmatprep.subr.bf16.mxu0 0
      %1185 = vmatpush1.bf16.msra.mxu0 0
      %1186 = vmatprep.subr.bf16.mxu0 0
      %1187 = vmatpush1.bf16.msra.mxu0 0
      %1188 = vmatprep.subr.bf16.mxu0 0
      %1189 = vmatpush1.bf16.msra.mxu0 0
      %1190 = vmatprep.subr.bf16.mxu0 0
      %1191 = vmatpush1.bf16.msra.mxu0 0
      %1192 = vmatprep.subr.bf16.mxu0 0
      %1193 = vmatpush1.bf16.msra.mxu0 0
      %1194 = vmatprep.subr.bf16.mxu0 0
      %1195 = vmatpush1.bf16.msra.mxu0 0
      %1196 = vmatprep.subr.bf16.mxu0 0
      %1197 = vmatpush1.bf16.msra.mxu0 0
      %1198 = vmatprep.subr.bf16.mxu0 0
      %1199 = vmatpush1.bf16.msra.mxu0 0
      %1200 = vmatprep.subr.bf16.mxu0 0
      %1201 = vmatpush1.bf16.msra.mxu0 0
      %1202 = vmatprep.subr.bf16.mxu0 0
      %1203 = vmatpush1.bf16.msra.mxu0 0
      %1204 = vmatprep.subr.bf16.mxu0 0
      %1205 = vmatpush1.bf16.msra.mxu0 0
      %1206 = vmatprep.mubr.bf16.mxu0 0
      %1207 = vmatmul.mubr.bf16.gmra.mrb[0].mxu0 %v1046
      %v1208 = vpop.f32.mrb[0].mxu0
      %v1209 = vadd.f32 %v1160, %v1208
      %v1210 = vpop.f32.mrb[0].mxu0
      %v1211 = vpop.f32.mrb[0].mxu0
      %v1212 = vpop.f32.mrb[0].mxu0
      %1213 = vdwg.mxu0
      %1215 = vrot.lane.b32.xlu0 %v1083, 120
      %v1216 = vpop.permute.xlu0 %1215
      %1218 = vrot.lane.b32.xlu0 %v1083, 112
      %v1219 = vpop.permute.xlu0 %1218
      %1221 = vrot.lane.b32.xlu0 %v1083, 104
      %v1222 = vpop.permute.xlu0 %1221
      %v1224 = vcombine.low %v1083, %v1219
      %v1225 = vcombine.high %v1083, %v1219
      %v1227 = vunpack.c.l.s4 1983009808
      %v1228 = vunpack.c.0.s8 %v1227
      %v1229 = vlaneseq
      %v1230 = vshrl.u32 %v1229, 7
      %v1231 = vsub.s32 %v1228, %v1230
      %v1232 = vrot.slane %v1224, %v1231
      %v1234 = vunpack.c.l.s4 1983009808
      %v1235 = vunpack.c.0.s8 %v1234
      %v1236 = vlaneseq
      %v1237 = vshrl.u32 %v1236, 7
      %v1238 = vsub.s32 %v1235, %v1237
      %v1239 = vrot.slane %v1225, %v1238
      %v1240 = vcombine.low %v1216, %v1222
      %v1241 = vcombine.high %v1216, %v1222
      %v1243 = vunpack.c.l.s4 1983009808
      %v1244 = vunpack.c.0.s8 %v1243
      %v1245 = vlaneseq
      %v1246 = vshrl.u32 %v1245, 7
      %v1247 = vsub.s32 %v1244, %v1246
      %v1248 = vrot.slane %v1240, %v1247
      %v1250 = vunpack.c.l.s4 1983009808
      %v1251 = vunpack.c.0.s8 %v1250
      %v1252 = vlaneseq
      %v1253 = vshrl.u32 %v1252, 7
      %v1254 = vsub.s32 %v1251, %v1253
      %v1255 = vrot.slane %v1241, %v1254
      %v1256 = vcombine.low %v1232, %v1248
      %v1257 = vcombine.high %v1232, %v1248
      %v1259 = vunpack.c.l.s4 1934713408
      %v1260 = vunpack.c.0.s8 %v1259
      %v1261 = vlaneseq
      %v1262 = vshrl.u32 %v1261, 7
      %v1263 = vsub.s32 %v1260, %v1262
      %v1264 = vrot.slane %v1256, %v1263
      %v1266 = vunpack.c.l.s4 1934713408
      %v1267 = vunpack.c.0.s8 %v1266
      %v1268 = vlaneseq
      %v1269 = vshrl.u32 %v1268, 7
      %v1270 = vsub.s32 %v1267, %v1269
      %v1271 = vrot.slane %v1257, %v1270
      %v1272 = vcombine.low %v1239, %v1255
      %v1273 = vcombine.high %v1239, %v1255
      %v1275 = vunpack.c.l.s4 1934713408
      %v1276 = vunpack.c.0.s8 %v1275
      %v1277 = vlaneseq
      %v1278 = vshrl.u32 %v1277, 7
      %v1279 = vsub.s32 %v1276, %v1278
      %v1280 = vrot.slane %v1272, %v1279
      %v1282 = vunpack.c.l.s4 1934713408
      %v1283 = vunpack.c.0.s8 %v1282
      %v1284 = vlaneseq
      %v1285 = vshrl.u32 %v1284, 7
      %v1286 = vsub.s32 %v1283, %v1285
      %v1287 = vrot.slane %v1273, %v1286
      %v1288 = vcombine.high %v1264, 0.0
      %v1289 = vcombine.high %v1271, 0.0
      %v1290 = vcombine.high %v1280, 0.0
      %v1291 = vcombine.high %v1287, 0.0
      %v1292 = vcombine.low %v1264, %v1271
      %v1294 = vunpack.c.l.s4 1983009808
      %v1295 = vunpack.c.0.s8 %v1294
      %v1296 = vlaneseq
      %v1297 = vshrl.u32 %v1296, 7
      %v1298 = vsub.s32 %v1295, %v1297
      %v1299 = vrot.slane %v1292, %v1298
      %v1300 = vcombine.low %v1288, %v1289
      %v1302 = vunpack.c.l.s4 1983009808
      %v1303 = vunpack.c.0.s8 %v1302
      %v1304 = vlaneseq
      %v1305 = vshrl.u32 %v1304, 7
      %v1306 = vsub.s32 %v1303, %v1305
      %v1307 = vrot.slane %v1300, %v1306
      %v1308 = vcombine.low %v1280, %v1287
      %v1310 = vunpack.c.l.s4 1983009808
      %v1311 = vunpack.c.0.s8 %v1310
      %v1312 = vlaneseq
      %v1313 = vshrl.u32 %v1312, 7
      %v1314 = vsub.s32 %v1311, %v1313
      %v1315 = vrot.slane %v1308, %v1314
      %v1316 = vcombine.low %v1290, %v1291
      %v1318 = vunpack.c.l.s4 1983009808
      %v1319 = vunpack.c.0.s8 %v1318
      %v1320 = vlaneseq
      %v1321 = vshrl.u32 %v1320, 7
      %v1322 = vsub.s32 %v1319, %v1321
      %v1323 = vrot.slane %v1316, %v1322
      %v1324 = vcombine.low %v1299, %v1307
      %v1325 = vcombine.high %v1299, %v1307
      %v1327 = vunpack.c.l.s4 1934713408
      %v1328 = vunpack.c.0.s8 %v1327
      %v1329 = vlaneseq
      %v1330 = vshrl.u32 %v1329, 7
      %v1331 = vsub.s32 %v1328, %v1330
      %v1332 = vrot.slane %v1324, %v1331
      %v1334 = vunpack.c.l.s4 1934713408
      %v1335 = vunpack.c.0.s8 %v1334
      %v1336 = vlaneseq
      %v1337 = vshrl.u32 %v1336, 7
      %v1338 = vsub.s32 %v1335, %v1337
      %v1339 = vrot.slane %v1325, %v1338
      %v1340 = vcombine.low %v1315, %v1323
      %v1341 = vcombine.high %v1315, %v1323
      %v1343 = vunpack.c.l.s4 1934713408
      %v1344 = vunpack.c.0.s8 %v1343
      %v1345 = vlaneseq
      %v1346 = vshrl.u32 %v1345, 7
      %v1347 = vsub.s32 %v1344, %v1346
      %v1348 = vrot.slane %v1340, %v1347
      %v1350 = vunpack.c.l.s4 1934713408
      %v1351 = vunpack.c.0.s8 %v1350
      %v1352 = vlaneseq
      %v1353 = vshrl.u32 %v1352, 7
      %v1354 = vsub.s32 %v1351, %v1353
      %v1355 = vrot.slane %v1341, %v1354
      %v1356 = vcombine.low %v1332, %v1348
      %v1357 = vcombine.high %v1332, %v1348
      %v1358 = vcombine.low %v1339, %v1355
      %v1359 = vcombine.high %v1339, %v1355
      %v1360 = vpack.c.bf16 %v1356, %v1356
      %v1361 = vpack.c.bf16 %v1357, %v1357
      %v1362 = vpack.c.bf16 %v1358, %v1358
      %v1363 = vpack.c.bf16 %v1359, %v1359
      %1365 = vrot.lane.b32.xlu0 %v1146, 120
      %v1366 = vpop.permute.xlu0 %1365
      %1368 = vrot.lane.b32.xlu0 %v1146, 112
      %v1369 = vpop.permute.xlu0 %1368
      %1371 = vrot.lane.b32.xlu0 %v1146, 104
      %v1372 = vpop.permute.xlu0 %1371
      %v1374 = vcombine.low %v1146, %v1369
      %v1375 = vcombine.high %v1146, %v1369
      %v1377 = vunpack.c.l.s4 1983009808
      %v1378 = vunpack.c.0.s8 %v1377
      %v1379 = vlaneseq
      %v1380 = vshrl.u32 %v1379, 7
      %v1381 = vsub.s32 %v1378, %v1380
      %v1382 = vrot.slane %v1374, %v1381
      %v1384 = vunpack.c.l.s4 1983009808
      %v1385 = vunpack.c.0.s8 %v1384
      %v1386 = vlaneseq
      %v1387 = vshrl.u32 %v1386, 7
      %v1388 = vsub.s32 %v1385, %v1387
      %v1389 = vrot.slane %v1375, %v1388
      %v1390 = vcombine.low %v1366, %v1372
      %v1391 = vcombine.high %v1366, %v1372
      %v1393 = vunpack.c.l.s4 1983009808
      %v1394 = vunpack.c.0.s8 %v1393
      %v1395 = vlaneseq
      %v1396 = vshrl.u32 %v1395, 7
      %v1397 = vsub.s32 %v1394, %v1396
      %v1398 = vrot.slane %v1390, %v1397
      %v1400 = vunpack.c.l.s4 1983009808
      %v1401 = vunpack.c.0.s8 %v1400
      %v1402 = vlaneseq
      %v1403 = vshrl.u32 %v1402, 7
      %v1404 = vsub.s32 %v1401, %v1403
      %v1405 = vrot.slane %v1391, %v1404
      %v1406 = vcombine.low %v1382, %v1398
      %v1407 = vcombine.high %v1382, %v1398
      %v1409 = vunpack.c.l.s4 1934713408
      %v1410 = vunpack.c.0.s8 %v1409
      %v1411 = vlaneseq
      %v1412 = vshrl.u32 %v1411, 7
      %v1413 = vsub.s32 %v1410, %v1412
      %v1414 = vrot.slane %v1406, %v1413
      %v1416 = vunpack.c.l.s4 1934713408
      %v1417 = vunpack.c.0.s8 %v1416
      %v1418 = vlaneseq
      %v1419 = vshrl.u32 %v1418, 7
      %v1420 = vsub.s32 %v1417, %v1419
      %v1421 = vrot.slane %v1407, %v1420
      %v1422 = vcombine.low %v1389, %v1405
      %v1423 = vcombine.high %v1389, %v1405
      %v1425 = vunpack.c.l.s4 1934713408
      %v1426 = vunpack.c.0.s8 %v1425
      %v1427 = vlaneseq
      %v1428 = vshrl.u32 %v1427, 7
      %v1429 = vsub.s32 %v1426, %v1428
      %v1430 = vrot.slane %v1422, %v1429
      %v1432 = vunpack.c.l.s4 1934713408
      %v1433 = vunpack.c.0.s8 %v1432
      %v1434 = vlaneseq
      %v1435 = vshrl.u32 %v1434, 7
      %v1436 = vsub.s32 %v1433, %v1435
      %v1437 = vrot.slane %v1423, %v1436
      %v1438 = vcombine.high %v1414, 0.0
      %v1439 = vcombine.high %v1421, 0.0
      %v1440 = vcombine.high %v1430, 0.0
      %v1441 = vcombine.high %v1437, 0.0
      %v1442 = vcombine.low %v1414, %v1421
      %v1444 = vunpack.c.l.s4 1983009808
      %v1445 = vunpack.c.0.s8 %v1444
      %v1446 = vlaneseq
      %v1447 = vshrl.u32 %v1446, 7
      %v1448 = vsub.s32 %v1445, %v1447
      %v1449 = vrot.slane %v1442, %v1448
      %v1450 = vcombine.low %v1438, %v1439
      %v1452 = vunpack.c.l.s4 1983009808
      %v1453 = vunpack.c.0.s8 %v1452
      %v1454 = vlaneseq
      %v1455 = vshrl.u32 %v1454, 7
      %v1456 = vsub.s32 %v1453, %v1455
      %v1457 = vrot.slane %v1450, %v1456
      %v1458 = vcombine.low %v1430, %v1437
      %v1460 = vunpack.c.l.s4 1983009808
      %v1461 = vunpack.c.0.s8 %v1460
      %v1462 = vlaneseq
      %v1463 = vshrl.u32 %v1462, 7
      %v1464 = vsub.s32 %v1461, %v1463
      %v1465 = vrot.slane %v1458, %v1464
      %v1466 = vcombine.low %v1440, %v1441
      %v1468 = vunpack.c.l.s4 1983009808
      %v1469 = vunpack.c.0.s8 %v1468
      %v1470 = vlaneseq
      %v1471 = vshrl.u32 %v1470, 7
      %v1472 = vsub.s32 %v1469, %v1471
      %v1473 = vrot.slane %v1466, %v1472
      %v1474 = vcombine.low %v1449, %v1457
      %v1475 = vcombine.high %v1449, %v1457
      %v1477 = vunpack.c.l.s4 1934713408
      %v1478 = vunpack.c.0.s8 %v1477
      %v1479 = vlaneseq
      %v1480 = vshrl.u32 %v1479, 7
      %v1481 = vsub.s32 %v1478, %v1480
      %v1482 = vrot.slane %v1474, %v1481
      %v1484 = vunpack.c.l.s4 1934713408
      %v1485 = vunpack.c.0.s8 %v1484
      %v1486 = vlaneseq
      %v1487 = vshrl.u32 %v1486, 7
      %v1488 = vsub.s32 %v1485, %v1487
      %v1489 = vrot.slane %v1475, %v1488
      %v1490 = vcombine.low %v1465, %v1473
      %v1491 = vcombine.high %v1465, %v1473
      %v1493 = vunpack.c.l.s4 1934713408
      %v1494 = vunpack.c.0.s8 %v1493
      %v1495 = vlaneseq
      %v1496 = vshrl.u32 %v1495, 7
      %v1497 = vsub.s32 %v1494, %v1496
      %v1498 = vrot.slane %v1490, %v1497
      %v1500 = vunpack.c.l.s4 1934713408
      %v1501 = vunpack.c.0.s8 %v1500
      %v1502 = vlaneseq
      %v1503 = vshrl.u32 %v1502, 7
      %v1504 = vsub.s32 %v1501, %v1503
      %v1505 = vrot.slane %v1491, %v1504
      %v1506 = vcombine.low %v1482, %v1498
      %v1507 = vcombine.high %v1482, %v1498
      %v1508 = vcombine.low %v1489, %v1505
      %v1509 = vcombine.high %v1489, %v1505
      %v1510 = vpack.c.bf16 %v1506, %v1506
      %v1511 = vpack.c.bf16 %v1507, %v1507
      %v1512 = vpack.c.bf16 %v1508, %v1508
      %v1513 = vpack.c.bf16 %v1509, %v1509
      %1515 = vrot.lane.b32.xlu0 %v1209, 120
      %v1516 = vpop.permute.xlu0 %1515
      %1518 = vrot.lane.b32.xlu0 %v1209, 112
      %v1519 = vpop.permute.xlu0 %1518
      %1521 = vrot.lane.b32.xlu0 %v1209, 104
      %v1522 = vpop.permute.xlu0 %1521
      %v1524 = vcombine.low %v1209, %v1519
      %v1525 = vcombine.high %v1209, %v1519
      %v1527 = vunpack.c.l.s4 1983009808
      %v1528 = vunpack.c.0.s8 %v1527
      %v1529 = vlaneseq
      %v1530 = vshrl.u32 %v1529, 7
      %v1531 = vsub.s32 %v1528, %v1530
      %v1532 = vrot.slane %v1524, %v1531
      %v1534 = vunpack.c.l.s4 1983009808
      %v1535 = vunpack.c.0.s8 %v1534
      %v1536 = vlaneseq
      %v1537 = vshrl.u32 %v1536, 7
      %v1538 = vsub.s32 %v1535, %v1537
      %v1539 = vrot.slane %v1525, %v1538
      %v1540 = vcombine.low %v1516, %v1522
      %v1541 = vcombine.high %v1516, %v1522
      %v1543 = vunpack.c.l.s4 1983009808
      %v1544 = vunpack.c.0.s8 %v1543
      %v1545 = vlaneseq
      %v1546 = vshrl.u32 %v1545, 7
      %v1547 = vsub.s32 %v1544, %v1546
      %v1548 = vrot.slane %v1540, %v1547
      %v1550 = vunpack.c.l.s4 1983009808
      %v1551 = vunpack.c.0.s8 %v1550
      %v1552 = vlaneseq
      %v1553 = vshrl.u32 %v1552, 7
      %v1554 = vsub.s32 %v1551, %v1553
      %v1555 = vrot.slane %v1541, %v1554
      %v1556 = vcombine.low %v1532, %v1548
      %v1557 = vcombine.high %v1532, %v1548
      %v1559 = vunpack.c.l.s4 1934713408
      %v1560 = vunpack.c.0.s8 %v1559
      %v1561 = vlaneseq
      %v1562 = vshrl.u32 %v1561, 7
      %v1563 = vsub.s32 %v1560, %v1562
      %v1564 = vrot.slane %v1556, %v1563
      %v1566 = vunpack.c.l.s4 1934713408
      %v1567 = vunpack.c.0.s8 %v1566
      %v1568 = vlaneseq
      %v1569 = vshrl.u32 %v1568, 7
      %v1570 = vsub.s32 %v1567, %v1569
      %v1571 = vrot.slane %v1557, %v1570
      %v1572 = vcombine.low %v1539, %v1555
      %v1573 = vcombine.high %v1539, %v1555
      %v1575 = vunpack.c.l.s4 1934713408
      %v1576 = vunpack.c.0.s8 %v1575
      %v1577 = vlaneseq
      %v1578 = vshrl.u32 %v1577, 7
      %v1579 = vsub.s32 %v1576, %v1578
      %v1580 = vrot.slane %v1572, %v1579
      %v1582 = vunpack.c.l.s4 1934713408
      %v1583 = vunpack.c.0.s8 %v1582
      %v1584 = vlaneseq
      %v1585 = vshrl.u32 %v1584, 7
      %v1586 = vsub.s32 %v1583, %v1585
      %v1587 = vrot.slane %v1573, %v1586
      %v1588 = vcombine.high %v1564, 0.0
      %v1589 = vcombine.high %v1571, 0.0
      %v1590 = vcombine.high %v1580, 0.0
      %v1591 = vcombine.high %v1587, 0.0
      %v1592 = vcombine.low %v1564, %v1571
      %v1594 = vunpack.c.l.s4 1983009808
      %v1595 = vunpack.c.0.s8 %v1594
      %v1596 = vlaneseq
      %v1597 = vshrl.u32 %v1596, 7
      %v1598 = vsub.s32 %v1595, %v1597
      %v1599 = vrot.slane %v1592, %v1598
      %v1600 = vcombine.low %v1588, %v1589
      %v1602 = vunpack.c.l.s4 1983009808
      %v1603 = vunpack.c.0.s8 %v1602
      %v1604 = vlaneseq
      %v1605 = vshrl.u32 %v1604, 7
      %v1606 = vsub.s32 %v1603, %v1605
      %v1607 = vrot.slane %v1600, %v1606
      %v1608 = vcombine.low %v1580, %v1587
      %v1610 = vunpack.c.l.s4 1983009808
      %v1611 = vunpack.c.0.s8 %v1610
      %v1612 = vlaneseq
      %v1613 = vshrl.u32 %v1612, 7
      %v1614 = vsub.s32 %v1611, %v1613
      %v1615 = vrot.slane %v1608, %v1614
      %v1616 = vcombine.low %v1590, %v1591
      %v1618 = vunpack.c.l.s4 1983009808
      %v1619 = vunpack.c.0.s8 %v1618
      %v1620 = vlaneseq
      %v1621 = vshrl.u32 %v1620, 7
      %v1622 = vsub.s32 %v1619, %v1621
      %v1623 = vrot.slane %v1616, %v1622
      %v1624 = vcombine.low %v1599, %v1607
      %v1625 = vcombine.high %v1599, %v1607
      %v1627 = vunpack.c.l.s4 1934713408
      %v1628 = vunpack.c.0.s8 %v1627
      %v1629 = vlaneseq
      %v1630 = vshrl.u32 %v1629, 7
      %v1631 = vsub.s32 %v1628, %v1630
      %v1632 = vrot.slane %v1624, %v1631
      %v1634 = vunpack.c.l.s4 1934713408
      %v1635 = vunpack.c.0.s8 %v1634
      %v1636 = vlaneseq
      %v1637 = vshrl.u32 %v1636, 7
      %v1638 = vsub.s32 %v1635, %v1637
      %v1639 = vrot.slane %v1625, %v1638
      %v1640 = vcombine.low %v1615, %v1623
      %v1641 = vcombine.high %v1615, %v1623
      %v1643 = vunpack.c.l.s4 1934713408
      %v1644 = vunpack.c.0.s8 %v1643
      %v1645 = vlaneseq
      %v1646 = vshrl.u32 %v1645, 7
      %v1647 = vsub.s32 %v1644, %v1646
      %v1648 = vrot.slane %v1640, %v1647
      %v1650 = vunpack.c.l.s4 1934713408
      %v1651 = vunpack.c.0.s8 %v1650
      %v1652 = vlaneseq
      %v1653 = vshrl.u32 %v1652, 7
      %v1654 = vsub.s32 %v1651, %v1653
      %v1655 = vrot.slane %v1641, %v1654
      %v1656 = vcombine.low %v1632, %v1648
      %v1657 = vcombine.high %v1632, %v1648
      %v1658 = vcombine.low %v1639, %v1655
      %v1659 = vcombine.high %v1639, %v1655
      %v1660 = vpack.c.bf16 %v1656, %v1656
      %v1661 = vpack.c.bf16 %v1657, %v1657
      %v1662 = vpack.c.bf16 %v1658, %v1658
      %v1663 = vpack.c.bf16 %v1659, %v1659
      %vm1664 = vcmask 64512
      %v1666 = vsel %vm1664, %v1360, 0
      %v1669 = vsel %vm1664, %v1510, 0
      %1671 = vmatprep.subr.bf16.mxu0 0
      %1672 = vmatpush1.bf16.xpose.msra.mxu0 %v1669
      %1673 = vmatprep.subr.bf16.mxu0 0
      %1674 = vmatpush1.bf16.xpose.msra.mxu0 0
      %1675 = vmatprep.subr.bf16.mxu0 0
      %1676 = vmatpush1.bf16.xpose.msra.mxu0 0
      %1677 = vmatprep.subr.bf16.mxu0 0
      %1678 = vmatpush1.bf16.xpose.msra.mxu0 0
      %1679 = vmatprep.subr.bf16.mxu0 0
      %1680 = vmatpush1.bf16.xpose.msra.mxu0 0
      %1681 = vmatprep.subr.bf16.mxu0 0
      %1682 = vmatpush1.bf16.xpose.msra.mxu0 0
      %1683 = vmatprep.subr.bf16.mxu0 0
      %1684 = vmatpush1.bf16.xpose.msra.mxu0 0
      %1685 = vmatprep.subr.bf16.mxu0 0
      %1686 = vmatpush1.bf16.xpose.msra.mxu0 0
      %1687 = vmatprep.subr.bf16.mxu0 0
      %1688 = vmatpush1.bf16.xpose.msra.mxu0 0
      %1689 = vmatprep.subr.bf16.mxu0 0
      %1690 = vmatpush1.bf16.xpose.msra.mxu0 0
      %1691 = vmatprep.subr.bf16.mxu0 0
      %1692 = vmatpush1.bf16.xpose.msra.mxu0 0
      %1693 = vmatprep.subr.bf16.mxu0 0
      %1694 = vmatpush1.bf16.xpose.msra.mxu0 0
      %1695 = vmatprep.subr.bf16.mxu0 0
      %1696 = vmatpush1.bf16.xpose.msra.mxu0 0
      %1697 = vmatprep.subr.bf16.mxu0 0
      %1698 = vmatpush1.bf16.xpose.msra.mxu0 0
      %1699 = vmatprep.subr.bf16.mxu0 0
      %1700 = vmatpush1.bf16.xpose.msra.mxu0 0
      %1701 = vmatprep.subr.bf16.mxu0 0
      %1702 = vmatpush1.bf16.xpose.msra.mxu0 0
      %1703 = vmatprep.mubr.bf16.mxu0 0
      %1704 = vmatmul.mubr.bf16.gmra.mrb[0].mxu0 %v1666
      %v1705 = vpop.f32.mrb[0].mxu0
      %v1706 = vadd.f32 0.0, %v1705
      %v1707 = vpop.f32.mrb[0].mxu0
      %v1708 = vpop.f32.mrb[0].mxu0
      %v1709 = vpop.f32.mrb[0].mxu0
      %1710 = vdwg.mxu0
      %v1712 = vsel %vm1664, %v1361, 0
      %v1715 = vsel %vm1664, %v1511, 0
      %1717 = vmatprep.subr.bf16.mxu0 0
      %1718 = vmatpush1.bf16.xpose.msra.mxu0 %v1715
      %1719 = vmatprep.subr.bf16.mxu0 0
      %1720 = vmatpush1.bf16.xpose.msra.mxu0 0
      %1721 = vmatprep.subr.bf16.mxu0 0
      %1722 = vmatpush1.bf16.xpose.msra.mxu0 0
      %1723 = vmatprep.subr.bf16.mxu0 0
      %1724 = vmatpush1.bf16.xpose.msra.mxu0 0
      %1725 = vmatprep.subr.bf16.mxu0 0
      %1726 = vmatpush1.bf16.xpose.msra.mxu0 0
      %1727 = vmatprep.subr.bf16.mxu0 0
      %1728 = vmatpush1.bf16.xpose.msra.mxu0 0
      %1729 = vmatprep.subr.bf16.mxu0 0
      %1730 = vmatpush1.bf16.xpose.msra.mxu0 0
      %1731 = vmatprep.subr.bf16.mxu0 0
      %1732 = vmatpush1.bf16.xpose.msra.mxu0 0
      %1733 = vmatprep.subr.bf16.mxu0 0
      %1734 = vmatpush1.bf16.xpose.msra.mxu0 0
      %1735 = vmatprep.subr.bf16.mxu0 0
      %1736 = vmatpush1.bf16.xpose.msra.mxu0 0
      %1737 = vmatprep.subr.bf16.mxu0 0
      %1738 = vmatpush1.bf16.xpose.msra.mxu0 0
      %1739 = vmatprep.subr.bf16.mxu0 0
      %1740 = vmatpush1.bf16.xpose.msra.mxu0 0
      %1741 = vmatprep.subr.bf16.mxu0 0
      %1742 = vmatpush1.bf16.xpose.msra.mxu0 0
      %1743 = vmatprep.subr.bf16.mxu0 0
      %1744 = vmatpush1.bf16.xpose.msra.mxu0 0
      %1745 = vmatprep.subr.bf16.mxu0 0
      %1746 = vmatpush1.bf16.xpose.msra.mxu0 0
      %1747 = vmatprep.subr.bf16.mxu0 0
      %1748 = vmatpush1.bf16.xpose.msra.mxu0 0
      %1749 = vmatprep.mubr.bf16.mxu0 0
      %1750 = vmatmul.mubr.bf16.gmra.mrb[0].mxu0 %v1712
      %v1751 = vpop.f32.mrb[0].mxu0
      %v1752 = vadd.f32 0.0, %v1751
      %v1753 = vpop.f32.mrb[0].mxu0
      %v1754 = vpop.f32.mrb[0].mxu0
      %v1755 = vpop.f32.mrb[0].mxu0
      %1756 = vdwg.mxu0
      %v1758 = vsel %vm1664, %v1362, 0
      %v1761 = vsel %vm1664, %v1512, 0
      %1763 = vmatprep.subr.bf16.mxu0 0
      %1764 = vmatpush1.bf16.xpose.msra.mxu0 %v1761
      %1765 = vmatprep.subr.bf16.mxu0 0
      %1766 = vmatpush1.bf16.xpose.msra.mxu0 0
      %1767 = vmatprep.subr.bf16.mxu0 0
      %1768 = vmatpush1.bf16.xpose.msra.mxu0 0
      %1769 = vmatprep.subr.bf16.mxu0 0
      %1770 = vmatpush1.bf16.xpose.msra.mxu0 0
      %1771 = vmatprep.subr.bf16.mxu0 0
      %1772 = vmatpush1.bf16.xpose.msra.mxu0 0
      %1773 = vmatprep.subr.bf16.mxu0 0
      %1774 = vmatpush1.bf16.xpose.msra.mxu0 0
      %1775 = vmatprep.subr.bf16.mxu0 0
      %1776 = vmatpush1.bf16.xpose.msra.mxu0 0
      %1777 = vmatprep.subr.bf16.mxu0 0
      %1778 = vmatpush1.bf16.xpose.msra.mxu0 0
      %1779 = vmatprep.subr.bf16.mxu0 0
      %1780 = vmatpush1.bf16.xpose.msra.mxu0 0
      %1781 = vmatprep.subr.bf16.mxu0 0
      %1782 = vmatpush1.bf16.xpose.msra.mxu0 0
      %1783 = vmatprep.subr.bf16.mxu0 0
      %1784 = vmatpush1.bf16.xpose.msra.mxu0 0
      %1785 = vmatprep.subr.bf16.mxu0 0
      %1786 = vmatpush1.bf16.xpose.msra.mxu0 0
      %1787 = vmatprep.subr.bf16.mxu0 0
      %1788 = vmatpush1.bf16.xpose.msra.mxu0 0
      %1789 = vmatprep.subr.bf16.mxu0 0
      %1790 = vmatpush1.bf16.xpose.msra.mxu0 0
      %1791 = vmatprep.subr.bf16.mxu0 0
      %1792 = vmatpush1.bf16.xpose.msra.mxu0 0
      %1793 = vmatprep.subr.bf16.mxu0 0
      %1794 = vmatpush1.bf16.xpose.msra.mxu0 0
      %1795 = vmatprep.mubr.bf16.mxu0 0
      %1796 = vmatmul.mubr.bf16.gmra.mrb[0].mxu0 %v1758
      %v1797 = vpop.f32.mrb[0].mxu0
      %v1798 = vadd.f32 0.0, %v1797
      %v1799 = vpop.f32.mrb[0].mxu0
      %v1800 = vpop.f32.mrb[0].mxu0
      %v1801 = vpop.f32.mrb[0].mxu0
      %1802 = vdwg.mxu0
      %v1804 = vsel %vm1664, %v1363, 0
      %v1807 = vsel %vm1664, %v1513, 0
      %1809 = vmatprep.subr.bf16.mxu0 0
      %1810 = vmatpush1.bf16.xpose.msra.mxu0 %v1807
      %1811 = vmatprep.subr.bf16.mxu0 0
      %1812 = vmatpush1.bf16.xpose.msra.mxu0 0
      %1813 = vmatprep.subr.bf16.mxu0 0
      %1814 = vmatpush1.bf16.xpose.msra.mxu0 0
      %1815 = vmatprep.subr.bf16.mxu0 0
      %1816 = vmatpush1.bf16.xpose.msra.mxu0 0
      %1817 = vmatprep.subr.bf16.mxu0 0
      %1818 = vmatpush1.bf16.xpose.msra.mxu0 0
      %1819 = vmatprep.subr.bf16.mxu0 0
      %1820 = vmatpush1.bf16.xpose.msra.mxu0 0
      %1821 = vmatprep.subr.bf16.mxu0 0
      %1822 = vmatpush1.bf16.xpose.msra.mxu0 0
      %1823 = vmatprep.subr.bf16.mxu0 0
      %1824 = vmatpush1.bf16.xpose.msra.mxu0 0
      %1825 = vmatprep.subr.bf16.mxu0 0
      %1826 = vmatpush1.bf16.xpose.msra.mxu0 0
      %1827 = vmatprep.subr.bf16.mxu0 0
      %1828 = vmatpush1.bf16.xpose.msra.mxu0 0
      %1829 = vmatprep.subr.bf16.mxu0 0
      %1830 = vmatpush1.bf16.xpose.msra.mxu0 0
      %1831 = vmatprep.subr.bf16.mxu0 0
      %1832 = vmatpush1.bf16.xpose.msra.mxu0 0
      %1833 = vmatprep.subr.bf16.mxu0 0
      %1834 = vmatpush1.bf16.xpose.msra.mxu0 0
      %1835 = vmatprep.subr.bf16.mxu0 0
      %1836 = vmatpush1.bf16.xpose.msra.mxu0 0
      %1837 = vmatprep.subr.bf16.mxu0 0
      %1838 = vmatpush1.bf16.xpose.msra.mxu0 0
      %1839 = vmatprep.subr.bf16.mxu0 0
      %1840 = vmatpush1.bf16.xpose.msra.mxu0 0
      %1841 = vmatprep.mubr.bf16.mxu0 0
      %1842 = vmatmul.mubr.bf16.gmra.mrb[0].mxu0 %v1804
      %v1843 = vpop.f32.mrb[0].mxu0
      %v1844 = vadd.f32 0.0, %v1843
      %v1845 = vpop.f32.mrb[0].mxu0
      %v1846 = vpop.f32.mrb[0].mxu0
      %v1847 = vpop.f32.mrb[0].mxu0
      %1848 = vdwg.mxu0
      %v1849 = vmul.f32 %v1706, 0.35355338
      %v1850 = vmul.f32 %v1752, 0.35355338
      %v1851 = vmul.f32 %v1798, 0.35355338
      %v1852 = vmul.f32 %v1844, 0.35355338
      %v1853 = vlaneseq
      %v1854 = vand.u32 %v1853, 127
      %vm1855 = vcmp.lt.s32.totalorder %v1854, 5
      %v1856 = vsel %vm1855, 1, 0
      %vm1857 = vcmp.eq.s32.totalorder %v1856, 1
      %v1858 = vsel %vm1857, %v1849, -1e+30
      %v1859 = vsel %vm1857, %v1850, -1e+30
      %v1860 = vsel %vm1857, %v1851, -1e+30
      %v1861 = vsel %vm1857, %v1852, -1e+30
      %v1862 = vsel %vm1664, %v1858, -inf
      %1863 = vmax.xlane.f32.xlu0 %v1862
      %v1864 = vpop.xlane.xlu0 %1863
      %v1865 = vsel %vm1664, %v1859, -inf
      %1866 = vmax.xlane.f32.xlu0 %v1865
      %v1867 = vpop.xlane.xlu0 %1866
      %v1868 = vsel %vm1664, %v1860, -inf
      %1869 = vmax.xlane.f32.xlu0 %v1868
      %v1870 = vpop.xlane.xlu0 %1869
      %v1871 = vsel %vm1664, %v1861, -inf
      %1872 = vmax.xlane.f32.xlu0 %v1871
      %v1873 = vpop.xlane.xlu0 %1872
      %v1874 = vsub.f32 %v1858, %v1864
      %v1875 = vsub.f32 %v1859, %v1867
      %v1876 = vsub.f32 %v1860, %v1870
      %v1877 = vsub.f32 %v1861, %v1873
      %v1878 = vmul.f32 %v1874, 1.442695
      %v1879 = vpow.pop %v1878
      %v1880 = vmul.f32 %v1875, 1.442695
      %v1881 = vpow.pop %v1880
      %v1882 = vmul.f32 %v1876, 1.442695
      %v1883 = vpow.pop %v1882
      %v1884 = vmul.f32 %v1877, 1.442695
      %v1885 = vpow.pop %v1884
      %v1886 = vsel %vm1664, %v1879, 0.0
      %1887 = vadd.xlane.f32.xlu0 %v1886
      %v1888 = vpop.xlane.xlu0 %1887
      %v1889 = vsel %vm1664, %v1881, 0.0
      %1890 = vadd.xlane.f32.xlu0 %v1889
      %v1891 = vpop.xlane.xlu0 %1890
      %v1892 = vsel %vm1664, %v1883, 0.0
      %1893 = vadd.xlane.f32.xlu0 %v1892
      %v1894 = vpop.xlane.xlu0 %1893
      %v1895 = vsel %vm1664, %v1885, 0.0
      %1896 = vadd.xlane.f32.xlu0 %v1895
      %v1897 = vpop.xlane.xlu0 %1896
      %v1898 = vrcp.pop %v1888
      %v1899 = vrcp.pop %v1891
      %v1900 = vrcp.pop %v1894
      %v1901 = vrcp.pop %v1897
      %v1902 = vmul.f32 %v1879, %v1898
      %v1903 = vmul.f32 %v1881, %v1899
      %v1904 = vmul.f32 %v1883, %v1900
      %v1905 = vmul.f32 %v1885, %v1901
      %v1906 = vpack.c.bf16 %v1902, %v1902
      %v1907 = vpack.c.bf16 %v1903, %v1903
      %v1908 = vpack.c.bf16 %v1904, %v1904
      %v1909 = vpack.c.bf16 %v1905, %v1905
      %v1911 = vsel %vm1664, %v1906, 0
      %vm1913 = vcmask 1043456
      %v1915 = vsel %vm1913, %v1660, 0
      %1917 = vmatprep.subr.bf16.mxu0 0
      %1918 = vmatpush1.bf16.msra.mxu0 %v1915
      %1919 = vmatprep.subr.bf16.mxu0 0
      %1920 = vmatpush1.bf16.msra.mxu0 0
      %1921 = vmatprep.subr.bf16.mxu0 0
      %1922 = vmatpush1.bf16.msra.mxu0 0
      %1923 = vmatprep.subr.bf16.mxu0 0
      %1924 = vmatpush1.bf16.msra.mxu0 0
      %1925 = vmatprep.subr.bf16.mxu0 0
      %1926 = vmatpush1.bf16.msra.mxu0 0
      %1927 = vmatprep.subr.bf16.mxu0 0
      %1928 = vmatpush1.bf16.msra.mxu0 0
      %1929 = vmatprep.subr.bf16.mxu0 0
      %1930 = vmatpush1.bf16.msra.mxu0 0
      %1931 = vmatprep.subr.bf16.mxu0 0
      %1932 = vmatpush1.bf16.msra.mxu0 0
      %1933 = vmatprep.subr.bf16.mxu0 0
      %1934 = vmatpush1.bf16.msra.mxu0 0
      %1935 = vmatprep.subr.bf16.mxu0 0
      %1936 = vmatpush1.bf16.msra.mxu0 0
      %1937 = vmatprep.subr.bf16.mxu0 0
      %1938 = vmatpush1.bf16.msra.mxu0 0
      %1939 = vmatprep.subr.bf16.mxu0 0
      %1940 = vmatpush1.bf16.msra.mxu0 0
      %1941 = vmatprep.subr.bf16.mxu0 0
      %1942 = vmatpush1.bf16.msra.mxu0 0
      %1943 = vmatprep.subr.bf16.mxu0 0
      %1944 = vmatpush1.bf16.msra.mxu0 0
      %1945 = vmatprep.subr.bf16.mxu0 0
      %1946 = vmatpush1.bf16.msra.mxu0 0
      %1947 = vmatprep.subr.bf16.mxu0 0
      %1948 = vmatpush1.bf16.msra.mxu0 0
      %1949 = vmatprep.mubr.bf16.mxu0 0
      %1950 = vmatmul.mubr.bf16.gmra.mrb[0].mxu0 %v1911
      %v1951 = vpop.f32.mrb[0].mxu0
      %v1952 = vadd.f32 0.0, %v1951
      %v1953 = vpop.f32.mrb[0].mxu0
      %v1954 = vpop.f32.mrb[0].mxu0
      %v1955 = vpop.f32.mrb[0].mxu0
      %1956 = vdwg.mxu0
      %v1958 = vsel %vm1664, %v1907, 0
      %v1961 = vsel %vm1913, %v1661, 0
      %1963 = vmatprep.subr.bf16.mxu0 0
      %1964 = vmatpush1.bf16.msra.mxu0 %v1961
      %1965 = vmatprep.subr.bf16.mxu0 0
      %1966 = vmatpush1.bf16.msra.mxu0 0
      %1967 = vmatprep.subr.bf16.mxu0 0
      %1968 = vmatpush1.bf16.msra.mxu0 0
      %1969 = vmatprep.subr.bf16.mxu0 0
      %1970 = vmatpush1.bf16.msra.mxu0 0
      %1971 = vmatprep.subr.bf16.mxu0 0
      %1972 = vmatpush1.bf16.msra.mxu0 0
      %1973 = vmatprep.subr.bf16.mxu0 0
      %1974 = vmatpush1.bf16.msra.mxu0 0
      %1975 = vmatprep.subr.bf16.mxu0 0
      %1976 = vmatpush1.bf16.msra.mxu0 0
      %1977 = vmatprep.subr.bf16.mxu0 0
      %1978 = vmatpush1.bf16.msra.mxu0 0
      %1979 = vmatprep.subr.bf16.mxu0 0
      %1980 = vmatpush1.bf16.msra.mxu0 0
      %1981 = vmatprep.subr.bf16.mxu0 0
      %1982 = vmatpush1.bf16.msra.mxu0 0
      %1983 = vmatprep.subr.bf16.mxu0 0
      %1984 = vmatpush1.bf16.msra.mxu0 0
      %1985 = vmatprep.subr.bf16.mxu0 0
      %1986 = vmatpush1.bf16.msra.mxu0 0
      %1987 = vmatprep.subr.bf16.mxu0 0
      %1988 = vmatpush1.bf16.msra.mxu0 0
      %1989 = vmatprep.subr.bf16.mxu0 0
      %1990 = vmatpush1.bf16.msra.mxu0 0
      %1991 = vmatprep.subr.bf16.mxu0 0
      %1992 = vmatpush1.bf16.msra.mxu0 0
      %1993 = vmatprep.subr.bf16.mxu0 0
      %1994 = vmatpush1.bf16.msra.mxu0 0
      %1995 = vmatprep.mubr.bf16.mxu0 0
      %1996 = vmatmul.mubr.bf16.gmra.mrb[0].mxu0 %v1958
      %v1997 = vpop.f32.mrb[0].mxu0
      %v1998 = vadd.f32 0.0, %v1997
      %v1999 = vpop.f32.mrb[0].mxu0
      %v2000 = vpop.f32.mrb[0].mxu0
      %v2001 = vpop.f32.mrb[0].mxu0
      %2002 = vdwg.mxu0
      %v2004 = vsel %vm1664, %v1908, 0
      %v2007 = vsel %vm1913, %v1662, 0
      %2009 = vmatprep.subr.bf16.mxu0 0
      %2010 = vmatpush1.bf16.msra.mxu0 %v2007
      %2011 = vmatprep.subr.bf16.mxu0 0
      %2012 = vmatpush1.bf16.msra.mxu0 0
      %2013 = vmatprep.subr.bf16.mxu0 0
      %2014 = vmatpush1.bf16.msra.mxu0 0
      %2015 = vmatprep.subr.bf16.mxu0 0
      %2016 = vmatpush1.bf16.msra.mxu0 0
      %2017 = vmatprep.subr.bf16.mxu0 0
      %2018 = vmatpush1.bf16.msra.mxu0 0
      %2019 = vmatprep.subr.bf16.mxu0 0
      %2020 = vmatpush1.bf16.msra.mxu0 0
      %2021 = vmatprep.subr.bf16.mxu0 0
      %2022 = vmatpush1.bf16.msra.mxu0 0
      %2023 = vmatprep.subr.bf16.mxu0 0
      %2024 = vmatpush1.bf16.msra.mxu0 0
      %2025 = vmatprep.subr.bf16.mxu0 0
      %2026 = vmatpush1.bf16.msra.mxu0 0
      %2027 = vmatprep.subr.bf16.mxu0 0
      %2028 = vmatpush1.bf16.msra.mxu0 0
      %2029 = vmatprep.subr.bf16.mxu0 0
      %2030 = vmatpush1.bf16.msra.mxu0 0
      %2031 = vmatprep.subr.bf16.mxu0 0
      %2032 = vmatpush1.bf16.msra.mxu0 0
      %2033 = vmatprep.subr.bf16.mxu0 0
      %2034 = vmatpush1.bf16.msra.mxu0 0
      %2035 = vmatprep.subr.bf16.mxu0 0
      %2036 = vmatpush1.bf16.msra.mxu0 0
      %2037 = vmatprep.subr.bf16.mxu0 0
      %2038 = vmatpush1.bf16.msra.mxu0 0
      %2039 = vmatprep.subr.bf16.mxu0 0
      %2040 = vmatpush1.bf16.msra.mxu0 0
      %2041 = vmatprep.mubr.bf16.mxu0 0
      %2042 = vmatmul.mubr.bf16.gmra.mrb[0].mxu0 %v2004
      %v2043 = vpop.f32.mrb[0].mxu0
      %v2044 = vadd.f32 0.0, %v2043
      %v2045 = vpop.f32.mrb[0].mxu0
      %v2046 = vpop.f32.mrb[0].mxu0
      %v2047 = vpop.f32.mrb[0].mxu0
      %2048 = vdwg.mxu0
      %v2050 = vsel %vm1664, %v1909, 0
      %v2053 = vsel %vm1913, %v1663, 0
      %2055 = vmatprep.subr.bf16.mxu0 0
      %2056 = vmatpush1.bf16.msra.mxu0 %v2053
      %2057 = vmatprep.subr.bf16.mxu0 0
      %2058 = vmatpush1.bf16.msra.mxu0 0
      %2059 = vmatprep.subr.bf16.mxu0 0
      %2060 = vmatpush1.bf16.msra.mxu0 0
      %2061 = vmatprep.subr.bf16.mxu0 0
      %2062 = vmatpush1.bf16.msra.mxu0 0
      %2063 = vmatprep.subr.bf16.mxu0 0
      %2064 = vmatpush1.bf16.msra.mxu0 0
      %2065 = vmatprep.subr.bf16.mxu0 0
      %2066 = vmatpush1.bf16.msra.mxu0 0
      %2067 = vmatprep.subr.bf16.mxu0 0
      %2068 = vmatpush1.bf16.msra.mxu0 0
      %2069 = vmatprep.subr.bf16.mxu0 0
      %2070 = vmatpush1.bf16.msra.mxu0 0
      %2071 = vmatprep.subr.bf16.mxu0 0
      %2072 = vmatpush1.bf16.msra.mxu0 0
      %2073 = vmatprep.subr.bf16.mxu0 0
      %2074 = vmatpush1.bf16.msra.mxu0 0
      %2075 = vmatprep.subr.bf16.mxu0 0
      %2076 = vmatpush1.bf16.msra.mxu0 0
      %2077 = vmatprep.subr.bf16.mxu0 0
      %2078 = vmatpush1.bf16.msra.mxu0 0
      %2079 = vmatprep.subr.bf16.mxu0 0
      %2080 = vmatpush1.bf16.msra.mxu0 0
      %2081 = vmatprep.subr.bf16.mxu0 0
      %2082 = vmatpush1.bf16.msra.mxu0 0
      %2083 = vmatprep.subr.bf16.mxu0 0
      %2084 = vmatpush1.bf16.msra.mxu0 0
      %2085 = vmatprep.subr.bf16.mxu0 0
      %2086 = vmatpush1.bf16.msra.mxu0 0
      %2087 = vmatprep.mubr.bf16.mxu0 0
      %2088 = vmatmul.mubr.bf16.gmra.mrb[0].mxu0 %v2050
      %v2089 = vpop.f32.mrb[0].mxu0
      %v2090 = vadd.f32 0.0, %v2089
      %v2091 = vpop.f32.mrb[0].mxu0
      %v2092 = vpop.f32.mrb[0].mxu0
      %v2093 = vpop.f32.mrb[0].mxu0
      %2094 = vdwg.mxu0
      %v2095 = vcombine.low %v1952, %v2044
      %v2096 = vcombine.high %v1952, %v2044
      %v2098 = vunpack.c.l.s4 1983009808
      %v2099 = vunpack.c.0.s8 %v2098
      %v2100 = vlaneseq
      %v2101 = vshrl.u32 %v2100, 7
      %v2102 = vsub.s32 %v2099, %v2101
      %v2103 = vrot.slane %v2095, %v2102
      %v2105 = vunpack.c.l.s4 1983009808
      %v2106 = vunpack.c.0.s8 %v2105
      %v2107 = vlaneseq
      %v2108 = vshrl.u32 %v2107, 7
      %v2109 = vsub.s32 %v2106, %v2108
      %v2110 = vrot.slane %v2096, %v2109
      %v2111 = vcombine.low %v1998, %v2090
      %v2112 = vcombine.high %v1998, %v2090
      %v2114 = vunpack.c.l.s4 1983009808
      %v2115 = vunpack.c.0.s8 %v2114
      %v2116 = vlaneseq
      %v2117 = vshrl.u32 %v2116, 7
      %v2118 = vsub.s32 %v2115, %v2117
      %v2119 = vrot.slane %v2111, %v2118
      %v2121 = vunpack.c.l.s4 1983009808
      %v2122 = vunpack.c.0.s8 %v2121
      %v2123 = vlaneseq
      %v2124 = vshrl.u32 %v2123, 7
      %v2125 = vsub.s32 %v2122, %v2124
      %v2126 = vrot.slane %v2112, %v2125
      %v2127 = vcombine.low %v2103, %v2119
      %v2128 = vcombine.high %v2103, %v2119
      %v2130 = vunpack.c.l.s4 1934713408
      %v2131 = vunpack.c.0.s8 %v2130
      %v2132 = vlaneseq
      %v2133 = vshrl.u32 %v2132, 7
      %v2134 = vsub.s32 %v2131, %v2133
      %v2135 = vrot.slane %v2127, %v2134
      %v2137 = vunpack.c.l.s4 1934713408
      %v2138 = vunpack.c.0.s8 %v2137
      %v2139 = vlaneseq
      %v2140 = vshrl.u32 %v2139, 7
      %v2141 = vsub.s32 %v2138, %v2140
      %v2142 = vrot.slane %v2128, %v2141
      %v2143 = vcombine.low %v2110, %v2126
      %v2144 = vcombine.high %v2110, %v2126
      %v2146 = vunpack.c.l.s4 1934713408
      %v2147 = vunpack.c.0.s8 %v2146
      %v2148 = vlaneseq
      %v2149 = vshrl.u32 %v2148, 7
      %v2150 = vsub.s32 %v2147, %v2149
      %v2151 = vrot.slane %v2143, %v2150
      %v2153 = vunpack.c.l.s4 1934713408
      %v2154 = vunpack.c.0.s8 %v2153
      %v2155 = vlaneseq
      %v2156 = vshrl.u32 %v2155, 7
      %v2157 = vsub.s32 %v2154, %v2156
      %v2158 = vrot.slane %v2144, %v2157
      %v2159 = vcombine.high %v2135, 0.0
      %v2160 = vcombine.high %v2142, 0.0
      %v2161 = vcombine.high %v2151, 0.0
      %v2162 = vcombine.high %v2158, 0.0
      %v2163 = vcombine.low %v2135, %v2142
      %v2165 = vunpack.c.l.s4 1983009808
      %v2166 = vunpack.c.0.s8 %v2165
      %v2167 = vlaneseq
      %v2168 = vshrl.u32 %v2167, 7
      %v2169 = vsub.s32 %v2166, %v2168
      %v2170 = vrot.slane %v2163, %v2169
      %v2171 = vcombine.low %v2159, %v2160
      %v2173 = vunpack.c.l.s4 1983009808
      %v2174 = vunpack.c.0.s8 %v2173
      %v2175 = vlaneseq
      %v2176 = vshrl.u32 %v2175, 7
      %v2177 = vsub.s32 %v2174, %v2176
      %v2178 = vrot.slane %v2171, %v2177
      %v2179 = vcombine.low %v2151, %v2158
      %v2181 = vunpack.c.l.s4 1983009808
      %v2182 = vunpack.c.0.s8 %v2181
      %v2183 = vlaneseq
      %v2184 = vshrl.u32 %v2183, 7
      %v2185 = vsub.s32 %v2182, %v2184
      %v2186 = vrot.slane %v2179, %v2185
      %v2187 = vcombine.low %v2161, %v2162
      %v2189 = vunpack.c.l.s4 1983009808
      %v2190 = vunpack.c.0.s8 %v2189
      %v2191 = vlaneseq
      %v2192 = vshrl.u32 %v2191, 7
      %v2193 = vsub.s32 %v2190, %v2192
      %v2194 = vrot.slane %v2187, %v2193
      %v2195 = vcombine.low %v2170, %v2178
      %v2196 = vcombine.high %v2170, %v2178
      %v2198 = vunpack.c.l.s4 1934713408
      %v2199 = vunpack.c.0.s8 %v2198
      %v2200 = vlaneseq
      %v2201 = vshrl.u32 %v2200, 7
      %v2202 = vsub.s32 %v2199, %v2201
      %v2203 = vrot.slane %v2195, %v2202
      %v2205 = vunpack.c.l.s4 1934713408
      %v2206 = vunpack.c.0.s8 %v2205
      %v2207 = vlaneseq
      %v2208 = vshrl.u32 %v2207, 7
      %v2209 = vsub.s32 %v2206, %v2208
      %v2210 = vrot.slane %v2196, %v2209
      %v2211 = vcombine.low %v2186, %v2194
      %v2212 = vcombine.high %v2186, %v2194
      %v2214 = vunpack.c.l.s4 1934713408
      %v2215 = vunpack.c.0.s8 %v2214
      %v2216 = vlaneseq
      %v2217 = vshrl.u32 %v2216, 7
      %v2218 = vsub.s32 %v2215, %v2217
      %v2219 = vrot.slane %v2211, %v2218
      %v2221 = vunpack.c.l.s4 1934713408
      %v2222 = vunpack.c.0.s8 %v2221
      %v2223 = vlaneseq
      %v2224 = vshrl.u32 %v2223, 7
      %v2225 = vsub.s32 %v2222, %v2224
      %v2226 = vrot.slane %v2212, %v2225
      %v2227 = vcombine.low %v2203, %v2219
      %v2228 = vcombine.high %v2203, %v2219
      %v2229 = vcombine.low %v2210, %v2226
      %v2230 = vcombine.high %v2210, %v2226
      %2232 = vrot.lane.b32.xlu0 %v2228, 8
      %v2233 = vpop.permute.xlu0 %2232
      %2236 = vrot.lane.b32.xlu0 %v2229, 16
      %v2237 = vpop.permute.xlu0 %2236
      %2240 = vrot.lane.b32.xlu0 %v2230, 24
      %v2241 = vpop.permute.xlu0 %2240
      %v2243 = vsel %vm1664, %v2227, %v2233
      %vm2244 = vcmask 130048
      %v2245 = vsel %vm2244, %v2243, %v2237
      %vm2246 = vcmask 195584
      %v2247 = vsel %vm2246, %v2245, %v2241
      %v2248 = vpack.c.bf16 %v2247, %v2247
      %v2249 = vld [vmem:[%s943] sm:$0xf]
      %v2250 = vld [vmem:[%s943 + $0x4] sm:$0xf]
      %v2251 = vld [vmem:[%s943 + $0x8] sm:$0xf]
      %v2252 = vld [vmem:[%s943 + $0xc] sm:$0xf]
      %v2253 = vld [vmem:[%s946] sm:$0x1]
      %v2255 = vlaneseq
      %v2256 = vshrl.u32 %v2255, 7
      %v2257 = vsub.s32 0, %v2256
      %v2258 = vrot.slane %v2253, %v2257
      %v2264 = vunpack.c.l.b16 %v2249
      %v2265 = vunpack.c.l.b16 %v2250
      %v2266 = vunpack.c.l.b16 %v2251
      %v2267 = vunpack.c.l.b16 %v2252
      %v2268 = vpack.c.b16 %v2265, %v2264
      %v2269 = vpack.c.b16 %v2267, %v2266
      %v2273 = vsel %vm992, %v2248, 0
      %2275 = vmatprep.subr.bf16.mxu0 0
      %2276 = vmatpush1.bf16.msra.mxu0 %v2268
      %2277 = vmatprep.subr.bf16.mxu0 0
      %2278 = vmatpush1.bf16.msra.mxu0 %v2269
      %2279 = vmatprep.subr.bf16.mxu0 0
      %2280 = vmatpush1.bf16.msra.mxu0 0
      %2281 = vmatprep.subr.bf16.mxu0 0
      %2282 = vmatpush1.bf16.msra.mxu0 0
      %2283 = vmatprep.subr.bf16.mxu0 0
      %2284 = vmatpush1.bf16.msra.mxu0 0
      %2285 = vmatprep.subr.bf16.mxu0 0
      %2286 = vmatpush1.bf16.msra.mxu0 0
      %2287 = vmatprep.subr.bf16.mxu0 0
      %2288 = vmatpush1.bf16.msra.mxu0 0
      %2289 = vmatprep.subr.bf16.mxu0 0
      %2290 = vmatpush1.bf16.msra.mxu0 0
      %2291 = vmatprep.subr.bf16.mxu0 0
      %2292 = vmatpush1.bf16.msra.mxu0 0
      %2293 = vmatprep.subr.bf16.mxu0 0
      %2294 = vmatpush1.bf16.msra.mxu0 0
      %2295 = vmatprep.subr.bf16.mxu0 0
      %2296 = vmatpush1.bf16.msra.mxu0 0
      %2297 = vmatprep.subr.bf16.mxu0 0
      %2298 = vmatpush1.bf16.msra.mxu0 0
      %2299 = vmatprep.subr.bf16.mxu0 0
      %2300 = vmatpush1.bf16.msra.mxu0 0
      %2301 = vmatprep.subr.bf16.mxu0 0
      %2302 = vmatpush1.bf16.msra.mxu0 0
      %2303 = vmatprep.subr.bf16.mxu0 0
      %2304 = vmatpush1.bf16.msra.mxu0 0
      %2305 = vmatprep.subr.bf16.mxu0 0
      %2306 = vmatpush1.bf16.msra.mxu0 0
      %2307 = vmatprep.mubr.bf16.mxu0 0
      %2308 = vmatmul.mubr.bf16.gmra.mrb[0].mxu0 %v2273
      %v2309 = vpop.f32.mrb[0].mxu0
      %v2310 = vadd.f32 %v2258, %v2309
      %v2311 = vpop.f32.mrb[0].mxu0
      %v2312 = vpop.f32.mrb[0].mxu0
      %v2313 = vpop.f32.mrb[0].mxu0
      %2314 = vdwg.mxu0
      %v2315 = vld [vmem:[%s949] sm:$0x1]
      %v2317 = vlaneseq
      %v2318 = vshrl.u32 %v2317, 7
      %v2319 = vsub.s32 0, %v2318
      %v2320 = vrot.slane %v2315, %v2319
      %v2322 = vmul.f32 %v2320, %v2310
      %v2323 = vadd.f32 %v989, %v2322
      %v2324 = vld [vmem:[%s952] sm:$0x1]
      %v2325 = vld [vmem:[%s955] sm:$0x1]
      %v2326 = vsel %vm992, %v2323, 0.0
      %2327 = vadd.xlane.f32.xlu0 %v2326
      %v2328 = vpop.xlane.xlu0 %2327
      %v2329 = vmul.f32 %v2328, %v996
      %v2330 = vsub.f32 %v2323, %v2329
      %v2331 = vmul.f32 %v2330, %v2330
      %v2332 = vsel %vm992, %v2331, 0.0
      %2333 = vadd.xlane.f32.xlu0 %v2332
      %v2334 = vpop.xlane.xlu0 %2333
      %v2335 = vmul.f32 %v2334, %v996
      %v2336 = vadd.f32 %v2335, 1e-06
      %v2337 = vrsqrt.pop %v2336
      %v2338 = vmul.f32 %v2330, %v2337
      %v2340 = vlaneseq
      %v2341 = vshrl.u32 %v2340, 7
      %v2342 = vsub.s32 0, %v2341
      %v2343 = vrot.slane %v2324, %v2342
      %v2345 = vmul.f32 %v2338, %v2343
      %v2347 = vlaneseq
      %v2348 = vshrl.u32 %v2347, 7
      %v2349 = vsub.s32 0, %v2348
      %v2350 = vrot.slane %v2325, %v2349
      %v2352 = vadd.f32 %v2345, %v2350
      %v2353 = vpack.c.bf16 %v2352, %v2352
      %v2354 = vld [vmem:[%s960] sm:$0xf]
      %v2355 = vld [vmem:[%s960 + $0x4] sm:$0xf]
      %v2356 = vld [vmem:[%s960 + $0x8] sm:$0xf]
      %v2357 = vld [vmem:[%s960 + $0xc] sm:$0xf]
      %v2358 = vld [vmem:[%s963] sm:$0x1]
      %v2360 = vlaneseq
      %v2361 = vshrl.u32 %v2360, 7
      %v2362 = vsub.s32 0, %v2361
      %v2363 = vrot.slane %v2358, %v2362
      %v2369 = vunpack.c.l.b16 %v2354
      %v2370 = vunpack.c.l.b16 %v2355
      %v2371 = vunpack.c.l.b16 %v2356
      %v2372 = vunpack.c.l.b16 %v2357
      %v2373 = vpack.c.b16 %v2370, %v2369
      %v2374 = vpack.c.b16 %v2372, %v2371
      %v2378 = vsel %vm992, %v2353, 0
      %2380 = vmatprep.subr.bf16.mxu0 0
      %2381 = vmatpush1.bf16.msra.mxu0 %v2373
      %2382 = vmatprep.subr.bf16.mxu0 0
      %2383 = vmatpush1.bf16.msra.mxu0 %v2374
      %2384 = vmatprep.subr.bf16.mxu0 0
      %2385 = vmatpush1.bf16.msra.mxu0 0
      %2386 = vmatprep.subr.bf16.mxu0 0
      %2387 = vmatpush1.bf16.msra.mxu0 0
      %2388 = vmatprep.subr.bf16.mxu0 0
      %2389 = vmatpush1.bf16.msra.mxu0 0
      %2390 = vmatprep.subr.bf16.mxu0 0
      %2391 = vmatpush1.bf16.msra.mxu0 0
      %2392 = vmatprep.subr.bf16.mxu0 0
      %2393 = vmatpush1.bf16.msra.mxu0 0
      %2394 = vmatprep.subr.bf16.mxu0 0
      %2395 = vmatpush1.bf16.msra.mxu0 0
      %2396 = vmatprep.subr.bf16.mxu0 0
      %2397 = vmatpush1.bf16.msra.mxu0 0
      %2398 = vmatprep.subr.bf16.mxu0 0
      %2399 = vmatpush1.bf16.msra.mxu0 0
      %2400 = vmatprep.subr.bf16.mxu0 0
      %2401 = vmatpush1.bf16.msra.mxu0 0
      %2402 = vmatprep.subr.bf16.mxu0 0
      %2403 = vmatpush1.bf16.msra.mxu0 0
      %2404 = vmatprep.subr.bf16.mxu0 0
      %2405 = vmatpush1.bf16.msra.mxu0 0
      %2406 = vmatprep.subr.bf16.mxu0 0
      %2407 = vmatpush1.bf16.msra.mxu0 0
      %2408 = vmatprep.subr.bf16.mxu0 0
      %2409 = vmatpush1.bf16.msra.mxu0 0
      %2410 = vmatprep.subr.bf16.mxu0 0
      %2411 = vmatpush1.bf16.msra.mxu0 0
      %2412 = vmatprep.mubr.bf16.mxu0 0
      %2413 = vmatmul.mubr.bf16.gmra.mrb[0].mxu0 %v2378
      %v2414 = vpop.f32.mrb[0].mxu0
      %v2415 = vadd.f32 %v2363, %v2414
      %v2416 = vpop.f32.mrb[0].mxu0
      %v2417 = vpop.f32.mrb[0].mxu0
      %v2418 = vpop.f32.mrb[0].mxu0
      %2419 = vdwg.mxu0
      %v2420 = vmul.f32 %v2415, 0.5
      %v2421 = vmul.f32 %v2415, 0.044715
      %v2422 = vmul.f32 %v2421, %v2415
      %v2423 = vmul.f32 %v2422, %v2415
      %v2424 = vadd.f32 %v2415, %v2423
      %v2425 = vmul.f32 %v2424, 0.7978846
      %v2426 = vtanh.pop %v2425
      %v2427 = vadd.f32 %v2426, 1.0
      %v2428 = vmul.f32 %v2420, %v2427
      %v2429 = vpack.c.bf16 %v2428, %v2428
      %v2430 = vld [vmem:[%s968] sm:$0xf]
      %v2431 = vld [vmem:[%s968 + $0x4] sm:$0xf]
      %v2432 = vld [vmem:[%s968 + $0x8] sm:$0xf]
      %v2433 = vld [vmem:[%s968 + $0xc] sm:$0xf]
      %v2434 = vld [vmem:[%s968 + $0x10] sm:$0xf]
      %v2435 = vld [vmem:[%s968 + $0x14] sm:$0xf]
      %v2436 = vld [vmem:[%s968 + $0x18] sm:$0xf]
      %v2437 = vld [vmem:[%s968 + $0x1c] sm:$0xf]
      %v2438 = vld [vmem:[%s968 + $0x20] sm:$0xf]
      %v2439 = vld [vmem:[%s968 + $0x24] sm:$0xf]
      %v2440 = vld [vmem:[%s968 + $0x28] sm:$0xf]
      %v2441 = vld [vmem:[%s968 + $0x2c] sm:$0xf]
      %v2442 = vld [vmem:[%s968 + $0x30] sm:$0xf]
      %v2443 = vld [vmem:[%s968 + $0x34] sm:$0xf]
      %v2444 = vld [vmem:[%s968 + $0x38] sm:$0xf]
      %v2445 = vld [vmem:[%s968 + $0x3c] sm:$0xf]
      %v2446 = vld [vmem:[%s971] sm:$0x1]
      %v2448 = vlaneseq
      %v2449 = vshrl.u32 %v2448, 7
      %v2450 = vsub.s32 0, %v2449
      %v2451 = vrot.slane %v2446, %v2450
      %v2469 = vunpack.c.l.b16 %v2430
      %v2470 = vunpack.c.l.b16 %v2431
      %v2471 = vunpack.c.l.b16 %v2432
      %v2472 = vunpack.c.l.b16 %v2433
      %v2473 = vunpack.c.l.b16 %v2434
      %v2474 = vunpack.c.l.b16 %v2435
      %v2475 = vunpack.c.l.b16 %v2436
      %v2476 = vunpack.c.l.b16 %v2437
      %v2477 = vunpack.c.l.b16 %v2438
      %v2478 = vunpack.c.l.b16 %v2439
      %v2479 = vunpack.c.l.b16 %v2440
      %v2480 = vunpack.c.l.b16 %v2441
      %v2481 = vunpack.c.l.b16 %v2442
      %v2482 = vunpack.c.l.b16 %v2443
      %v2483 = vunpack.c.l.b16 %v2444
      %v2484 = vunpack.c.l.b16 %v2445
      %v2485 = vpack.c.b16 %v2470, %v2469
      %v2486 = vpack.c.b16 %v2472, %v2471
      %v2487 = vpack.c.b16 %v2474, %v2473
      %v2488 = vpack.c.b16 %v2476, %v2475
      %v2489 = vpack.c.b16 %v2478, %v2477
      %v2490 = vpack.c.b16 %v2480, %v2479
      %v2491 = vpack.c.b16 %v2482, %v2481
      %v2492 = vpack.c.b16 %v2484, %v2483
      %2501 = vmatprep.subr.bf16.mxu0 0
      %2502 = vmatpush1.bf16.msra.mxu0 %v2485
      %2503 = vmatprep.subr.bf16.mxu0 0
      %2504 = vmatpush1.bf16.msra.mxu0 %v2486
      %2505 = vmatprep.subr.bf16.mxu0 0
      %2506 = vmatpush1.bf16.msra.mxu0 %v2487
      %2507 = vmatprep.subr.bf16.mxu0 0
      %2508 = vmatpush1.bf16.msra.mxu0 %v2488
      %2509 = vmatprep.subr.bf16.mxu0 0
      %2510 = vmatpush1.bf16.msra.mxu0 %v2489
      %2511 = vmatprep.subr.bf16.mxu0 0
      %2512 = vmatpush1.bf16.msra.mxu0 %v2490
      %2513 = vmatprep.subr.bf16.mxu0 0
      %2514 = vmatpush1.bf16.msra.mxu0 %v2491
      %2515 = vmatprep.subr.bf16.mxu0 0
      %2516 = vmatpush1.bf16.msra.mxu0 %v2492
      %2517 = vmatprep.subr.bf16.mxu0 0
      %2518 = vmatpush1.bf16.msra.mxu0 0
      %2519 = vmatprep.subr.bf16.mxu0 0
      %2520 = vmatpush1.bf16.msra.mxu0 0
      %2521 = vmatprep.subr.bf16.mxu0 0
      %2522 = vmatpush1.bf16.msra.mxu0 0
      %2523 = vmatprep.subr.bf16.mxu0 0
      %2524 = vmatpush1.bf16.msra.mxu0 0
      %2525 = vmatprep.subr.bf16.mxu0 0
      %2526 = vmatpush1.bf16.msra.mxu0 0
      %2527 = vmatprep.subr.bf16.mxu0 0
      %2528 = vmatpush1.bf16.msra.mxu0 0
      %2529 = vmatprep.subr.bf16.mxu0 0
      %2530 = vmatpush1.bf16.msra.mxu0 0
      %2531 = vmatprep.subr.bf16.mxu0 0
      %2532 = vmatpush1.bf16.msra.mxu0 0
      %2533 = vmatprep.mubr.bf16.mxu0 0
      %2534 = vmatmul.mubr.bf16.gmra.mrb[0].mxu0 %v2429
      %v2535 = vpop.f32.mrb[0].mxu0
      %v2536 = vadd.f32 %v2451, %v2535
      %v2537 = vpop.f32.mrb[0].mxu0
      %v2538 = vpop.f32.mrb[0].mxu0
      %v2539 = vpop.f32.mrb[0].mxu0
      %2540 = vdwg.mxu0
      %v2541 = vld [vmem:[%s974] sm:$0x1]
      %v2543 = vlaneseq
      %v2544 = vshrl.u32 %v2543, 7
      %v2545 = vsub.s32 0, %v2544
      %v2546 = vrot.slane %v2541, %v2545
      %v2548 = vmul.f32 %v2546, %v2536
      %v2549 = vadd.f32 %v2323, %v2548
      %2550 = vst.msk [vmem:[#allocation2] sm:$0xff] %vm992, %v2549
      %p2551 = scmp.eq.s32.totalorder %s38, 1
      // Predicated region
      $region113: #{dinov2_vision_tower_forward.3} parent=107 // pred_check
        %p2552 = pneg %p2551
      $region114: #{dinov2_vision_tower_forward.3} parent=107 // pred_check_branch
        %2554 = sbr.rel (%p2552) target = $region116
      $region115: #{dinov2_vision_tower_forward.3} parent=107 // pred_region
        %v2555 = vld [vmem:[%s20] sm:$0x1]
        %v2556 = vld [vmem:[%s21] sm:$0x1]
        %v2557 = vsel %vm992, %v2549, 0.0
        %2558 = vadd.xlane.f32.xlu0 %v2557
        %v2559 = vpop.xlane.xlu0 %2558
        %v2560 = vmul.f32 %v2559, %v996
        %v2561 = vsub.f32 %v2549, %v2560
        %v2562 = vmul.f32 %v2561, %v2561
        %v2563 = vsel %vm992, %v2562, 0.0
        %2564 = vadd.xlane.f32.xlu0 %v2563
        %v2565 = vpop.xlane.xlu0 %2564
        %v2566 = vmul.f32 %v2565, %v996
        %v2567 = vadd.f32 %v2566, 1e-06
        %v2568 = vrsqrt.pop %v2567
        %v2569 = vmul.f32 %v2561, %v2568
        %v2571 = vlaneseq
        %v2572 = vshrl.u32 %v2571, 7
        %v2573 = vsub.s32 0, %v2572
        %v2574 = vrot.slane %v2555, %v2573
        %v2576 = vmul.f32 %v2569, %v2574
        %v2578 = vlaneseq
        %v2579 = vshrl.u32 %v2578, 7
        %v2580 = vsub.s32 0, %v2579
        %v2581 = vrot.slane %v2556, %v2580
        %v2583 = vadd.f32 %v2576, %v2581
        %2584 = vst.msk [vmem:[%s978] sm:$0xff] %vm992, %v2583
      $region116: #{dinov2_vision_tower_forward.3} parent=107 // pred_fallthru
        _
      %p2585 = scmp.lt.s32.totalorder %s37, 1
      %s2586 = scalar_select %p2585, %s37, 1
      %s2587 = smul.addr %s2586, 8
      %s2588 = scalar_lea.vmem %s22, %s2587
      // Predicated region
      $region117: #{dinov2_vision_tower_forward.3} parent=107 // pred_check
        %p2589 = pneg %p620
      $region118: #{dinov2_vision_tower_forward.3} parent=107 // pred_check_branch
        %2591 = sbr.rel (%p2589) target = $region120
      $region119: #{dinov2_vision_tower_forward.3} parent=107 // pred_region
        _
      $region120: #{dinov2_vision_tower_forward.3} parent=107 // pred_fallthru
        _
    $region108: #{dinov2_vision_tower_forward.3} parent=5 // pred_fallthru
      _
    %p2592 = scmp.le.s32.totalorder 2, %s28
    // Predicated region
    $region121: #{dinov2_vision_tower_forward.3} parent=5 // pred_check
      %p2593 = pneg %p2592
    $region122: #{dinov2_vision_tower_forward.3} parent=5 // pred_check_branch
      %2595 = sbr.rel (%p2593) target = $region124
    $region123: #{dinov2_vision_tower_forward.3} parent=5 // pred_region
      %s2596 = ssub.s32 %s28, 2
      // Predicated region
      $region125: #{dinov2_vision_tower_forward.3} parent=123 // pred_check
        %p2597 = pneg %p626
      $region126: #{dinov2_vision_tower_forward.3} parent=123 // pred_check_branch
        %2599 = sbr.rel (%p2597) target = $region128
      $region127: #{dinov2_vision_tower_forward.3} parent=123 // pred_region
        %p2600 = scmp.lt.s32.totalorder %s39, 1
        %s2601 = scalar_select %p2600, %s39, 1
        %s2602 = smul.addr %s2601, 8
        %s2603 = scalar_lea.vmem %s22, %s2602
      $region128: #{dinov2_vision_tower_forward.3} parent=123 // pred_fallthru
        _
    $region124: #{dinov2_vision_tower_forward.3} parent=5 // pred_fallthru
      _
  $region6: #{dinov2_vision_tower_forward.3} parent=0 // loop_footer
    %s32 = sadd.s32 1, %s28
  $region7: #{dinov2_vision_tower_forward.3} parent=0 // loop_footer_branch
    %27 = sbr.rel target = $region3
  $region8: #{dinov2_vision_tower_forward.3} parent=0 // loop_exit
    _

</llo_original>
